<compile_context>
chip_gen: v6e
topology: v6e:2x2x1
jax: 0.10.0
libtpu: 0.0.40
codegen_flags: <defaults>
</compile_context>

<pallas_src>
import functools

import jax
import jax.numpy as jnp
from jax import lax
from jax.experimental import pallas as pl
from jax.experimental.pallas import tpu as pltpu

# ---- configuration (module defaults, shrunk to small synthetic sizes) ----
DIM = 3
Z_DIM = 0
C_DIM = 32
HIDDEN = 64
N_BLOCKS = 5
GAUSSIAN_VAL = 0.2
VAR = GAUSSIAN_VAL ** 2


def decoder_kernel(q_ref, pTp_ref, ppT_ref, feaT_ref,
                   wpT_ref, bpT_ref, wcT_ref, bcT_ref,
                   w0T_ref, b0T_ref, w1T_ref, b1T_ref,
                   woutT_ref, bout_ref, out_ref, cfea_s_ref,
                   *, bb, n_blocks, hidden, c_dim, inv_var):
    T = q_ref.shape[1]
    bf16 = jnp.bfloat16
    relu = lambda x: jnp.maximum(x, 0.0)

    # ---- gaussian point-feature interpolation, per folded batch element, into a VMEM slab ----
    for b in range(bb):
        q_b = q_ref[b]                                              # (T, 3) queries (sublanes)
        ppT_b = ppT_ref[b]                                          # (3, N) cond. pts (lane-dense)
        q0, q1, q2 = q_b[:, 0:1], q_b[:, 1:2], q_b[:, 2:3]          # (T, 1)
        c0, c1, c2 = ppT_b[0:1, :], ppT_b[1:2, :], ppT_b[2:3, :]    # (1, N)
        q_sq = q0 * q0 + q1 * q1 + q2 * q2                          # (T, 1)
        c_sq = c0 * c0 + c1 * c1 + c2 * c2                          # (1, N)
        cross = q0 * c0 + q1 * c1 + q2 * c2                         # (T, N)
        # exponent = -d^2/var  (sqrt + 1e-5 of the torch code dropped: negligible perturbation)
        expo = (2.0 * cross - q_sq - c_sq) * inv_var                # (T, N), <= ~0
        wT = jnp.exp(expo)                                          # (T, N) un-normalized weights

        # un-normalized feature aggregation; appended ones-row of fea^T yields sum(w) for free
        agg = lax.dot_general(feaT_ref[b], wT.astype(bf16),
                              (((1,), (1,)), ((), ())),
                              preferred_element_type=jnp.float32)   # (C+1, T)
        # normalize AFTER the matmul (C << N -> far fewer VPU multiplies); clamp avoids inf when
        # every weight underflows (query far from all conditioning points).
        inv_sw = pl.reciprocal(jnp.maximum(agg[c_dim:c_dim + 1, :], 1e-30), approx=True)
        cfea_s_ref[:, b * T:(b + 1) * T] = (agg[0:c_dim, :] * inv_sw).astype(bf16)

    # ---- fc_p for the whole folded group (group-packed (3, M) -> no per-b concat) ----
    pT = pTp_ref[0]                                                 # (3, M)
    wpT = wpT_ref[...]                                              # (H, 3)
    net = (wpT[:, 0:1] * pT[0:1, :]
           + wpT[:, 1:2] * pT[1:2, :]
           + wpT[:, 2:3] * pT[2:3, :]) + bpT_ref[...]               # (H, M)

    # ---- fc_c hoisted out of the block loop: one (n_blocks*H, C) @ (C, M) matmul ----
    cfcT = jnp.dot(wcT_ref[...], cfea_s_ref[...],
                   preferred_element_type=jnp.float32)              # (n_blocks*H, M)

    # ---- n_blocks * (fc_c add + ResnetBlockFC) ----
    for i in range(n_blocks):
        net = net + cfcT[i * hidden:(i + 1) * hidden, :] + bcT_ref[i]
        hid = jnp.dot(w0T_ref[i], relu(net).astype(bf16),
                      preferred_element_type=jnp.float32) + b0T_ref[i]
        dx = jnp.dot(w1T_ref[i], relu(hid).astype(bf16),
                     preferred_element_type=jnp.float32) + b1T_ref[i]
        net = net + dx                                              # identity shortcut

    # ---- fc_out: lane-dense (1, M) row, sublane reduction over hidden ----
    out_ref[0] = (jnp.sum(relu(net) * woutT_ref[...], axis=0, keepdims=True)
                  + bout_ref[...])                                  # (1, M)


def local_point_decoder(p, pp, fea, params, *, var=VAR, bb=None):
    """p: (B,T,3) queries, pp: (B,N,3) conditioning pts, fea: (B,N,C). Returns (B,T)."""
    B, T, _ = p.shape
    N = pp.shape[1]
    C = fea.shape[2]
    wp, bp, wc, bc, w0, b0, w1, b1, wout, bout = params
    H = wp.shape[1]
    n_blocks = wc.shape[0]

    # Batch folding: target M = bb*T ~= 256 (v6e MXU lane width), but always keep at least
    # two grid steps so the single "parallel" grid axis shards across v7x's two TensorCores.
    if bb is None:
        bb = max(1, min(B, 256 // max(T, 1)))
        while bb > 1 and B // bb < 2:
            bb -= 1
    while bb > 1 and B % bb:
        bb -= 1
    nG = B // bb
    M = bb * T

    bf16 = jnp.bfloat16
    # wrapper-side layout plumbing (one-time XLA reshapes/transposes):
    #   * queries shipped twice: (B, T, 3) sublane-oriented for the distance phase and
    #     group-packed lane-dense (nG, 3, M) for fc_p;
    #   * conditioning points lane-dense (B, 3, N) (no 42x-padded (N, 3) minor dim);
    #   * fea^T with an appended ones-row so sum(w) comes out of the feature matmul;
    #   * matmul weights pre-transposed and pre-cast to bf16.
    pT_pack = (jnp.swapaxes(p, 1, 2)                  # (B, 3, T)
               .reshape(nG, bb, 3, T)
               .transpose(0, 2, 1, 3)
               .reshape(nG, 3, M))                    # (nG, 3, M) f32
    pp_t = jnp.swapaxes(pp, 1, 2)                     # (B, 3, N) f32
    feaT_aug = jnp.concatenate(
        [jnp.swapaxes(fea, 1, 2), jnp.ones((B, 1, N), fea.dtype)],
        axis=1).astype(bf16)                          # (B, C+1, N) bf16

    wpT = wp.T                                                          # (H, 3)    f32
    bpT = bp.reshape(H, 1)
    wcT = jnp.swapaxes(wc, 1, 2).reshape(n_blocks * H, C).astype(bf16)  # (nb*H, C) bf16
    bcT = bc.reshape(n_blocks, H, 1)
    w0T = jnp.swapaxes(w0, 1, 2).astype(bf16)                           # (nb, H, H) bf16
    b0T = b0.reshape(n_blocks, H, 1)
    w1T = jnp.swapaxes(w1, 1, 2).astype(bf16)
    b1T = b1.reshape(n_blocks, H, 1)
    woutT = wout.reshape(H, 1)

    kernel = functools.partial(decoder_kernel, bb=bb, n_blocks=n_blocks,
                               hidden=H, c_dim=C, inv_var=1.0 / var)

    def full(arr):
        # weights: whole array resident in VMEM, same block index every grid step
        # (constant block => never re-fetched; pl.Buffered(1) skipped for compile safety,
        #  the duplicated weight copy is ~100 KB and VMEM is nowhere near the limit).
        return pl.BlockSpec(arr.shape, lambda g, n=arr.ndim: (0,) * n)

    out = pl.pallas_call(
        kernel,
        out_shape=jax.ShapeDtypeStruct((nG, 1, M), jnp.float32),
        grid_spec=pltpu.PrefetchScalarGridSpec(
            num_scalar_prefetch=0,
            grid=(nG,),
            in_specs=[
                pl.BlockSpec((bb, T, 3), lambda g: (g, 0, 0)),      # queries (sublane-oriented)
                pl.BlockSpec((1, 3, M), lambda g: (g, 0, 0)),       # queries^T group-packed
                pl.BlockSpec((bb, 3, N), lambda g: (g, 0, 0)),      # cond. points, lane-dense
                pl.BlockSpec((bb, C + 1, N), lambda g: (g, 0, 0)),  # fea^T + ones row (bf16)
                full(wpT), full(bpT), full(wcT), full(bcT),
                full(w0T), full(b0T), full(w1T), full(b1T),
                full(woutT), full(bout),
            ],
            out_specs=pl.BlockSpec((1, 1, M), lambda g: (g, 0, 0)),
            scratch_shapes=[pltpu.VMEM((C, M), bf16)],              # interpolated-feature slab
        ),
        compiler_params=pltpu.CompilerParams(dimension_semantics=("parallel",)),
    )(p, pT_pack, pp_t, feaT_aug, wpT, bpT, wcT, bcT, w0T, b0T, w1T, b1T, woutT, bout)
    return out.reshape(B, T)


# ---- pure-JAX f32 reference (same math as the PyTorch module) ----
def reference(p, pp, fea, params, var=VAR):
    wp, bp, wc, bc, w0, b0, w1, b1, wout, bout = params
    diff = pp[:, None, :, :] - p[:, :, None, :]                   # (B, T, N, 3)
    dist = -(jnp.linalg.norm(diff, axis=-1) + 1e-5) ** 2          # (B, T, N)
    w = jnp.exp(dist / var)
    w = w / jnp.sum(w, axis=2, keepdims=True)
    c = jnp.einsum('btn,bnc->btc', w, fea)                        # (B, T, C)
    net = p @ wp + bp
    for i in range(N_BLOCKS):
        net = net + c @ wc[i] + bc[i]
        hid = jax.nn.relu(net) @ w0[i] + b0[i]
        dx = jax.nn.relu(hid) @ w1[i] + b1[i]
        net = net + dx
    out = jnp.sum(jax.nn.relu(net) * wout, axis=-1) + bout[0, 0]
    return out


if __name__ == "__main__":
    key = jax.random.PRNGKey(0)
    ks = jax.random.split(key, 13)
    B, T, N = 4, 64, 128

    p = jax.random.uniform(ks[0], (B, T, DIM), jnp.float32, -0.5, 0.5)    # query points
    pp = jax.random.uniform(ks[1], (B, N, DIM), jnp.float32, -0.5, 0.5)   # conditioning pts
    fea = jax.random.normal(ks[2], (B, N, C_DIM), jnp.float32)            # per-point features

    def init(k, shape, scale):
        return scale * jax.random.normal(k, shape, jnp.float32)

    # deterministic synthetic parameters (x @ W convention: Linear stored as (in, out))
    params = (
        init(ks[3], (DIM, HIDDEN), 0.5),                          # fc_p.weight
        init(ks[4], (1, HIDDEN), 0.1),                            # fc_p.bias
        init(ks[5], (N_BLOCKS, C_DIM, HIDDEN), C_DIM ** -0.5),    # fc_c[i].weight
        init(ks[6], (N_BLOCKS, HIDDEN), 0.1),                     # fc_c[i].bias
        init(ks[7], (N_BLOCKS, HIDDEN, HIDDEN), HIDDEN ** -0.5),  # blocks[i].fc_0.weight
        init(ks[8], (N_BLOCKS, HIDDEN), 0.1),                     # blocks[i].fc_0.bias
        init(ks[9], (N_BLOCKS, HIDDEN, HIDDEN), HIDDEN ** -0.5),  # blocks[i].fc_1.weight
        init(ks[10], (N_BLOCKS, HIDDEN), 0.1),                    # blocks[i].fc_1.bias
        init(ks[11], (1, HIDDEN), HIDDEN ** -0.5),                # fc_out.weight
        init(ks[12], (1, 1), 0.1),                                # fc_out.bias
    )

    out = jax.jit(local_point_decoder)(p, pp, fea, params)
    out = jax.block_until_ready(out)
    ref = reference(p, pp, fea, params)

    assert out.shape == (B, T)
    max_err = float(jnp.max(jnp.abs(out - ref)))
    # bf16 MXU operands + approx reciprocal + sqrt-free exponent vs f32 reference
    assert jnp.allclose(out, ref, rtol=5e-2, atol=5e-2), f"max abs err {max_err}"
    print("KERNEL_OK")
</pallas_src>

<mosaic_0001>
module attributes {stable_mosaic.version = 11 : i64} {
  func.func @decoder_kernel(%arg0: i32, %arg1: memref<2x64x3xf32, #tpu.memory_space<vmem>>, %arg2: memref<1x3x128xf32, #tpu.memory_space<vmem>>, %arg3: memref<2x3x128xf32, #tpu.memory_space<vmem>>, %arg4: memref<2x33x128xbf16, #tpu.memory_space<vmem>>, %arg5: memref<64x3xf32, #tpu.memory_space<vmem>>, %arg6: memref<64x1xf32, #tpu.memory_space<vmem>>, %arg7: memref<320x32xbf16, #tpu.memory_space<vmem>>, %arg8: memref<5x64x1xf32, #tpu.memory_space<vmem>>, %arg9: memref<5x64x64xbf16, #tpu.memory_space<vmem>>, %arg10: memref<5x64x1xf32, #tpu.memory_space<vmem>>, %arg11: memref<5x64x64xbf16, #tpu.memory_space<vmem>>, %arg12: memref<5x64x1xf32, #tpu.memory_space<vmem>>, %arg13: memref<64x1xf32, #tpu.memory_space<vmem>>, %arg14: memref<1x1xf32, #tpu.memory_space<vmem>>, %arg15: memref<1x1x128xf32, #tpu.memory_space<vmem>>, %arg16: memref<32x128xbf16, #tpu.memory_space<vmem>>) attributes {dimension_semantics = [#tpu.dimension_semantics<parallel>], iteration_bounds = array<i64: 2>, scalar_prefetch = 0 : i64, scratch_operands = 1 : i64, tpu.core_type = #tpu.core_type<tc>, window_params = [{transform_indices = @transform_0, window_bounds = array<i64: 2, 64, 3>}, {transform_indices = @transform_1, window_bounds = array<i64: 1, 3, 128>}, {transform_indices = @transform_2, window_bounds = array<i64: 2, 3, 128>}, {transform_indices = @transform_3, window_bounds = array<i64: 2, 33, 128>}, {pipeline_mode = #tpu.pipeline_mode<synchronous>, transform_indices = @transform_4, window_bounds = array<i64: 64, 3>}, {pipeline_mode = #tpu.pipeline_mode<synchronous>, transform_indices = @transform_5, window_bounds = array<i64: 64, 1>}, {pipeline_mode = #tpu.pipeline_mode<synchronous>, transform_indices = @transform_6, window_bounds = array<i64: 320, 32>}, {pipeline_mode = #tpu.pipeline_mode<synchronous>, transform_indices = @transform_7, window_bounds = array<i64: 5, 64, 1>}, {pipeline_mode = #tpu.pipeline_mode<synchronous>, transform_indices = @transform_8, window_bounds = array<i64: 5, 64, 64>}, {pipeline_mode = #tpu.pipeline_mode<synchronous>, transform_indices = @transform_9, window_bounds = array<i64: 5, 64, 1>}, {pipeline_mode = #tpu.pipeline_mode<synchronous>, transform_indices = @transform_10, window_bounds = array<i64: 5, 64, 64>}, {pipeline_mode = #tpu.pipeline_mode<synchronous>, transform_indices = @transform_11, window_bounds = array<i64: 5, 64, 1>}, {pipeline_mode = #tpu.pipeline_mode<synchronous>, transform_indices = @transform_12, window_bounds = array<i64: 64, 1>}, {pipeline_mode = #tpu.pipeline_mode<synchronous>, transform_indices = @transform_13, window_bounds = array<i64: 1, 1>}, {transform_indices = @transform_14, window_bounds = array<i64: 1, 1, 128>}]} {
    %c0 = arith.constant 0 : index
    %c0_0 = arith.constant 0 : index
    %c0_1 = arith.constant 0 : index
    %0 = vector.load %arg1[%c0, %c0_0, %c0_1] : memref<2x64x3xf32, #tpu.memory_space<vmem>>, vector<1x64x3xf32>
    %1 = vector.shape_cast %0 : vector<1x64x3xf32> to vector<64x3xf32>
    %c0_2 = arith.constant 0 : index
    %c0_3 = arith.constant 0 : index
    %c0_4 = arith.constant 0 : index
    %2 = vector.load %arg3[%c0_2, %c0_3, %c0_4] : memref<2x3x128xf32, #tpu.memory_space<vmem>>, vector<1x3x128xf32>
    %3 = vector.shape_cast %2 : vector<1x3x128xf32> to vector<3x128xf32>
    %4 = vector.extract_strided_slice %1 {offsets = [0, 0], sizes = [64, 1], strides = [1, 1]} : vector<64x3xf32> to vector<64x1xf32>
    %5 = vector.extract_strided_slice %1 {offsets = [0, 1], sizes = [64, 1], strides = [1, 1]} : vector<64x3xf32> to vector<64x1xf32>
    %6 = vector.extract_strided_slice %1 {offsets = [0, 2], sizes = [64, 1], strides = [1, 1]} : vector<64x3xf32> to vector<64x1xf32>
    %7 = vector.extract_strided_slice %3 {offsets = [0, 0], sizes = [1, 128], strides = [1, 1]} : vector<3x128xf32> to vector<1x128xf32>
    %8 = vector.extract_strided_slice %3 {offsets = [1, 0], sizes = [1, 128], strides = [1, 1]} : vector<3x128xf32> to vector<1x128xf32>
    %9 = vector.extract_strided_slice %3 {offsets = [2, 0], sizes = [1, 128], strides = [1, 1]} : vector<3x128xf32> to vector<1x128xf32>
    %10 = arith.mulf %4, %4 : vector<64x1xf32>
    %11 = arith.mulf %5, %5 : vector<64x1xf32>
    %12 = arith.addf %10, %11 : vector<64x1xf32>
    %13 = arith.mulf %6, %6 : vector<64x1xf32>
    %14 = arith.addf %12, %13 : vector<64x1xf32>
    %15 = arith.mulf %7, %7 : vector<1x128xf32>
    %16 = arith.mulf %8, %8 : vector<1x128xf32>
    %17 = arith.addf %15, %16 : vector<1x128xf32>
    %18 = arith.mulf %9, %9 : vector<1x128xf32>
    %19 = arith.addf %17, %18 : vector<1x128xf32>
    %20 = vector.broadcast %4 : vector<64x1xf32> to vector<64x128xf32>
    %21 = vector.broadcast %7 : vector<1x128xf32> to vector<64x128xf32>
    %22 = arith.mulf %20, %21 : vector<64x128xf32>
    %23 = vector.broadcast %5 : vector<64x1xf32> to vector<64x128xf32>
    %24 = vector.broadcast %8 : vector<1x128xf32> to vector<64x128xf32>
    %25 = arith.mulf %23, %24 : vector<64x128xf32>
    %26 = arith.addf %22, %25 : vector<64x128xf32>
    %27 = vector.broadcast %6 : vector<64x1xf32> to vector<64x128xf32>
    %28 = vector.broadcast %9 : vector<1x128xf32> to vector<64x128xf32>
    %29 = arith.mulf %27, %28 : vector<64x128xf32>
    %30 = arith.addf %26, %29 : vector<64x128xf32>
    %cst = arith.constant 2.000000e+00 : f32
    %31 = vector.broadcast %cst : f32 to vector<64x128xf32>
    %32 = arith.mulf %31, %30 : vector<64x128xf32>
    %33 = vector.broadcast %14 : vector<64x1xf32> to vector<64x128xf32>
    %34 = arith.subf %32, %33 : vector<64x128xf32>
    %35 = vector.broadcast %19 : vector<1x128xf32> to vector<64x128xf32>
    %36 = arith.subf %34, %35 : vector<64x128xf32>
    %cst_5 = arith.constant 2.500000e+01 : f32
    %37 = vector.broadcast %cst_5 : f32 to vector<64x128xf32>
    %38 = arith.mulf %36, %37 : vector<64x128xf32>
    %39 = math.exp %38 : vector<64x128xf32>
    %c0_6 = arith.constant 0 : index
    %c0_7 = arith.constant 0 : index
    %c0_8 = arith.constant 0 : index
    %40 = vector.load %arg4[%c0_6, %c0_7, %c0_8] : memref<2x33x128xbf16, #tpu.memory_space<vmem>>, vector<1x33x128xbf16>
    %41 = vector.shape_cast %40 : vector<1x33x128xbf16> to vector<33x128xbf16>
    %42 = arith.truncf %39 : vector<64x128xf32> to vector<64x128xbf16>
    %cst_9 = arith.constant dense<0.000000e+00> : vector<33x64xf32>
    %43 = tpu.matmul %41, %42, %cst_9 {dimension_numbers = #tpu.dot_dimension_numbers<[1], [1], [0], [0], [0, 0, 1, 0], [], []>} : vector<33x128xbf16>, vector<64x128xbf16>, vector<33x64xf32> -> vector<33x64xf32>
    %44 = vector.extract_strided_slice %43 {offsets = [32, 0], sizes = [1, 64], strides = [1, 1]} : vector<33x64xf32> to vector<1x64xf32>
    %cst_10 = arith.constant 1.000000e-30 : f32
    %45 = vector.broadcast %cst_10 : f32 to vector<1x64xf32>
    %46 = arith.maximumf %44, %45 : vector<1x64xf32>
    %47 = tpu.reciprocal %46 {approx = true} : vector<1x64xf32> -> vector<1x64xf32>
    %48 = vector.extract_strided_slice %43 {offsets = [0, 0], sizes = [32, 64], strides = [1, 1]} : vector<33x64xf32> to vector<32x64xf32>
    %49 = vector.broadcast %47 : vector<1x64xf32> to vector<32x64xf32>
    %50 = arith.mulf %48, %49 : vector<32x64xf32>
    %51 = arith.truncf %50 : vector<32x64xf32> to vector<32x64xbf16>
    %c0_11 = arith.constant 0 : index
    %c0_12 = arith.constant 0 : index
    %52 = vector.load %arg16[%c0_11, %c0_12] : memref<32x128xbf16, #tpu.memory_space<vmem>>, vector<32x64xbf16>
    tpu.vector_store %arg16[%c0_11, %c0_12], %51 {strides = array<i32>} : memref<32x128xbf16, #tpu.memory_space<vmem>>, vector<32x64xbf16>,
    %c1 = arith.constant 1 : index
    %c0_13 = arith.constant 0 : index
    %c0_14 = arith.constant 0 : index
    %53 = vector.load %arg1[%c1, %c0_13, %c0_14] : memref<2x64x3xf32, #tpu.memory_space<vmem>>, vector<1x64x3xf32>
    %54 = vector.shape_cast %53 : vector<1x64x3xf32> to vector<64x3xf32>
    %c1_15 = arith.constant 1 : index
    %c0_16 = arith.constant 0 : index
    %c0_17 = arith.constant 0 : index
    %55 = vector.load %arg3[%c1_15, %c0_16, %c0_17] : memref<2x3x128xf32, #tpu.memory_space<vmem>>, vector<1x3x128xf32>
    %56 = vector.shape_cast %55 : vector<1x3x128xf32> to vector<3x128xf32>
    %57 = vector.extract_strided_slice %54 {offsets = [0, 0], sizes = [64, 1], strides = [1, 1]} : vector<64x3xf32> to vector<64x1xf32>
    %58 = vector.extract_strided_slice %54 {offsets = [0, 1], sizes = [64, 1], strides = [1, 1]} : vector<64x3xf32> to vector<64x1xf32>
    %59 = vector.extract_strided_slice %54 {offsets = [0, 2], sizes = [64, 1], strides = [1, 1]} : vector<64x3xf32> to vector<64x1xf32>
    %60 = vector.extract_strided_slice %56 {offsets = [0, 0], sizes = [1, 128], strides = [1, 1]} : vector<3x128xf32> to vector<1x128xf32>
    %61 = vector.extract_strided_slice %56 {offsets = [1, 0], sizes = [1, 128], strides = [1, 1]} : vector<3x128xf32> to vector<1x128xf32>
    %62 = vector.extract_strided_slice %56 {offsets = [2, 0], sizes = [1, 128], strides = [1, 1]} : vector<3x128xf32> to vector<1x128xf32>
    %63 = arith.mulf %57, %57 : vector<64x1xf32>
    %64 = arith.mulf %58, %58 : vector<64x1xf32>
    %65 = arith.addf %63, %64 : vector<64x1xf32>
    %66 = arith.mulf %59, %59 : vector<64x1xf32>
    %67 = arith.addf %65, %66 : vector<64x1xf32>
    %68 = arith.mulf %60, %60 : vector<1x128xf32>
    %69 = arith.mulf %61, %61 : vector<1x128xf32>
    %70 = arith.addf %68, %69 : vector<1x128xf32>
    %71 = arith.mulf %62, %62 : vector<1x128xf32>
    %72 = arith.addf %70, %71 : vector<1x128xf32>
    %73 = vector.broadcast %57 : vector<64x1xf32> to vector<64x128xf32>
    %74 = vector.broadcast %60 : vector<1x128xf32> to vector<64x128xf32>
    %75 = arith.mulf %73, %74 : vector<64x128xf32>
    %76 = vector.broadcast %58 : vector<64x1xf32> to vector<64x128xf32>
    %77 = vector.broadcast %61 : vector<1x128xf32> to vector<64x128xf32>
    %78 = arith.mulf %76, %77 : vector<64x128xf32>
    %79 = arith.addf %75, %78 : vector<64x128xf32>
    %80 = vector.broadcast %59 : vector<64x1xf32> to vector<64x128xf32>
    %81 = vector.broadcast %62 : vector<1x128xf32> to vector<64x128xf32>
    %82 = arith.mulf %80, %81 : vector<64x128xf32>
    %83 = arith.addf %79, %82 : vector<64x128xf32>
    %cst_18 = arith.constant 2.000000e+00 : f32
    %84 = vector.broadcast %cst_18 : f32 to vector<64x128xf32>
    %85 = arith.mulf %84, %83 : vector<64x128xf32>
    %86 = vector.broadcast %67 : vector<64x1xf32> to vector<64x128xf32>
    %87 = arith.subf %85, %86 : vector<64x128xf32>
    %88 = vector.broadcast %72 : vector<1x128xf32> to vector<64x128xf32>
    %89 = arith.subf %87, %88 : vector<64x128xf32>
    %cst_19 = arith.constant 2.500000e+01 : f32
    %90 = vector.broadcast %cst_19 : f32 to vector<64x128xf32>
    %91 = arith.mulf %89, %90 : vector<64x128xf32>
    %92 = math.exp %91 : vector<64x128xf32>
    %c1_20 = arith.constant 1 : index
    %c0_21 = arith.constant 0 : index
    %c0_22 = arith.constant 0 : index
    %93 = vector.load %arg4[%c1_20, %c0_21, %c0_22] : memref<2x33x128xbf16, #tpu.memory_space<vmem>>, vector<1x33x128xbf16>
    %94 = vector.shape_cast %93 : vector<1x33x128xbf16> to vector<33x128xbf16>
    %95 = arith.truncf %92 : vector<64x128xf32> to vector<64x128xbf16>
    %cst_23 = arith.constant dense<0.000000e+00> : vector<33x64xf32>
    %96 = tpu.matmul %94, %95, %cst_23 {dimension_numbers = #tpu.dot_dimension_numbers<[1], [1], [0], [0], [0, 0, 1, 0], [], []>} : vector<33x128xbf16>, vector<64x128xbf16>, vector<33x64xf32> -> vector<33x64xf32>
    %97 = vector.extract_strided_slice %96 {offsets = [32, 0], sizes = [1, 64], strides = [1, 1]} : vector<33x64xf32> to vector<1x64xf32>
    %cst_24 = arith.constant 1.000000e-30 : f32
    %98 = vector.broadcast %cst_24 : f32 to vector<1x64xf32>
    %99 = arith.maximumf %97, %98 : vector<1x64xf32>
    %100 = tpu.reciprocal %99 {approx = true} : vector<1x64xf32> -> vector<1x64xf32>
    %101 = vector.extract_strided_slice %96 {offsets = [0, 0], sizes = [32, 64], strides = [1, 1]} : vector<33x64xf32> to vector<32x64xf32>
    %102 = vector.broadcast %100 : vector<1x64xf32> to vector<32x64xf32>
    %103 = arith.mulf %101, %102 : vector<32x64xf32>
    %104 = arith.truncf %103 : vector<32x64xf32> to vector<32x64xbf16>
    %c0_25 = arith.constant 0 : index
    %c64 = arith.constant 64 : index
    %105 = vector.load %arg16[%c0_25, %c64] : memref<32x128xbf16, #tpu.memory_space<vmem>>, vector<32x64xbf16>
    tpu.vector_store %arg16[%c0_25, %c64], %104 {strides = array<i32>} : memref<32x128xbf16, #tpu.memory_space<vmem>>, vector<32x64xbf16>,
    %c0_26 = arith.constant 0 : index
    %c0_27 = arith.constant 0 : index
    %c0_28 = arith.constant 0 : index
    %106 = vector.load %arg2[%c0_26, %c0_27, %c0_28] : memref<1x3x128xf32, #tpu.memory_space<vmem>>, vector<1x3x128xf32>
    %107 = vector.shape_cast %106 : vector<1x3x128xf32> to vector<3x128xf32>
    %c0_29 = arith.constant 0 : index
    %c0_30 = arith.constant 0 : index
    %108 = vector.load %arg5[%c0_29, %c0_30] : memref<64x3xf32, #tpu.memory_space<vmem>>, vector<64x3xf32>
    %109 = vector.extract_strided_slice %108 {offsets = [0, 0], sizes = [64, 1], strides = [1, 1]} : vector<64x3xf32> to vector<64x1xf32>
    %110 = vector.extract_strided_slice %107 {offsets = [0, 0], sizes = [1, 128], strides = [1, 1]} : vector<3x128xf32> to vector<1x128xf32>
    %111 = vector.broadcast %109 : vector<64x1xf32> to vector<64x128xf32>
    %112 = vector.broadcast %110 : vector<1x128xf32> to vector<64x128xf32>
    %113 = arith.mulf %111, %112 : vector<64x128xf32>
    %114 = vector.extract_strided_slice %108 {offsets = [0, 1], sizes = [64, 1], strides = [1, 1]} : vector<64x3xf32> to vector<64x1xf32>
    %115 = vector.extract_strided_slice %107 {offsets = [1, 0], sizes = [1, 128], strides = [1, 1]} : vector<3x128xf32> to vector<1x128xf32>
    %116 = vector.broadcast %114 : vector<64x1xf32> to vector<64x128xf32>
    %117 = vector.broadcast %115 : vector<1x128xf32> to vector<64x128xf32>
    %118 = arith.mulf %116, %117 : vector<64x128xf32>
    %119 = arith.addf %113, %118 : vector<64x128xf32>
    %120 = vector.extract_strided_slice %108 {offsets = [0, 2], sizes = [64, 1], strides = [1, 1]} : vector<64x3xf32> to vector<64x1xf32>
    %121 = vector.extract_strided_slice %107 {offsets = [2, 0], sizes = [1, 128], strides = [1, 1]} : vector<3x128xf32> to vector<1x128xf32>
    %122 = vector.broadcast %120 : vector<64x1xf32> to vector<64x128xf32>
    %123 = vector.broadcast %121 : vector<1x128xf32> to vector<64x128xf32>
    %124 = arith.mulf %122, %123 : vector<64x128xf32>
    %125 = arith.addf %119, %124 : vector<64x128xf32>
    %c0_31 = arith.constant 0 : index
    %c0_32 = arith.constant 0 : index
    %126 = vector.load %arg6[%c0_31, %c0_32] : memref<64x1xf32, #tpu.memory_space<vmem>>, vector<64x1xf32>
    %127 = vector.broadcast %126 : vector<64x1xf32> to vector<64x128xf32>
    %128 = arith.addf %125, %127 : vector<64x128xf32>
    %c0_33 = arith.constant 0 : index
    %c0_34 = arith.constant 0 : index
    %129 = vector.load %arg7[%c0_33, %c0_34] : memref<320x32xbf16, #tpu.memory_space<vmem>>, vector<320x32xbf16>
    %c0_35 = arith.constant 0 : index
    %c0_36 = arith.constant 0 : index
    %130 = vector.load %arg16[%c0_35, %c0_36] : memref<32x128xbf16, #tpu.memory_space<vmem>>, vector<32x128xbf16>
    %cst_37 = arith.constant dense<0.000000e+00> : vector<320x128xf32>
    %131 = tpu.matmul %129, %130, %cst_37 {dimension_numbers = #tpu.dot_dimension_numbers<[1], [0], [0], [1], [0, 0, 1, 1], [], []>} : vector<320x32xbf16>, vector<32x128xbf16>, vector<320x128xf32> -> vector<320x128xf32>
    %132 = vector.extract_strided_slice %131 {offsets = [0, 0], sizes = [64, 128], strides = [1, 1]} : vector<320x128xf32> to vector<64x128xf32>
    %133 = arith.addf %128, %132 : vector<64x128xf32>
    %c0_38 = arith.constant 0 : index
    %c0_39 = arith.constant 0 : index
    %c0_40 = arith.constant 0 : index
    %134 = vector.load %arg8[%c0_38, %c0_39, %c0_40] : memref<5x64x1xf32, #tpu.memory_space<vmem>>, vector<1x64x1xf32>
    %135 = vector.shape_cast %134 : vector<1x64x1xf32> to vector<64x1xf32>
    %136 = vector.broadcast %135 : vector<64x1xf32> to vector<64x128xf32>
    %137 = arith.addf %133, %136 : vector<64x128xf32>
    %c0_41 = arith.constant 0 : index
    %c0_42 = arith.constant 0 : index
    %c0_43 = arith.constant 0 : index
    %138 = vector.load %arg9[%c0_41, %c0_42, %c0_43] : memref<5x64x64xbf16, #tpu.memory_space<vmem>>, vector<1x64x64xbf16>
    %139 = vector.shape_cast %138 : vector<1x64x64xbf16> to vector<64x64xbf16>
    %cst_44 = arith.constant 0.000000e+00 : f32
    %140 = vector.broadcast %cst_44 : f32 to vector<64x128xf32>
    %141 = arith.maximumf %137, %140 : vector<64x128xf32>
    %142 = arith.truncf %141 : vector<64x128xf32> to vector<64x128xbf16>
    %cst_45 = arith.constant dense<0.000000e+00> : vector<64x128xf32>
    %143 = tpu.matmul %139, %142, %cst_45 {dimension_numbers = #tpu.dot_dimension_numbers<[1], [0], [0], [1], [0, 0, 1, 1], [], []>} : vector<64x64xbf16>, vector<64x128xbf16>, vector<64x128xf32> -> vector<64x128xf32>
    %c0_46 = arith.constant 0 : index
    %c0_47 = arith.constant 0 : index
    %c0_48 = arith.constant 0 : index
    %144 = vector.load %arg10[%c0_46, %c0_47, %c0_48] : memref<5x64x1xf32, #tpu.memory_space<vmem>>, vector<1x64x1xf32>
    %145 = vector.shape_cast %144 : vector<1x64x1xf32> to vector<64x1xf32>
    %146 = vector.broadcast %145 : vector<64x1xf32> to vector<64x128xf32>
    %147 = arith.addf %143, %146 : vector<64x128xf32>
    %c0_49 = arith.constant 0 : index
    %c0_50 = arith.constant 0 : index
    %c0_51 = arith.constant 0 : index
    %148 = vector.load %arg11[%c0_49, %c0_50, %c0_51] : memref<5x64x64xbf16, #tpu.memory_space<vmem>>, vector<1x64x64xbf16>
    %149 = vector.shape_cast %148 : vector<1x64x64xbf16> to vector<64x64xbf16>
    %cst_52 = arith.constant 0.000000e+00 : f32
    %150 = vector.broadcast %cst_52 : f32 to vector<64x128xf32>
    %151 = arith.maximumf %147, %150 : vector<64x128xf32>
    %152 = arith.truncf %151 : vector<64x128xf32> to vector<64x128xbf16>
    %cst_53 = arith.constant dense<0.000000e+00> : vector<64x128xf32>
    %153 = tpu.matmul %149, %152, %cst_53 {dimension_numbers = #tpu.dot_dimension_numbers<[1], [0], [0], [1], [0, 0, 1, 1], [], []>} : vector<64x64xbf16>, vector<64x128xbf16>, vector<64x128xf32> -> vector<64x128xf32>
    %c0_54 = arith.constant 0 : index
    %c0_55 = arith.constant 0 : index
    %c0_56 = arith.constant 0 : index
    %154 = vector.load %arg12[%c0_54, %c0_55, %c0_56] : memref<5x64x1xf32, #tpu.memory_space<vmem>>, vector<1x64x1xf32>
    %155 = vector.shape_cast %154 : vector<1x64x1xf32> to vector<64x1xf32>
    %156 = vector.broadcast %155 : vector<64x1xf32> to vector<64x128xf32>
    %157 = arith.addf %153, %156 : vector<64x128xf32>
    %158 = arith.addf %137, %157 : vector<64x128xf32>
    %159 = vector.extract_strided_slice %131 {offsets = [64, 0], sizes = [64, 128], strides = [1, 1]} : vector<320x128xf32> to vector<64x128xf32>
    %160 = arith.addf %158, %159 : vector<64x128xf32>
    %c1_57 = arith.constant 1 : index
    %c0_58 = arith.constant 0 : index
    %c0_59 = arith.constant 0 : index
    %161 = vector.load %arg8[%c1_57, %c0_58, %c0_59] : memref<5x64x1xf32, #tpu.memory_space<vmem>>, vector<1x64x1xf32>
    %162 = vector.shape_cast %161 : vector<1x64x1xf32> to vector<64x1xf32>
    %163 = vector.broadcast %162 : vector<64x1xf32> to vector<64x128xf32>
    %164 = arith.addf %160, %163 : vector<64x128xf32>
    %c1_60 = arith.constant 1 : index
    %c0_61 = arith.constant 0 : index
    %c0_62 = arith.constant 0 : index
    %165 = vector.load %arg9[%c1_60, %c0_61, %c0_62] : memref<5x64x64xbf16, #tpu.memory_space<vmem>>, vector<1x64x64xbf16>
    %166 = vector.shape_cast %165 : vector<1x64x64xbf16> to vector<64x64xbf16>
    %cst_63 = arith.constant 0.000000e+00 : f32
    %167 = vector.broadcast %cst_63 : f32 to vector<64x128xf32>
    %168 = arith.maximumf %164, %167 : vector<64x128xf32>
    %169 = arith.truncf %168 : vector<64x128xf32> to vector<64x128xbf16>
    %cst_64 = arith.constant dense<0.000000e+00> : vector<64x128xf32>
    %170 = tpu.matmul %166, %169, %cst_64 {dimension_numbers = #tpu.dot_dimension_numbers<[1], [0], [0], [1], [0, 0, 1, 1], [], []>} : vector<64x64xbf16>, vector<64x128xbf16>, vector<64x128xf32> -> vector<64x128xf32>
    %c1_65 = arith.constant 1 : index
    %c0_66 = arith.constant 0 : index
    %c0_67 = arith.constant 0 : index
    %171 = vector.load %arg10[%c1_65, %c0_66, %c0_67] : memref<5x64x1xf32, #tpu.memory_space<vmem>>, vector<1x64x1xf32>
    %172 = vector.shape_cast %171 : vector<1x64x1xf32> to vector<64x1xf32>
    %173 = vector.broadcast %172 : vector<64x1xf32> to vector<64x128xf32>
    %174 = arith.addf %170, %173 : vector<64x128xf32>
    %c1_68 = arith.constant 1 : index
    %c0_69 = arith.constant 0 : index
    %c0_70 = arith.constant 0 : index
    %175 = vector.load %arg11[%c1_68, %c0_69, %c0_70] : memref<5x64x64xbf16, #tpu.memory_space<vmem>>, vector<1x64x64xbf16>
    %176 = vector.shape_cast %175 : vector<1x64x64xbf16> to vector<64x64xbf16>
    %cst_71 = arith.constant 0.000000e+00 : f32
    %177 = vector.broadcast %cst_71 : f32 to vector<64x128xf32>
    %178 = arith.maximumf %174, %177 : vector<64x128xf32>
    %179 = arith.truncf %178 : vector<64x128xf32> to vector<64x128xbf16>
    %cst_72 = arith.constant dense<0.000000e+00> : vector<64x128xf32>
    %180 = tpu.matmul %176, %179, %cst_72 {dimension_numbers = #tpu.dot_dimension_numbers<[1], [0], [0], [1], [0, 0, 1, 1], [], []>} : vector<64x64xbf16>, vector<64x128xbf16>, vector<64x128xf32> -> vector<64x128xf32>
    %c1_73 = arith.constant 1 : index
    %c0_74 = arith.constant 0 : index
    %c0_75 = arith.constant 0 : index
    %181 = vector.load %arg12[%c1_73, %c0_74, %c0_75] : memref<5x64x1xf32, #tpu.memory_space<vmem>>, vector<1x64x1xf32>
    %182 = vector.shape_cast %181 : vector<1x64x1xf32> to vector<64x1xf32>
    %183 = vector.broadcast %182 : vector<64x1xf32> to vector<64x128xf32>
    %184 = arith.addf %180, %183 : vector<64x128xf32>
    %185 = arith.addf %164, %184 : vector<64x128xf32>
    %186 = vector.extract_strided_slice %131 {offsets = [128, 0], sizes = [64, 128], strides = [1, 1]} : vector<320x128xf32> to vector<64x128xf32>
    %187 = arith.addf %185, %186 : vector<64x128xf32>
    %c2 = arith.constant 2 : index
    %c0_76 = arith.constant 0 : index
    %c0_77 = arith.constant 0 : index
    %188 = vector.load %arg8[%c2, %c0_76, %c0_77] : memref<5x64x1xf32, #tpu.memory_space<vmem>>, vector<1x64x1xf32>
    %189 = vector.shape_cast %188 : vector<1x64x1xf32> to vector<64x1xf32>
    %190 = vector.broadcast %189 : vector<64x1xf32> to vector<64x128xf32>
    %191 = arith.addf %187, %190 : vector<64x128xf32>
    %c2_78 = arith.constant 2 : index
    %c0_79 = arith.constant 0 : index
    %c0_80 = arith.constant 0 : index
    %192 = vector.load %arg9[%c2_78, %c0_79, %c0_80] : memref<5x64x64xbf16, #tpu.memory_space<vmem>>, vector<1x64x64xbf16>
    %193 = vector.shape_cast %192 : vector<1x64x64xbf16> to vector<64x64xbf16>
    %cst_81 = arith.constant 0.000000e+00 : f32
    %194 = vector.broadcast %cst_81 : f32 to vector<64x128xf32>
    %195 = arith.maximumf %191, %194 : vector<64x128xf32>
    %196 = arith.truncf %195 : vector<64x128xf32> to vector<64x128xbf16>
    %cst_82 = arith.constant dense<0.000000e+00> : vector<64x128xf32>
    %197 = tpu.matmul %193, %196, %cst_82 {dimension_numbers = #tpu.dot_dimension_numbers<[1], [0], [0], [1], [0, 0, 1, 1], [], []>} : vector<64x64xbf16>, vector<64x128xbf16>, vector<64x128xf32> -> vector<64x128xf32>
    %c2_83 = arith.constant 2 : index
    %c0_84 = arith.constant 0 : index
    %c0_85 = arith.constant 0 : index
    %198 = vector.load %arg10[%c2_83, %c0_84, %c0_85] : memref<5x64x1xf32, #tpu.memory_space<vmem>>, vector<1x64x1xf32>
    %199 = vector.shape_cast %198 : vector<1x64x1xf32> to vector<64x1xf32>
    %200 = vector.broadcast %199 : vector<64x1xf32> to vector<64x128xf32>
    %201 = arith.addf %197, %200 : vector<64x128xf32>
    %c2_86 = arith.constant 2 : index
    %c0_87 = arith.constant 0 : index
    %c0_88 = arith.constant 0 : index
    %202 = vector.load %arg11[%c2_86, %c0_87, %c0_88] : memref<5x64x64xbf16, #tpu.memory_space<vmem>>, vector<1x64x64xbf16>
    %203 = vector.shape_cast %202 : vector<1x64x64xbf16> to vector<64x64xbf16>
    %cst_89 = arith.constant 0.000000e+00 : f32
    %204 = vector.broadcast %cst_89 : f32 to vector<64x128xf32>
    %205 = arith.maximumf %201, %204 : vector<64x128xf32>
    %206 = arith.truncf %205 : vector<64x128xf32> to vector<64x128xbf16>
    %cst_90 = arith.constant dense<0.000000e+00> : vector<64x128xf32>
    %207 = tpu.matmul %203, %206, %cst_90 {dimension_numbers = #tpu.dot_dimension_numbers<[1], [0], [0], [1], [0, 0, 1, 1], [], []>} : vector<64x64xbf16>, vector<64x128xbf16>, vector<64x128xf32> -> vector<64x128xf32>
    %c2_91 = arith.constant 2 : index
    %c0_92 = arith.constant 0 : index
    %c0_93 = arith.constant 0 : index
    %208 = vector.load %arg12[%c2_91, %c0_92, %c0_93] : memref<5x64x1xf32, #tpu.memory_space<vmem>>, vector<1x64x1xf32>
    %209 = vector.shape_cast %208 : vector<1x64x1xf32> to vector<64x1xf32>
    %210 = vector.broadcast %209 : vector<64x1xf32> to vector<64x128xf32>
    %211 = arith.addf %207, %210 : vector<64x128xf32>
    %212 = arith.addf %191, %211 : vector<64x128xf32>
    %213 = vector.extract_strided_slice %131 {offsets = [192, 0], sizes = [64, 128], strides = [1, 1]} : vector<320x128xf32> to vector<64x128xf32>
    %214 = arith.addf %212, %213 : vector<64x128xf32>
    %c3 = arith.constant 3 : index
    %c0_94 = arith.constant 0 : index
    %c0_95 = arith.constant 0 : index
    %215 = vector.load %arg8[%c3, %c0_94, %c0_95] : memref<5x64x1xf32, #tpu.memory_space<vmem>>, vector<1x64x1xf32>
    %216 = vector.shape_cast %215 : vector<1x64x1xf32> to vector<64x1xf32>
    %217 = vector.broadcast %216 : vector<64x1xf32> to vector<64x128xf32>
    %218 = arith.addf %214, %217 : vector<64x128xf32>
    %c3_96 = arith.constant 3 : index
    %c0_97 = arith.constant 0 : index
    %c0_98 = arith.constant 0 : index
    %219 = vector.load %arg9[%c3_96, %c0_97, %c0_98] : memref<5x64x64xbf16, #tpu.memory_space<vmem>>, vector<1x64x64xbf16>
    %220 = vector.shape_cast %219 : vector<1x64x64xbf16> to vector<64x64xbf16>
    %cst_99 = arith.constant 0.000000e+00 : f32
    %221 = vector.broadcast %cst_99 : f32 to vector<64x128xf32>
    %222 = arith.maximumf %218, %221 : vector<64x128xf32>
    %223 = arith.truncf %222 : vector<64x128xf32> to vector<64x128xbf16>
    %cst_100 = arith.constant dense<0.000000e+00> : vector<64x128xf32>
    %224 = tpu.matmul %220, %223, %cst_100 {dimension_numbers = #tpu.dot_dimension_numbers<[1], [0], [0], [1], [0, 0, 1, 1], [], []>} : vector<64x64xbf16>, vector<64x128xbf16>, vector<64x128xf32> -> vector<64x128xf32>
    %c3_101 = arith.constant 3 : index
    %c0_102 = arith.constant 0 : index
    %c0_103 = arith.constant 0 : index
    %225 = vector.load %arg10[%c3_101, %c0_102, %c0_103] : memref<5x64x1xf32, #tpu.memory_space<vmem>>, vector<1x64x1xf32>
    %226 = vector.shape_cast %225 : vector<1x64x1xf32> to vector<64x1xf32>
    %227 = vector.broadcast %226 : vector<64x1xf32> to vector<64x128xf32>
    %228 = arith.addf %224, %227 : vector<64x128xf32>
    %c3_104 = arith.constant 3 : index
    %c0_105 = arith.constant 0 : index
    %c0_106 = arith.constant 0 : index
    %229 = vector.load %arg11[%c3_104, %c0_105, %c0_106] : memref<5x64x64xbf16, #tpu.memory_space<vmem>>, vector<1x64x64xbf16>
    %230 = vector.shape_cast %229 : vector<1x64x64xbf16> to vector<64x64xbf16>
    %cst_107 = arith.constant 0.000000e+00 : f32
    %231 = vector.broadcast %cst_107 : f32 to vector<64x128xf32>
    %232 = arith.maximumf %228, %231 : vector<64x128xf32>
    %233 = arith.truncf %232 : vector<64x128xf32> to vector<64x128xbf16>
    %cst_108 = arith.constant dense<0.000000e+00> : vector<64x128xf32>
    %234 = tpu.matmul %230, %233, %cst_108 {dimension_numbers = #tpu.dot_dimension_numbers<[1], [0], [0], [1], [0, 0, 1, 1], [], []>} : vector<64x64xbf16>, vector<64x128xbf16>, vector<64x128xf32> -> vector<64x128xf32>
    %c3_109 = arith.constant 3 : index
    %c0_110 = arith.constant 0 : index
    %c0_111 = arith.constant 0 : index
    %235 = vector.load %arg12[%c3_109, %c0_110, %c0_111] : memref<5x64x1xf32, #tpu.memory_space<vmem>>, vector<1x64x1xf32>
    %236 = vector.shape_cast %235 : vector<1x64x1xf32> to vector<64x1xf32>
    %237 = vector.broadcast %236 : vector<64x1xf32> to vector<64x128xf32>
    %238 = arith.addf %234, %237 : vector<64x128xf32>
    %239 = arith.addf %218, %238 : vector<64x128xf32>
    %240 = vector.extract_strided_slice %131 {offsets = [256, 0], sizes = [64, 128], strides = [1, 1]} : vector<320x128xf32> to vector<64x128xf32>
    %241 = arith.addf %239, %240 : vector<64x128xf32>
    %c4 = arith.constant 4 : index
    %c0_112 = arith.constant 0 : index
    %c0_113 = arith.constant 0 : index
    %242 = vector.load %arg8[%c4, %c0_112, %c0_113] : memref<5x64x1xf32, #tpu.memory_space<vmem>>, vector<1x64x1xf32>
    %243 = vector.shape_cast %242 : vector<1x64x1xf32> to vector<64x1xf32>
    %244 = vector.broadcast %243 : vector<64x1xf32> to vector<64x128xf32>
    %245 = arith.addf %241, %244 : vector<64x128xf32>
    %c4_114 = arith.constant 4 : index
    %c0_115 = arith.constant 0 : index
    %c0_116 = arith.constant 0 : index
    %246 = vector.load %arg9[%c4_114, %c0_115, %c0_116] : memref<5x64x64xbf16, #tpu.memory_space<vmem>>, vector<1x64x64xbf16>
    %247 = vector.shape_cast %246 : vector<1x64x64xbf16> to vector<64x64xbf16>
    %cst_117 = arith.constant 0.000000e+00 : f32
    %248 = vector.broadcast %cst_117 : f32 to vector<64x128xf32>
    %249 = arith.maximumf %245, %248 : vector<64x128xf32>
    %250 = arith.truncf %249 : vector<64x128xf32> to vector<64x128xbf16>
    %cst_118 = arith.constant dense<0.000000e+00> : vector<64x128xf32>
    %251 = tpu.matmul %247, %250, %cst_118 {dimension_numbers = #tpu.dot_dimension_numbers<[1], [0], [0], [1], [0, 0, 1, 1], [], []>} : vector<64x64xbf16>, vector<64x128xbf16>, vector<64x128xf32> -> vector<64x128xf32>
    %c4_119 = arith.constant 4 : index
    %c0_120 = arith.constant 0 : index
    %c0_121 = arith.constant 0 : index
    %252 = vector.load %arg10[%c4_119, %c0_120, %c0_121] : memref<5x64x1xf32, #tpu.memory_space<vmem>>, vector<1x64x1xf32>
    %253 = vector.shape_cast %252 : vector<1x64x1xf32> to vector<64x1xf32>
    %254 = vector.broadcast %253 : vector<64x1xf32> to vector<64x128xf32>
    %255 = arith.addf %251, %254 : vector<64x128xf32>
    %c4_122 = arith.constant 4 : index
    %c0_123 = arith.constant 0 : index
    %c0_124 = arith.constant 0 : index
    %256 = vector.load %arg11[%c4_122, %c0_123, %c0_124] : memref<5x64x64xbf16, #tpu.memory_space<vmem>>, vector<1x64x64xbf16>
    %257 = vector.shape_cast %256 : vector<1x64x64xbf16> to vector<64x64xbf16>
    %cst_125 = arith.constant 0.000000e+00 : f32
    %258 = vector.broadcast %cst_125 : f32 to vector<64x128xf32>
    %259 = arith.maximumf %255, %258 : vector<64x128xf32>
    %260 = arith.truncf %259 : vector<64x128xf32> to vector<64x128xbf16>
    %cst_126 = arith.constant dense<0.000000e+00> : vector<64x128xf32>
    %261 = tpu.matmul %257, %260, %cst_126 {dimension_numbers = #tpu.dot_dimension_numbers<[1], [0], [0], [1], [0, 0, 1, 1], [], []>} : vector<64x64xbf16>, vector<64x128xbf16>, vector<64x128xf32> -> vector<64x128xf32>
    %c4_127 = arith.constant 4 : index
    %c0_128 = arith.constant 0 : index
    %c0_129 = arith.constant 0 : index
    %262 = vector.load %arg12[%c4_127, %c0_128, %c0_129] : memref<5x64x1xf32, #tpu.memory_space<vmem>>, vector<1x64x1xf32>
    %263 = vector.shape_cast %262 : vector<1x64x1xf32> to vector<64x1xf32>
    %264 = vector.broadcast %263 : vector<64x1xf32> to vector<64x128xf32>
    %265 = arith.addf %261, %264 : vector<64x128xf32>
    %266 = arith.addf %245, %265 : vector<64x128xf32>
    %cst_130 = arith.constant 0.000000e+00 : f32
    %267 = vector.broadcast %cst_130 : f32 to vector<64x128xf32>
    %268 = arith.maximumf %266, %267 : vector<64x128xf32>
    %c0_131 = arith.constant 0 : index
    %c0_132 = arith.constant 0 : index
    %269 = vector.load %arg13[%c0_131, %c0_132] : memref<64x1xf32, #tpu.memory_space<vmem>>, vector<64x1xf32>
    %270 = vector.broadcast %269 : vector<64x1xf32> to vector<64x128xf32>
    %271 = arith.mulf %268, %270 : vector<64x128xf32>
    %cst_133 = arith.constant dense<0.000000e+00> : vector<128xf32>
    %272 = vector.multi_reduction <add>, %271, %cst_133 [0] : vector<64x128xf32> to vector<128xf32>
    %273 = vector.shape_cast %272 : vector<128xf32> to vector<1x128xf32>
    %c0_134 = arith.constant 0 : index
    %c0_135 = arith.constant 0 : index
    %274 = vector.load %arg14[%c0_134, %c0_135] : memref<1x1xf32, #tpu.memory_space<vmem>>, vector<1x1xf32>
    %275 = vector.broadcast %274 : vector<1x1xf32> to vector<1x128xf32>
    %276 = arith.addf %273, %275 : vector<1x128xf32>
    %c0_136 = arith.constant 0 : index
    %c0_137 = arith.constant 0 : index
    %c0_138 = arith.constant 0 : index
    %277 = vector.load %arg15[%c0_136, %c0_137, %c0_138] : memref<1x1x128xf32, #tpu.memory_space<vmem>>, vector<1x1x128xf32>
    %278 = vector.shape_cast %277 : vector<1x1x128xf32> to vector<1x128xf32>
    %279 = vector.shape_cast %276 : vector<1x128xf32> to vector<1x1x128xf32>
    tpu.vector_store %arg15[%c0_136, %c0_137, %c0_138], %279 {strides = array<i32>} : memref<1x1x128xf32, #tpu.memory_space<vmem>>, vector<1x1x128xf32>,
    return
  }
  func.func @transform_0(%arg0: i32) -> (i32, i32, i32) {
    %c0_i32 = arith.constant 0 : i32
    %c0_i32_0 = arith.constant 0 : i32
    %c0_i32_1 = arith.constant 0 : i32
    return %arg0, %c0_i32, %c0_i32_0 : i32, i32, i32
  }
  func.func @transform_1(%arg0: i32) -> (i32, i32, i32) {
    %c0_i32 = arith.constant 0 : i32
    %c0_i32_0 = arith.constant 0 : i32
    %c0_i32_1 = arith.constant 0 : i32
    return %arg0, %c0_i32, %c0_i32_0 : i32, i32, i32
  }
  func.func @transform_2(%arg0: i32) -> (i32, i32, i32) {
    %c0_i32 = arith.constant 0 : i32
    %c0_i32_0 = arith.constant 0 : i32
    %c0_i32_1 = arith.constant 0 : i32
    return %arg0, %c0_i32, %c0_i32_0 : i32, i32, i32
  }
  func.func @transform_3(%arg0: i32) -> (i32, i32, i32) {
    %c0_i32 = arith.constant 0 : i32
    %c0_i32_0 = arith.constant 0 : i32
    %c0_i32_1 = arith.constant 0 : i32
    return %arg0, %c0_i32, %c0_i32_0 : i32, i32, i32
  }
  func.func @transform_4(%arg0: i32) -> (i32, i32) {
    %c0_i32 = arith.constant 0 : i32
    %c0_i32_0 = arith.constant 0 : i32
    %c0_i32_1 = arith.constant 0 : i32
    return %c0_i32, %c0_i32_0 : i32, i32
  }
  func.func @transform_5(%arg0: i32) -> (i32, i32) {
    %c0_i32 = arith.constant 0 : i32
    %c0_i32_0 = arith.constant 0 : i32
    %c0_i32_1 = arith.constant 0 : i32
    return %c0_i32, %c0_i32_0 : i32, i32
  }
  func.func @transform_6(%arg0: i32) -> (i32, i32) {
    %c0_i32 = arith.constant 0 : i32
    %c0_i32_0 = arith.constant 0 : i32
    %c0_i32_1 = arith.constant 0 : i32
    return %c0_i32, %c0_i32_0 : i32, i32
  }
  func.func @transform_7(%arg0: i32) -> (i32, i32, i32) {
    %c0_i32 = arith.constant 0 : i32
    %c0_i32_0 = arith.constant 0 : i32
    %c0_i32_1 = arith.constant 0 : i32
    %c0_i32_2 = arith.constant 0 : i32
    return %c0_i32, %c0_i32_0, %c0_i32_1 : i32, i32, i32
  }
  func.func @transform_8(%arg0: i32) -> (i32, i32, i32) {
    %c0_i32 = arith.constant 0 : i32
    %c0_i32_0 = arith.constant 0 : i32
    %c0_i32_1 = arith.constant 0 : i32
    %c0_i32_2 = arith.constant 0 : i32
    return %c0_i32, %c0_i32_0, %c0_i32_1 : i32, i32, i32
  }
  func.func @transform_9(%arg0: i32) -> (i32, i32, i32) {
    %c0_i32 = arith.constant 0 : i32
    %c0_i32_0 = arith.constant 0 : i32
    %c0_i32_1 = arith.constant 0 : i32
    %c0_i32_2 = arith.constant 0 : i32
    return %c0_i32, %c0_i32_0, %c0_i32_1 : i32, i32, i32
  }
  func.func @transform_10(%arg0: i32) -> (i32, i32, i32) {
    %c0_i32 = arith.constant 0 : i32
    %c0_i32_0 = arith.constant 0 : i32
    %c0_i32_1 = arith.constant 0 : i32
    %c0_i32_2 = arith.constant 0 : i32
    return %c0_i32, %c0_i32_0, %c0_i32_1 : i32, i32, i32
  }
  func.func @transform_11(%arg0: i32) -> (i32, i32, i32) {
    %c0_i32 = arith.constant 0 : i32
    %c0_i32_0 = arith.constant 0 : i32
    %c0_i32_1 = arith.constant 0 : i32
    %c0_i32_2 = arith.constant 0 : i32
    return %c0_i32, %c0_i32_0, %c0_i32_1 : i32, i32, i32
  }
  func.func @transform_12(%arg0: i32) -> (i32, i32) {
    %c0_i32 = arith.constant 0 : i32
    %c0_i32_0 = arith.constant 0 : i32
    %c0_i32_1 = arith.constant 0 : i32
    return %c0_i32, %c0_i32_0 : i32, i32
  }
  func.func @transform_13(%arg0: i32) -> (i32, i32) {
    %c0_i32 = arith.constant 0 : i32
    %c0_i32_0 = arith.constant 0 : i32
    %c0_i32_1 = arith.constant 0 : i32
    return %c0_i32, %c0_i32_0 : i32, i32
  }
  func.func @transform_14(%arg0: i32) -> (i32, i32, i32) {
    %c0_i32 = arith.constant 0 : i32
    %c0_i32_0 = arith.constant 0 : i32
    %c0_i32_1 = arith.constant 0 : i32
    return %arg0, %c0_i32, %c0_i32_0 : i32, i32, i32
  }
}

</mosaic_0001>

<llo_original>
// kernel: local_point_decoder.1
$region0: #{local_point_decoder.1}
  #allocation0 [shape = 'u32[]', space=smem, size = 0x4, offset = 0x4, fixed_abs, tag = 'smem constant byte address 0x4 - core index']
  #allocation1 [shape = 'u32[144,128]{1,0:T(1,128)}', space=vmem, size = 0x12000, scoped, tag = 'internal scratch']
  #allocation2 [shape = 'bf16[32,128]{1,0:T(8,128)(2,1)}', space=vmem, size = 0x2000, scoped, tag = 'scratch operand']
  #allocation3 [shape = 'f32[1,1]{1,0:T(1,128)S(1)}', space=vmem, size = 0x200, scoped, tag = 'scoped memory for local_point_decoder.1']
  %s0 = inlined_call_operand.vmem [shape: f32[4,64,3], index: 0, kind: input, shape index: {}]
  %s1 = inlined_call_operand.vmem [shape: f32[2,3,128], index: 1, kind: input, shape index: {}]
  %s2 = inlined_call_operand.vmem [shape: f32[4,3,128], index: 2, kind: input, shape index: {}]
  %s3 = inlined_call_operand.vmem [shape: bf16[4,33,128], index: 3, kind: input, shape index: {}]
  %s4 = inlined_call_operand.vmem [shape: f32[64,3], index: 4, kind: input, shape index: {}]
  %s5 = inlined_call_operand.vmem [shape: f32[64,1], index: 5, kind: input, shape index: {}]
  %s6 = inlined_call_operand.vmem [shape: bf16[320,32], index: 6, kind: input, shape index: {}]
  %s7 = inlined_call_operand.vmem [shape: f32[5,64,1], index: 7, kind: input, shape index: {}]
  %s8 = inlined_call_operand.vmem [shape: bf16[5,64,64], index: 8, kind: input, shape index: {}]
  %s9 = inlined_call_operand.vmem [shape: f32[5,64,1], index: 9, kind: input, shape index: {}]
  %s10 = inlined_call_operand.vmem [shape: bf16[5,64,64], index: 10, kind: input, shape index: {}]
  %s11 = inlined_call_operand.vmem [shape: f32[5,64,1], index: 11, kind: input, shape index: {}]
  %s12 = inlined_call_operand.vmem [shape: f32[64,1], index: 12, kind: input, shape index: {}]
  %s13 = inlined_call_operand.<no memory space> [shape: f32[1,1], index: 13, kind: input, shape index: {}]
  %s14 = inlined_call_operand.vmem [shape: f32[2,1,128], index: 14, kind: output, shape index: {}]
  %s15 = sld [smem:[#allocation0]]
  $region89: #{local_point_decoder.1} parent=0
    _
  %s17 = ssub.s32 1, %s15
  %s18 = scalar_select 0, %s17, %s15
  %v19 = vstv %s13
  %20 = vst [vmem:[#allocation3] sm:$0x1] %v19
  loop: start=0, step=1, limit=4
  $region2: #{local_point_decoder.1} parent=0 // loop_pre_header
    _
  $region3: #{local_point_decoder.1} parent=0 // loop_header
    %s22 = sphi 0, %s26
    %p23 = scmp.ge.s32.totalorder %s22, 4
    %s32 = sphi 0, %s34
    %s35 = sphi 0, %s32
    %s36 = sphi 0, %s35
    %s52 = sphi 0, %s36
    %s58 = sphi 0, %s60
    %s61 = sphi 0, %s58
    %s62 = sphi 0, %s61
    %s78 = sphi 0, %s62
    %s84 = sphi 0, %s86
    %s87 = sphi 0, %s84
    %s88 = sphi 0, %s87
    %s104 = sphi 0, %s88
    %s110 = sphi 0, %s112
    %s113 = sphi 0, %s110
    %s114 = sphi 0, %s113
    %s130 = sphi 0, %s114
    %s134 = sphi 0, %s134
    %s136 = sphi 0, %s134
    %s137 = sphi 0, %s136
    %s151 = sphi 0, %s137
    %s155 = sphi 0, %s155
    %s157 = sphi 0, %s155
    %s158 = sphi 0, %s157
    %s172 = sphi 0, %s158
    %s176 = sphi 0, %s176
    %s178 = sphi 0, %s176
    %s179 = sphi 0, %s178
    %s193 = sphi 0, %s179
    %s197 = sphi 0, %s197
    %s199 = sphi 0, %s197
    %s200 = sphi 0, %s199
    %s214 = sphi 0, %s200
    %s218 = sphi 0, %s218
    %s220 = sphi 0, %s218
    %s221 = sphi 0, %s220
    %s235 = sphi 0, %s221
    %s239 = sphi 0, %s239
    %s241 = sphi 0, %s239
    %s242 = sphi 0, %s241
    %s256 = sphi 0, %s242
    %s260 = sphi 0, %s260
    %s262 = sphi 0, %s260
    %s263 = sphi 0, %s262
    %s277 = sphi 0, %s263
    %s281 = sphi 0, %s281
    %s283 = sphi 0, %s281
    %s284 = sphi 0, %s283
    %s298 = sphi 0, %s284
    %s302 = sphi 0, %s302
    %s304 = sphi 0, %s302
    %s305 = sphi 0, %s304
    %s319 = sphi 0, %s305
    %s323 = sphi 0, %s323
    %s325 = sphi 0, %s323
    %s326 = sphi 0, %s325
    %s340 = sphi 0, %s326
    %s346 = sphi 0, %s348
    %s349 = sphi 0, %s346
    %s350 = sphi 0, %s349
    %s366 = sphi 0, %s350
  $region4: #{local_point_decoder.1} parent=0 // loop_header_branch
    %25 = sbr.rel (%p23) target = $region8
  $region5: #{local_point_decoder.1} parent=0 // loop_body
    %s27 = ssub.s32 %s22, 1
    %s28 = ssub.s32 %s22, 2
    %s29 = sadd.s32 %s22, 1
    %s30 = ssub.s32 %s22, %s29
    %p31 = scmp.eq.s32.totalorder %s30, 0
    %s33 = sadd.s32 %s32, 1
    %s34 = scalar_select %p31, %s32, %s33
    %p37 = pneg %p31
    %p38 = scmp.eq.s32.totalorder %s22, 1
    %p39 = por %p37, %p38
    %p40 = scmp.ne.s32.totalorder %s32, %s35
    %p41 = scmp.eq.s32.totalorder %s22, 0
    %p42 = por %p40, %p41
    %p43 = scmp.ne.s32.totalorder %s32, %s35
    %p44 = scmp.eq.s32.totalorder %s27, 1
    %p45 = por %p43, %p44
    %p46 = scmp.ne.s32.totalorder %s35, %s36
    %p47 = scmp.eq.s32.totalorder %s27, 0
    %p48 = por %p46, %p47
    %p49 = scmp.ne.s32.totalorder %s35, %s36
    %p50 = scmp.eq.s32.totalorder %s28, 1
    %p51 = por %p49, %p50
    %p53 = scmp.ne.s32.totalorder %s36, %s52
    %p54 = scmp.eq.s32.totalorder %s28, 0
    %p55 = por %p53, %p54
    %s56 = ssub.s32 %s22, %s29
    %p57 = scmp.eq.s32.totalorder %s56, 0
    %s59 = sadd.s32 %s58, 1
    %s60 = scalar_select %p57, %s58, %s59
    %p63 = pneg %p57
    %p64 = scmp.eq.s32.totalorder %s22, 1
    %p65 = por %p63, %p64
    %p66 = scmp.ne.s32.totalorder %s58, %s61
    %p67 = scmp.eq.s32.totalorder %s22, 0
    %p68 = por %p66, %p67
    %p69 = scmp.ne.s32.totalorder %s58, %s61
    %p70 = scmp.eq.s32.totalorder %s27, 1
    %p71 = por %p69, %p70
    %p72 = scmp.ne.s32.totalorder %s61, %s62
    %p73 = scmp.eq.s32.totalorder %s27, 0
    %p74 = por %p72, %p73
    %p75 = scmp.ne.s32.totalorder %s61, %s62
    %p76 = scmp.eq.s32.totalorder %s28, 1
    %p77 = por %p75, %p76
    %p79 = scmp.ne.s32.totalorder %s62, %s78
    %p80 = scmp.eq.s32.totalorder %s28, 0
    %p81 = por %p79, %p80
    %s82 = ssub.s32 %s22, %s29
    %p83 = scmp.eq.s32.totalorder %s82, 0
    %s85 = sadd.s32 %s84, 1
    %s86 = scalar_select %p83, %s84, %s85
    %p89 = pneg %p83
    %p90 = scmp.eq.s32.totalorder %s22, 1
    %p91 = por %p89, %p90
    %p92 = scmp.ne.s32.totalorder %s84, %s87
    %p93 = scmp.eq.s32.totalorder %s22, 0
    %p94 = por %p92, %p93
    %p95 = scmp.ne.s32.totalorder %s84, %s87
    %p96 = scmp.eq.s32.totalorder %s27, 1
    %p97 = por %p95, %p96
    %p98 = scmp.ne.s32.totalorder %s87, %s88
    %p99 = scmp.eq.s32.totalorder %s27, 0
    %p100 = por %p98, %p99
    %p101 = scmp.ne.s32.totalorder %s87, %s88
    %p102 = scmp.eq.s32.totalorder %s28, 1
    %p103 = por %p101, %p102
    %p105 = scmp.ne.s32.totalorder %s88, %s104
    %p106 = scmp.eq.s32.totalorder %s28, 0
    %p107 = por %p105, %p106
    %s108 = ssub.s32 %s22, %s29
    %p109 = scmp.eq.s32.totalorder %s108, 0
    %s111 = sadd.s32 %s110, 1
    %s112 = scalar_select %p109, %s110, %s111
    %p115 = pneg %p109
    %p116 = scmp.eq.s32.totalorder %s22, 1
    %p117 = por %p115, %p116
    %p118 = scmp.ne.s32.totalorder %s110, %s113
    %p119 = scmp.eq.s32.totalorder %s22, 0
    %p120 = por %p118, %p119
    %p121 = scmp.ne.s32.totalorder %s110, %s113
    %p122 = scmp.eq.s32.totalorder %s27, 1
    %p123 = por %p121, %p122
    %p124 = scmp.ne.s32.totalorder %s113, %s114
    %p125 = scmp.eq.s32.totalorder %s27, 0
    %p126 = por %p124, %p125
    %p127 = scmp.ne.s32.totalorder %s113, %s114
    %p128 = scmp.eq.s32.totalorder %s28, 1
    %p129 = por %p127, %p128
    %p131 = scmp.ne.s32.totalorder %s114, %s130
    %p132 = scmp.eq.s32.totalorder %s28, 0
    %p133 = por %p131, %p132
    %s135 = sadd.s32 %s134, 1
    %p138 = scmp.eq.s32.totalorder %s22, 1
    %p139 = scmp.ne.s32.totalorder %s134, %s136
    %p140 = scmp.eq.s32.totalorder %s22, 0
    %p141 = por %p139, %p140
    %p142 = scmp.ne.s32.totalorder %s134, %s136
    %p143 = scmp.eq.s32.totalorder %s27, 1
    %p144 = por %p142, %p143
    %p145 = scmp.ne.s32.totalorder %s136, %s137
    %p146 = scmp.eq.s32.totalorder %s27, 0
    %p147 = por %p145, %p146
    %p148 = scmp.ne.s32.totalorder %s136, %s137
    %p149 = scmp.eq.s32.totalorder %s28, 1
    %p150 = por %p148, %p149
    %p152 = scmp.ne.s32.totalorder %s137, %s151
    %p153 = scmp.eq.s32.totalorder %s28, 0
    %p154 = por %p152, %p153
    %s156 = sadd.s32 %s155, 1
    %p159 = scmp.eq.s32.totalorder %s22, 1
    %p160 = scmp.ne.s32.totalorder %s155, %s157
    %p161 = scmp.eq.s32.totalorder %s22, 0
    %p162 = por %p160, %p161
    %p163 = scmp.ne.s32.totalorder %s155, %s157
    %p164 = scmp.eq.s32.totalorder %s27, 1
    %p165 = por %p163, %p164
    %p166 = scmp.ne.s32.totalorder %s157, %s158
    %p167 = scmp.eq.s32.totalorder %s27, 0
    %p168 = por %p166, %p167
    %p169 = scmp.ne.s32.totalorder %s157, %s158
    %p170 = scmp.eq.s32.totalorder %s28, 1
    %p171 = por %p169, %p170
    %p173 = scmp.ne.s32.totalorder %s158, %s172
    %p174 = scmp.eq.s32.totalorder %s28, 0
    %p175 = por %p173, %p174
    %s177 = sadd.s32 %s176, 1
    %p180 = scmp.eq.s32.totalorder %s22, 1
    %p181 = scmp.ne.s32.totalorder %s176, %s178
    %p182 = scmp.eq.s32.totalorder %s22, 0
    %p183 = por %p181, %p182
    %p184 = scmp.ne.s32.totalorder %s176, %s178
    %p185 = scmp.eq.s32.totalorder %s27, 1
    %p186 = por %p184, %p185
    %p187 = scmp.ne.s32.totalorder %s178, %s179
    %p188 = scmp.eq.s32.totalorder %s27, 0
    %p189 = por %p187, %p188
    %p190 = scmp.ne.s32.totalorder %s178, %s179
    %p191 = scmp.eq.s32.totalorder %s28, 1
    %p192 = por %p190, %p191
    %p194 = scmp.ne.s32.totalorder %s179, %s193
    %p195 = scmp.eq.s32.totalorder %s28, 0
    %p196 = por %p194, %p195
    %s198 = sadd.s32 %s197, 1
    %p201 = scmp.eq.s32.totalorder %s22, 1
    %p202 = scmp.ne.s32.totalorder %s197, %s199
    %p203 = scmp.eq.s32.totalorder %s22, 0
    %p204 = por %p202, %p203
    %p205 = scmp.ne.s32.totalorder %s197, %s199
    %p206 = scmp.eq.s32.totalorder %s27, 1
    %p207 = por %p205, %p206
    %p208 = scmp.ne.s32.totalorder %s199, %s200
    %p209 = scmp.eq.s32.totalorder %s27, 0
    %p210 = por %p208, %p209
    %p211 = scmp.ne.s32.totalorder %s199, %s200
    %p212 = scmp.eq.s32.totalorder %s28, 1
    %p213 = por %p211, %p212
    %p215 = scmp.ne.s32.totalorder %s200, %s214
    %p216 = scmp.eq.s32.totalorder %s28, 0
    %p217 = por %p215, %p216
    %s219 = sadd.s32 %s218, 1
    %p222 = scmp.eq.s32.totalorder %s22, 1
    %p223 = scmp.ne.s32.totalorder %s218, %s220
    %p224 = scmp.eq.s32.totalorder %s22, 0
    %p225 = por %p223, %p224
    %p226 = scmp.ne.s32.totalorder %s218, %s220
    %p227 = scmp.eq.s32.totalorder %s27, 1
    %p228 = por %p226, %p227
    %p229 = scmp.ne.s32.totalorder %s220, %s221
    %p230 = scmp.eq.s32.totalorder %s27, 0
    %p231 = por %p229, %p230
    %p232 = scmp.ne.s32.totalorder %s220, %s221
    %p233 = scmp.eq.s32.totalorder %s28, 1
    %p234 = por %p232, %p233
    %p236 = scmp.ne.s32.totalorder %s221, %s235
    %p237 = scmp.eq.s32.totalorder %s28, 0
    %p238 = por %p236, %p237
    %s240 = sadd.s32 %s239, 1
    %p243 = scmp.eq.s32.totalorder %s22, 1
    %p244 = scmp.ne.s32.totalorder %s239, %s241
    %p245 = scmp.eq.s32.totalorder %s22, 0
    %p246 = por %p244, %p245
    %p247 = scmp.ne.s32.totalorder %s239, %s241
    %p248 = scmp.eq.s32.totalorder %s27, 1
    %p249 = por %p247, %p248
    %p250 = scmp.ne.s32.totalorder %s241, %s242
    %p251 = scmp.eq.s32.totalorder %s27, 0
    %p252 = por %p250, %p251
    %p253 = scmp.ne.s32.totalorder %s241, %s242
    %p254 = scmp.eq.s32.totalorder %s28, 1
    %p255 = por %p253, %p254
    %p257 = scmp.ne.s32.totalorder %s242, %s256
    %p258 = scmp.eq.s32.totalorder %s28, 0
    %p259 = por %p257, %p258
    %s261 = sadd.s32 %s260, 1
    %p264 = scmp.eq.s32.totalorder %s22, 1
    %p265 = scmp.ne.s32.totalorder %s260, %s262
    %p266 = scmp.eq.s32.totalorder %s22, 0
    %p267 = por %p265, %p266
    %p268 = scmp.ne.s32.totalorder %s260, %s262
    %p269 = scmp.eq.s32.totalorder %s27, 1
    %p270 = por %p268, %p269
    %p271 = scmp.ne.s32.totalorder %s262, %s263
    %p272 = scmp.eq.s32.totalorder %s27, 0
    %p273 = por %p271, %p272
    %p274 = scmp.ne.s32.totalorder %s262, %s263
    %p275 = scmp.eq.s32.totalorder %s28, 1
    %p276 = por %p274, %p275
    %p278 = scmp.ne.s32.totalorder %s263, %s277
    %p279 = scmp.eq.s32.totalorder %s28, 0
    %p280 = por %p278, %p279
    %s282 = sadd.s32 %s281, 1
    %p285 = scmp.eq.s32.totalorder %s22, 1
    %p286 = scmp.ne.s32.totalorder %s281, %s283
    %p287 = scmp.eq.s32.totalorder %s22, 0
    %p288 = por %p286, %p287
    %p289 = scmp.ne.s32.totalorder %s281, %s283
    %p290 = scmp.eq.s32.totalorder %s27, 1
    %p291 = por %p289, %p290
    %p292 = scmp.ne.s32.totalorder %s283, %s284
    %p293 = scmp.eq.s32.totalorder %s27, 0
    %p294 = por %p292, %p293
    %p295 = scmp.ne.s32.totalorder %s283, %s284
    %p296 = scmp.eq.s32.totalorder %s28, 1
    %p297 = por %p295, %p296
    %p299 = scmp.ne.s32.totalorder %s284, %s298
    %p300 = scmp.eq.s32.totalorder %s28, 0
    %p301 = por %p299, %p300
    %s303 = sadd.s32 %s302, 1
    %p306 = scmp.eq.s32.totalorder %s22, 1
    %p307 = scmp.ne.s32.totalorder %s302, %s304
    %p308 = scmp.eq.s32.totalorder %s22, 0
    %p309 = por %p307, %p308
    %p310 = scmp.ne.s32.totalorder %s302, %s304
    %p311 = scmp.eq.s32.totalorder %s27, 1
    %p312 = por %p310, %p311
    %p313 = scmp.ne.s32.totalorder %s304, %s305
    %p314 = scmp.eq.s32.totalorder %s27, 0
    %p315 = por %p313, %p314
    %p316 = scmp.ne.s32.totalorder %s304, %s305
    %p317 = scmp.eq.s32.totalorder %s28, 1
    %p318 = por %p316, %p317
    %p320 = scmp.ne.s32.totalorder %s305, %s319
    %p321 = scmp.eq.s32.totalorder %s28, 0
    %p322 = por %p320, %p321
    %s324 = sadd.s32 %s323, 1
    %p327 = scmp.eq.s32.totalorder %s22, 1
    %p328 = scmp.ne.s32.totalorder %s323, %s325
    %p329 = scmp.eq.s32.totalorder %s22, 0
    %p330 = por %p328, %p329
    %p331 = scmp.ne.s32.totalorder %s323, %s325
    %p332 = scmp.eq.s32.totalorder %s27, 1
    %p333 = por %p331, %p332
    %p334 = scmp.ne.s32.totalorder %s325, %s326
    %p335 = scmp.eq.s32.totalorder %s27, 0
    %p336 = por %p334, %p335
    %p337 = scmp.ne.s32.totalorder %s325, %s326
    %p338 = scmp.eq.s32.totalorder %s28, 1
    %p339 = por %p337, %p338
    %p341 = scmp.ne.s32.totalorder %s326, %s340
    %p342 = scmp.eq.s32.totalorder %s28, 0
    %p343 = por %p341, %p342
    %s344 = ssub.s32 %s22, %s29
    %p345 = scmp.eq.s32.totalorder %s344, 0
    %s347 = sadd.s32 %s346, 1
    %s348 = scalar_select %p345, %s346, %s347
    %p351 = pneg %p345
    %p352 = scmp.eq.s32.totalorder %s22, 1
    %p353 = por %p351, %p352
    %p354 = scmp.ne.s32.totalorder %s346, %s349
    %p355 = scmp.eq.s32.totalorder %s22, 0
    %p356 = por %p354, %p355
    %p357 = scmp.ne.s32.totalorder %s346, %s349
    %p358 = scmp.eq.s32.totalorder %s27, 1
    %p359 = por %p357, %p358
    %p360 = scmp.ne.s32.totalorder %s349, %s350
    %p361 = scmp.eq.s32.totalorder %s27, 0
    %p362 = por %p360, %p361
    %p363 = scmp.ne.s32.totalorder %s349, %s350
    %p364 = scmp.eq.s32.totalorder %s28, 1
    %p365 = por %p363, %p364
    %p367 = scmp.ne.s32.totalorder %s350, %s366
    %p368 = scmp.eq.s32.totalorder %s28, 0
    %p369 = por %p367, %p368
    %p370 = scmp.le.s32.totalorder 1, %s22
    %p371 = scmp.lt.s32.totalorder %s22, 3
    %p372 = pnand %p370, %p371
    %p373 = pneg %p372
    // Predicated region
    $region9: #{local_point_decoder.1} parent=5 // pred_check
      _
    $region10: #{local_point_decoder.1} parent=5 // pred_check_branch
      %375 = sbr.rel (%p372) target = $region12
    $region11: #{local_point_decoder.1} parent=5 // pred_region
      %s376 = ssub.s32 %s22, 1
      // Predicated region
      $region13: #{local_point_decoder.1} parent=11 // pred_check
        %p377 = pneg %p147
      $region14: #{local_point_decoder.1} parent=11 // pred_check_branch
        %379 = sbr.rel (%p377) target = $region16
      $region15: #{local_point_decoder.1} parent=11 // pred_region
        _
      $region16: #{local_point_decoder.1} parent=11 // pred_fallthru
        _
      // Predicated region
      $region17: #{local_point_decoder.1} parent=11 // pred_check
        %p380 = pneg %p168
      $region18: #{local_point_decoder.1} parent=11 // pred_check_branch
        %382 = sbr.rel (%p380) target = $region20
      $region19: #{local_point_decoder.1} parent=11 // pred_region
        _
      $region20: #{local_point_decoder.1} parent=11 // pred_fallthru
        _
      // Predicated region
      $region21: #{local_point_decoder.1} parent=11 // pred_check
        %p383 = pneg %p189
      $region22: #{local_point_decoder.1} parent=11 // pred_check_branch
        %385 = sbr.rel (%p383) target = $region24
      $region23: #{local_point_decoder.1} parent=11 // pred_region
        _
      $region24: #{local_point_decoder.1} parent=11 // pred_fallthru
        _
      // Predicated region
      $region25: #{local_point_decoder.1} parent=11 // pred_check
        %p386 = pneg %p210
      $region26: #{local_point_decoder.1} parent=11 // pred_check_branch
        %388 = sbr.rel (%p386) target = $region28
      $region27: #{local_point_decoder.1} parent=11 // pred_region
        _
      $region28: #{local_point_decoder.1} parent=11 // pred_fallthru
        _
      // Predicated region
      $region29: #{local_point_decoder.1} parent=11 // pred_check
        %p389 = pneg %p231
      $region30: #{local_point_decoder.1} parent=11 // pred_check_branch
        %391 = sbr.rel (%p389) target = $region32
      $region31: #{local_point_decoder.1} parent=11 // pred_region
        _
      $region32: #{local_point_decoder.1} parent=11 // pred_fallthru
        _
      // Predicated region
      $region33: #{local_point_decoder.1} parent=11 // pred_check
        %p392 = pneg %p252
      $region34: #{local_point_decoder.1} parent=11 // pred_check_branch
        %394 = sbr.rel (%p392) target = $region36
      $region35: #{local_point_decoder.1} parent=11 // pred_region
        _
      $region36: #{local_point_decoder.1} parent=11 // pred_fallthru
        _
      // Predicated region
      $region37: #{local_point_decoder.1} parent=11 // pred_check
        %p395 = pneg %p273
      $region38: #{local_point_decoder.1} parent=11 // pred_check_branch
        %397 = sbr.rel (%p395) target = $region40
      $region39: #{local_point_decoder.1} parent=11 // pred_region
        _
      $region40: #{local_point_decoder.1} parent=11 // pred_fallthru
        _
      // Predicated region
      $region41: #{local_point_decoder.1} parent=11 // pred_check
        %p398 = pneg %p294
      $region42: #{local_point_decoder.1} parent=11 // pred_check_branch
        %400 = sbr.rel (%p398) target = $region44
      $region43: #{local_point_decoder.1} parent=11 // pred_region
        _
      $region44: #{local_point_decoder.1} parent=11 // pred_fallthru
        _
      // Predicated region
      $region45: #{local_point_decoder.1} parent=11 // pred_check
        %p401 = pneg %p315
      $region46: #{local_point_decoder.1} parent=11 // pred_check_branch
        %403 = sbr.rel (%p401) target = $region48
      $region47: #{local_point_decoder.1} parent=11 // pred_region
        _
      $region48: #{local_point_decoder.1} parent=11 // pred_fallthru
        _
      // Predicated region
      $region49: #{local_point_decoder.1} parent=11 // pred_check
        %p404 = pneg %p336
      $region50: #{local_point_decoder.1} parent=11 // pred_check_branch
        %406 = sbr.rel (%p404) target = $region52
      $region51: #{local_point_decoder.1} parent=11 // pred_region
        _
      $region52: #{local_point_decoder.1} parent=11 // pred_fallthru
        _
    $region12: #{local_point_decoder.1} parent=5 // pred_fallthru
      _
    %p407 = scmp.lt.s32.totalorder %s22, 2
    // Predicated region
    $region53: #{local_point_decoder.1} parent=5 // pred_check
      %p408 = pneg %p407
    $region54: #{local_point_decoder.1} parent=5 // pred_check_branch
      %410 = sbr.rel (%p408) target = $region56
    $region55: #{local_point_decoder.1} parent=5 // pred_region
      // Predicated region
      $region57: #{local_point_decoder.1} parent=55 // pred_check
        %p411 = pneg %p42
      $region58: #{local_point_decoder.1} parent=55 // pred_check_branch
        %413 = sbr.rel (%p411) target = $region60
      $region59: #{local_point_decoder.1} parent=55 // pred_region
        %s414 = smul.u32 2, %s22
        %p415 = scmp.lt.s32.totalorder %s414, 3
        %s416 = scalar_select %p415, %s414, 3
        %s417 = smul.addr %s416, 8
        %s418 = smul.addr %s417, 8
        %s419 = scalar_lea.vmem %s0, %s418
        %s420 = smul.u32 2, %s22
      $region60: #{local_point_decoder.1} parent=55 // pred_fallthru
        _
      // Predicated region
      $region61: #{local_point_decoder.1} parent=55 // pred_check
        %p421 = pneg %p68
      $region62: #{local_point_decoder.1} parent=55 // pred_check_branch
        %423 = sbr.rel (%p421) target = $region64
      $region63: #{local_point_decoder.1} parent=55 // pred_region
        %p424 = scmp.lt.s32.totalorder %s22, 1
        %s425 = scalar_select %p424, %s22, 1
        %s426 = smul.addr %s425, 4
        %s427 = scalar_lea.vmem %s1, %s426
      $region64: #{local_point_decoder.1} parent=55 // pred_fallthru
        _
      // Predicated region
      $region65: #{local_point_decoder.1} parent=55 // pred_check
        %p428 = pneg %p94
      $region66: #{local_point_decoder.1} parent=55 // pred_check_branch
        %430 = sbr.rel (%p428) target = $region68
      $region67: #{local_point_decoder.1} parent=55 // pred_region
        %s431 = smul.u32 2, %s22
        %p432 = scmp.lt.s32.totalorder %s431, 3
        %s433 = scalar_select %p432, %s431, 3
        %s434 = smul.addr %s433, 4
        %s435 = scalar_lea.vmem %s2, %s434
        %s436 = smul.u32 2, %s22
      $region68: #{local_point_decoder.1} parent=55 // pred_fallthru
        _
      // Predicated region
      $region69: #{local_point_decoder.1} parent=55 // pred_check
        %p437 = pneg %p120
      $region70: #{local_point_decoder.1} parent=55 // pred_check_branch
        %439 = sbr.rel (%p437) target = $region72
      $region71: #{local_point_decoder.1} parent=55 // pred_region
        %s440 = smul.u32 2, %s22
        %p441 = scmp.lt.s32.totalorder %s440, 3
        %s442 = scalar_select %p441, %s440, 3
        %s443 = smul.addr %s442, 5
        %s444 = smul.addr %s443, 4
        %s445 = scalar_lea.vmem %s3, %s444
        %s446 = smul.u32 2, %s22
      $region72: #{local_point_decoder.1} parent=55 // pred_fallthru
        _
    $region56: #{local_point_decoder.1} parent=5 // pred_fallthru
      _
    %p447 = scmp.le.s32.totalorder 1, %s22
    %p448 = scmp.lt.s32.totalorder %s22, 3
    %p449 = pnand %p447, %p448
    %p450 = pneg %p449
    // Predicated region
    $region73: #{local_point_decoder.1} parent=5 // pred_check
      _
    $region74: #{local_point_decoder.1} parent=5 // pred_check_branch
      %452 = sbr.rel (%p449) target = $region76
    $region75: #{local_point_decoder.1} parent=5 // pred_region
      %s453 = ssub.s32 %s22, 1
      %s454 = smul.u32 2, %s27
      %p455 = scmp.lt.s32.totalorder %s454, 3
      %s456 = scalar_select %p455, %s454, 3
      %s457 = smul.addr %s456, 8
      %s458 = smul.addr %s457, 8
      %s459 = scalar_lea.vmem %s0, %s458
      %p460 = pneg %p48
      %p461 = pneg %p45
      %p462 = scmp.lt.s32.totalorder %s27, 1
      %s463 = scalar_select %p462, %s27, 1
      %s464 = smul.addr %s463, 4
      %s465 = scalar_lea.vmem %s1, %s464
      %p466 = pneg %p74
      %p467 = pneg %p71
      %s468 = smul.u32 2, %s27
      %p469 = scmp.lt.s32.totalorder %s468, 3
      %s470 = scalar_select %p469, %s468, 3
      %s471 = smul.addr %s470, 4
      %s472 = scalar_lea.vmem %s2, %s471
      %p473 = pneg %p100
      %p474 = pneg %p97
      %s475 = smul.u32 2, %s27
      %p476 = scmp.lt.s32.totalorder %s475, 3
      %s477 = scalar_select %p476, %s475, 3
      %s478 = smul.addr %s477, 5
      %s479 = smul.addr %s478, 4
      %s480 = scalar_lea.vmem %s3, %s479
      %p481 = pneg %p126
      %p482 = pneg %p123
      %p483 = pneg %p147
      %p484 = pneg %p144
      %p485 = pneg %p168
      %p486 = pneg %p165
      %p487 = pneg %p189
      %p488 = pneg %p186
      %p489 = pneg %p210
      %p490 = pneg %p207
      %p491 = pneg %p231
      %p492 = pneg %p228
      %p493 = pneg %p252
      %p494 = pneg %p249
      %p495 = pneg %p273
      %p496 = pneg %p270
      %p497 = pneg %p294
      %p498 = pneg %p291
      %p499 = pneg %p315
      %p500 = pneg %p312
      %p501 = pneg %p336
      %p502 = pneg %p333
      %p503 = pneg %p362
      %p504 = pneg %p359
      %p505 = scmp.lt.s32.totalorder %s27, 1
      %s506 = scalar_select %p505, %s27, 1
      %s507 = scalar_lea.vmem %s14, %s506
      %s508 = smul.u32 2, %s27
      %p509 = scmp.lt.s32.totalorder %s508, 3
      %s510 = scalar_select %p509, %s508, 3
      %s511 = smul.addr %s510, 8
      %s512 = smul.addr %s511, 8
      %s513 = scalar_lea.vmem %s0, %s512
      %s514 = smul.u32 2, %s27
      %p515 = scmp.lt.s32.totalorder %s27, 1
      %s516 = scalar_select %p515, %s27, 1
      %s517 = smul.addr %s516, 4
      %s518 = scalar_lea.vmem %s1, %s517
      %s519 = smul.u32 2, %s27
      %p520 = scmp.lt.s32.totalorder %s519, 3
      %s521 = scalar_select %p520, %s519, 3
      %s522 = smul.addr %s521, 4
      %s523 = scalar_lea.vmem %s2, %s522
      %s524 = smul.u32 2, %s27
      %s525 = smul.u32 2, %s27
      %p526 = scmp.lt.s32.totalorder %s525, 3
      %s527 = scalar_select %p526, %s525, 3
      %s528 = smul.addr %s527, 5
      %s529 = smul.addr %s528, 4
      %s530 = scalar_lea.vmem %s3, %s529
      %s531 = smul.u32 2, %s27
      %p532 = scmp.lt.s32.totalorder %s27, 1
      %s533 = scalar_select %p532, %s27, 1
      %s534 = scalar_lea.vmem %s14, %s533
      %v536 = vld [vmem:[%s513] sm:$0xff]
      %v537 = vld [vmem:[%s513 + $0x8] sm:$0xff]
      %v538 = vld [vmem:[%s513 + $0x10] sm:$0xff]
      %v539 = vld [vmem:[%s513 + $0x18] sm:$0xff]
      %v540 = vld [vmem:[%s513 + $0x20] sm:$0xff]
      %v541 = vld [vmem:[%s513 + $0x28] sm:$0xff]
      %v542 = vld [vmem:[%s513 + $0x30] sm:$0xff]
      %v543 = vld [vmem:[%s513 + $0x38] sm:$0xff]
      %v544 = vld [vmem:[%s523] sm:$0x7]
      %v545 = vmul.f32 %v536, %v536
      %v546 = vmul.f32 %v537, %v537
      %v547 = vmul.f32 %v538, %v538
      %v548 = vmul.f32 %v539, %v539
      %v549 = vmul.f32 %v540, %v540
      %v550 = vmul.f32 %v541, %v541
      %v551 = vmul.f32 %v542, %v542
      %v552 = vmul.f32 %v543, %v543
      %561 = vrot.lane.b32.xlu0 %v545, 127
      %v562 = vpop.permute.xlu0 %561
      %563 = vrot.lane.b32.xlu0 %v546, 127
      %v564 = vpop.permute.xlu0 %563
      %565 = vrot.lane.b32.xlu0 %v547, 127
      %v566 = vpop.permute.xlu0 %565
      %567 = vrot.lane.b32.xlu0 %v548, 127
      %v568 = vpop.permute.xlu0 %567
      %569 = vrot.lane.b32.xlu0 %v549, 127
      %v570 = vpop.permute.xlu0 %569
      %571 = vrot.lane.b32.xlu0 %v550, 127
      %v572 = vpop.permute.xlu0 %571
      %573 = vrot.lane.b32.xlu0 %v551, 127
      %v574 = vpop.permute.xlu0 %573
      %575 = vrot.lane.b32.xlu0 %v552, 127
      %v576 = vpop.permute.xlu0 %575
      %v585 = vadd.f32 %v545, %v562
      %v586 = vadd.f32 %v546, %v564
      %v587 = vadd.f32 %v547, %v566
      %v588 = vadd.f32 %v548, %v568
      %v589 = vadd.f32 %v549, %v570
      %v590 = vadd.f32 %v550, %v572
      %v591 = vadd.f32 %v551, %v574
      %v592 = vadd.f32 %v552, %v576
      %593 = vrot.lane.b32.xlu0 %v545, 126
      %v594 = vpop.permute.xlu0 %593
      %595 = vrot.lane.b32.xlu0 %v546, 126
      %v596 = vpop.permute.xlu0 %595
      %597 = vrot.lane.b32.xlu0 %v547, 126
      %v598 = vpop.permute.xlu0 %597
      %599 = vrot.lane.b32.xlu0 %v548, 126
      %v600 = vpop.permute.xlu0 %599
      %601 = vrot.lane.b32.xlu0 %v549, 126
      %v602 = vpop.permute.xlu0 %601
      %603 = vrot.lane.b32.xlu0 %v550, 126
      %v604 = vpop.permute.xlu0 %603
      %605 = vrot.lane.b32.xlu0 %v551, 126
      %v606 = vpop.permute.xlu0 %605
      %607 = vrot.lane.b32.xlu0 %v552, 126
      %v608 = vpop.permute.xlu0 %607
      %v617 = vadd.f32 %v585, %v594
      %v618 = vadd.f32 %v586, %v596
      %v619 = vadd.f32 %v587, %v598
      %v620 = vadd.f32 %v588, %v600
      %v621 = vadd.f32 %v589, %v602
      %v622 = vadd.f32 %v590, %v604
      %v623 = vadd.f32 %v591, %v606
      %v624 = vadd.f32 %v592, %v608
      %v625 = vmul.f32 %v544, %v544
      %v627 = vrot.slane %v625, 1
      %v629 = vadd.f32 %v625, %v627
      %v630 = vrot.slane %v625, 2
      %v632 = vadd.f32 %v629, %v630
      %634 = vset.pattern.permute.xlu0 0
      %635 = vperm.xlu0 %634, %v536
      %v636 = vpop.permute.xlu0 %635
      %639 = vset.pattern.permute.xlu0 0
      %640 = vperm.xlu0 %639, %v537
      %v641 = vpop.permute.xlu0 %640
      %644 = vset.pattern.permute.xlu0 0
      %645 = vperm.xlu0 %644, %v538
      %v646 = vpop.permute.xlu0 %645
      %649 = vset.pattern.permute.xlu0 0
      %650 = vperm.xlu0 %649, %v539
      %v651 = vpop.permute.xlu0 %650
      %654 = vset.pattern.permute.xlu0 0
      %655 = vperm.xlu0 %654, %v540
      %v656 = vpop.permute.xlu0 %655
      %659 = vset.pattern.permute.xlu0 0
      %660 = vperm.xlu0 %659, %v541
      %v661 = vpop.permute.xlu0 %660
      %664 = vset.pattern.permute.xlu0 0
      %665 = vperm.xlu0 %664, %v542
      %v666 = vpop.permute.xlu0 %665
      %669 = vset.pattern.permute.xlu0 0
      %670 = vperm.xlu0 %669, %v543
      %v671 = vpop.permute.xlu0 %670
      %v673 = vlaneseq
      %v674 = vshrl.u32 %v673, 7
      %v675 = vsub.s32 0, %v674
      %v676 = vrot.slane %v544, %v675
      %v677 = vmul.f32 %v636, %v676
      %v678 = vmul.f32 %v641, %v676
      %v679 = vmul.f32 %v646, %v676
      %v680 = vmul.f32 %v651, %v676
      %v681 = vmul.f32 %v656, %v676
      %v682 = vmul.f32 %v661, %v676
      %v683 = vmul.f32 %v666, %v676
      %v684 = vmul.f32 %v671, %v676
      %685 = vset.pattern.permute.xlu0 1
      %686 = vperm.xlu0 %685, %v536
      %v687 = vpop.permute.xlu0 %686
      %689 = vset.pattern.permute.xlu0 1
      %690 = vperm.xlu0 %689, %v537
      %v691 = vpop.permute.xlu0 %690
      %693 = vset.pattern.permute.xlu0 1
      %694 = vperm.xlu0 %693, %v538
      %v695 = vpop.permute.xlu0 %694
      %697 = vset.pattern.permute.xlu0 1
      %698 = vperm.xlu0 %697, %v539
      %v699 = vpop.permute.xlu0 %698
      %701 = vset.pattern.permute.xlu0 1
      %702 = vperm.xlu0 %701, %v540
      %v703 = vpop.permute.xlu0 %702
      %705 = vset.pattern.permute.xlu0 1
      %706 = vperm.xlu0 %705, %v541
      %v707 = vpop.permute.xlu0 %706
      %709 = vset.pattern.permute.xlu0 1
      %710 = vperm.xlu0 %709, %v542
      %v711 = vpop.permute.xlu0 %710
      %713 = vset.pattern.permute.xlu0 1
      %714 = vperm.xlu0 %713, %v543
      %v715 = vpop.permute.xlu0 %714
      %v717 = vlaneseq
      %v718 = vshrl.u32 %v717, 7
      %v719 = vsub.s32 1, %v718
      %v720 = vrot.slane %v544, %v719
      %v721 = vmul.f32 %v687, %v720
      %v722 = vmul.f32 %v691, %v720
      %v723 = vmul.f32 %v695, %v720
      %v724 = vmul.f32 %v699, %v720
      %v725 = vmul.f32 %v703, %v720
      %v726 = vmul.f32 %v707, %v720
      %v727 = vmul.f32 %v711, %v720
      %v728 = vmul.f32 %v715, %v720
      %v729 = vadd.f32 %v677, %v721
      %v730 = vadd.f32 %v678, %v722
      %v731 = vadd.f32 %v679, %v723
      %v732 = vadd.f32 %v680, %v724
      %v733 = vadd.f32 %v681, %v725
      %v734 = vadd.f32 %v682, %v726
      %v735 = vadd.f32 %v683, %v727
      %v736 = vadd.f32 %v684, %v728
      %737 = vset.pattern.permute.xlu0 2
      %738 = vperm.xlu0 %737, %v536
      %v739 = vpop.permute.xlu0 %738
      %741 = vset.pattern.permute.xlu0 2
      %742 = vperm.xlu0 %741, %v537
      %v743 = vpop.permute.xlu0 %742
      %745 = vset.pattern.permute.xlu0 2
      %746 = vperm.xlu0 %745, %v538
      %v747 = vpop.permute.xlu0 %746
      %749 = vset.pattern.permute.xlu0 2
      %750 = vperm.xlu0 %749, %v539
      %v751 = vpop.permute.xlu0 %750
      %753 = vset.pattern.permute.xlu0 2
      %754 = vperm.xlu0 %753, %v540
      %v755 = vpop.permute.xlu0 %754
      %757 = vset.pattern.permute.xlu0 2
      %758 = vperm.xlu0 %757, %v541
      %v759 = vpop.permute.xlu0 %758
      %761 = vset.pattern.permute.xlu0 2
      %762 = vperm.xlu0 %761, %v542
      %v763 = vpop.permute.xlu0 %762
      %765 = vset.pattern.permute.xlu0 2
      %766 = vperm.xlu0 %765, %v543
      %v767 = vpop.permute.xlu0 %766
      %v769 = vlaneseq
      %v770 = vshrl.u32 %v769, 7
      %v771 = vsub.s32 2, %v770
      %v772 = vrot.slane %v544, %v771
      %v773 = vmul.f32 %v739, %v772
      %v774 = vmul.f32 %v743, %v772
      %v775 = vmul.f32 %v747, %v772
      %v776 = vmul.f32 %v751, %v772
      %v777 = vmul.f32 %v755, %v772
      %v778 = vmul.f32 %v759, %v772
      %v779 = vmul.f32 %v763, %v772
      %v780 = vmul.f32 %v767, %v772
      %v781 = vadd.f32 %v729, %v773
      %v782 = vadd.f32 %v730, %v774
      %v783 = vadd.f32 %v731, %v775
      %v784 = vadd.f32 %v732, %v776
      %v785 = vadd.f32 %v733, %v777
      %v786 = vadd.f32 %v734, %v778
      %v787 = vadd.f32 %v735, %v779
      %v788 = vadd.f32 %v736, %v780
      %v789 = vmul.f32 %v781, 2.0
      %v790 = vmul.f32 %v782, 2.0
      %v791 = vmul.f32 %v783, 2.0
      %v792 = vmul.f32 %v784, 2.0
      %v793 = vmul.f32 %v785, 2.0
      %v794 = vmul.f32 %v786, 2.0
      %v795 = vmul.f32 %v787, 2.0
      %v796 = vmul.f32 %v788, 2.0
      %798 = vset.pattern.permute.xlu0 0
      %799 = vperm.xlu0 %798, %v617
      %v800 = vpop.permute.xlu0 %799
      %803 = vset.pattern.permute.xlu0 0
      %804 = vperm.xlu0 %803, %v618
      %v805 = vpop.permute.xlu0 %804
      %808 = vset.pattern.permute.xlu0 0
      %809 = vperm.xlu0 %808, %v619
      %v810 = vpop.permute.xlu0 %809
      %813 = vset.pattern.permute.xlu0 0
      %814 = vperm.xlu0 %813, %v620
      %v815 = vpop.permute.xlu0 %814
      %818 = vset.pattern.permute.xlu0 0
      %819 = vperm.xlu0 %818, %v621
      %v820 = vpop.permute.xlu0 %819
      %823 = vset.pattern.permute.xlu0 0
      %824 = vperm.xlu0 %823, %v622
      %v825 = vpop.permute.xlu0 %824
      %828 = vset.pattern.permute.xlu0 0
      %829 = vperm.xlu0 %828, %v623
      %v830 = vpop.permute.xlu0 %829
      %833 = vset.pattern.permute.xlu0 0
      %834 = vperm.xlu0 %833, %v624
      %v835 = vpop.permute.xlu0 %834
      %v837 = vsub.f32 %v789, %v800
      %v838 = vsub.f32 %v790, %v805
      %v839 = vsub.f32 %v791, %v810
      %v840 = vsub.f32 %v792, %v815
      %v841 = vsub.f32 %v793, %v820
      %v842 = vsub.f32 %v794, %v825
      %v843 = vsub.f32 %v795, %v830
      %v844 = vsub.f32 %v796, %v835
      %v845 = vlaneseq
      %v846 = vshrl.u32 %v845, 7
      %v847 = vsub.s32 0, %v846
      %v848 = vrot.slane %v632, %v847
      %v849 = vsub.f32 %v837, %v848
      %v850 = vsub.f32 %v838, %v848
      %v851 = vsub.f32 %v839, %v848
      %v852 = vsub.f32 %v840, %v848
      %v853 = vsub.f32 %v841, %v848
      %v854 = vsub.f32 %v842, %v848
      %v855 = vsub.f32 %v843, %v848
      %v856 = vsub.f32 %v844, %v848
      %v857 = vmul.f32 %v849, 25.0
      %v858 = vmul.f32 %v850, 25.0
      %v859 = vmul.f32 %v851, 25.0
      %v860 = vmul.f32 %v852, 25.0
      %v861 = vmul.f32 %v853, 25.0
      %v862 = vmul.f32 %v854, 25.0
      %v863 = vmul.f32 %v855, 25.0
      %v864 = vmul.f32 %v856, 25.0
      %v865 = vmul.f32 %v857, 1.442695
      %v866 = vpow.pop %v865
      %v867 = vmul.f32 %v858, 1.442695
      %v868 = vpow.pop %v867
      %v869 = vmul.f32 %v859, 1.442695
      %v870 = vpow.pop %v869
      %v871 = vmul.f32 %v860, 1.442695
      %v872 = vpow.pop %v871
      %v873 = vmul.f32 %v861, 1.442695
      %v874 = vpow.pop %v873
      %v875 = vmul.f32 %v862, 1.442695
      %v876 = vpow.pop %v875
      %v877 = vmul.f32 %v863, 1.442695
      %v878 = vpow.pop %v877
      %v879 = vmul.f32 %v864, 1.442695
      %v880 = vpow.pop %v879
      %v881 = vld [vmem:[%s530] sm:$0xf]
      %v882 = vld [vmem:[%s530 + $0x4] sm:$0xf]
      %v883 = vld [vmem:[%s530 + $0x8] sm:$0xf]
      %v884 = vld [vmem:[%s530 + $0xc] sm:$0xf]
      %v885 = vld [vmem:[%s530 + $0x10] sm:$0x1]
      %v886 = vpack.c.bf16 %v868, %v866
      %v887 = vpack.c.bf16 %v872, %v870
      %v888 = vpack.c.bf16 %v876, %v874
      %v889 = vpack.c.bf16 %v880, %v878
      %v895 = vunpack.c.l.b16 %v881
      %v896 = vunpack.c.l.b16 %v882
      %v897 = vunpack.c.l.b16 %v883
      %v898 = vunpack.c.l.b16 %v884
      %v899 = vunpack.c.l.b16 %v885
      %v900 = vpack.c.b16 %v896, %v895
      %v901 = vpack.c.b16 %v898, %v897
      %v902 = vpack.c.b16 %v899, %v899
      %906 = vmatprep.subr.bf16.mxu0 0
      %907 = vmatpush1.bf16.xpose.msra.mxu0 0
      %908 = vmatprep.subr.bf16.mxu0 0
      %909 = vmatpush1.bf16.xpose.msra.mxu0 0
      %910 = vmatprep.subr.bf16.mxu0 0
      %911 = vmatpush1.bf16.xpose.msra.mxu0 0
      %912 = vmatprep.subr.bf16.mxu0 0
      %913 = vmatpush1.bf16.xpose.msra.mxu0 0
      %914 = vmatprep.subr.bf16.mxu0 0
      %915 = vmatpush1.bf16.xpose.msra.mxu0 %v889
      %916 = vmatprep.subr.bf16.mxu0 0
      %917 = vmatpush1.bf16.xpose.msra.mxu0 %v888
      %918 = vmatprep.subr.bf16.mxu0 0
      %919 = vmatpush1.bf16.xpose.msra.mxu0 %v887
      %920 = vmatprep.subr.bf16.mxu0 0
      %921 = vmatpush1.bf16.xpose.msra.mxu0 %v886
      %922 = vmatprep.subr.bf16.mxu0 0
      %923 = vmatpush2.bf16.xpose.msra.mxu0 0
      %924 = vmatprep.subr.bf16.mxu0 0
      %925 = vmatpush2.bf16.xpose.msra.mxu0 0
      %926 = vmatprep.subr.bf16.mxu0 0
      %927 = vmatpush2.bf16.xpose.msra.mxu0 0
      %928 = vmatprep.subr.bf16.mxu0 0
      %929 = vmatpush2.bf16.xpose.msra.mxu0 0
      %930 = vmatprep.subr.bf16.mxu0 0
      %931 = vmatpush2.bf16.xpose.msra.mxu0 0
      %932 = vmatprep.subr.bf16.mxu0 0
      %933 = vmatpush2.bf16.xpose.msra.mxu0 0
      %934 = vmatprep.subr.bf16.mxu0 0
      %935 = vmatpush2.bf16.xpose.msra.mxu0 0
      %936 = vmatprep.subr.bf16.mxu0 0
      %937 = vmatpush2.bf16.xpose.msra.mxu0 0
      %938 = vmatprep.mubr.bf16.mxu0 0
      %939 = vmatmul.mubr.bf16.gmra.mxu0 %v900
      %v940 = vpop.f32.mrf.mxu0
      %v941 = vadd.f32 0.0, %v940
      %v942 = vpop.f32.mrf.mxu0
      %v943 = vpop.f32.mrf.mxu0
      %v944 = vadd.f32 0.0, %v943
      %v945 = vpop.f32.mrf.mxu0
      %946 = vmatprep.mubr.bf16.mxu0 0
      %947 = vmatmul.mubr.bf16.gmra.mxu0 %v901
      %v948 = vpop.f32.mrf.mxu0
      %v949 = vadd.f32 0.0, %v948
      %v950 = vpop.f32.mrf.mxu0
      %v951 = vpop.f32.mrf.mxu0
      %v952 = vadd.f32 0.0, %v951
      %v953 = vpop.f32.mrf.mxu0
      %954 = vmatprep.mubr.bf16.mxu0 0
      %955 = vmatmul.mubr.bf16.gmra.mxu0 %v902
      %v956 = vpop.f32.mrf.mxu0
      %v957 = vadd.f32 0.0, %v956
      %v958 = vpop.f32.mrf.mxu0
      %v959 = vpop.f32.mrf.mxu0
      %v960 = vpop.f32.mrf.mxu0
      %961 = vdwg.mxu0
      %v962 = vmax.f32 %v957, 1e-30
      %v963 = vrcp.pop %v962
      %v964 = vlaneseq
      %v965 = vshrl.u32 %v964, 7
      %v966 = vsub.s32 0, %v965
      %v967 = vrot.slane %v963, %v966
      %v968 = vmul.f32 %v941, %v967
      %v969 = vmul.f32 %v944, %v967
      %v970 = vmul.f32 %v949, %v967
      %v971 = vmul.f32 %v952, %v967
      %v972 = vpack.c.bf16 %v969, %v968
      %v973 = vpack.c.bf16 %v971, %v970
      %v976 = vunpack.c.l.b16 %v972
      %v977 = vunpack.c.h.b16 %v972
      %v978 = vunpack.c.l.b16 %v973
      %v979 = vunpack.c.h.b16 %v973
      %v980 = vpack.c.b16 %v976, %v976
      %v981 = vpack.c.b16 %v977, %v977
      %v982 = vpack.c.b16 %v978, %v978
      %v983 = vpack.c.b16 %v979, %v979
      %vm988 = vcmask 519168
      %989 = vst.msk [vmem:[#allocation2] sm:$0xf] %vm988, %v980
      %990 = vst.msk [vmem:[#allocation2 + $0x4] sm:$0xf] %vm988, %v981
      %991 = vst.msk [vmem:[#allocation2 + $0x8] sm:$0xf] %vm988, %v982
      %992 = vst.msk [vmem:[#allocation2 + $0xc] sm:$0xf] %vm988, %v983
      %s993 = scalar_lea.vmem %s513, 64
      %v994 = vld [vmem:[%s993] sm:$0xff]
      %v995 = vld [vmem:[%s993 + $0x8] sm:$0xff]
      %v996 = vld [vmem:[%s993 + $0x10] sm:$0xff]
      %v997 = vld [vmem:[%s993 + $0x18] sm:$0xff]
      %v998 = vld [vmem:[%s993 + $0x20] sm:$0xff]
      %v999 = vld [vmem:[%s993 + $0x28] sm:$0xff]
      %v1000 = vld [vmem:[%s993 + $0x30] sm:$0xff]
      %v1001 = vld [vmem:[%s993 + $0x38] sm:$0xff]
      %s1002 = scalar_lea.vmem %s523, 4
      %v1003 = vld [vmem:[%s1002] sm:$0x7]
      %v1004 = vmul.f32 %v994, %v994
      %v1005 = vmul.f32 %v995, %v995
      %v1006 = vmul.f32 %v996, %v996
      %v1007 = vmul.f32 %v997, %v997
      %v1008 = vmul.f32 %v998, %v998
      %v1009 = vmul.f32 %v999, %v999
      %v1010 = vmul.f32 %v1000, %v1000
      %v1011 = vmul.f32 %v1001, %v1001
      %1020 = vrot.lane.b32.xlu0 %v1004, 127
      %v1021 = vpop.permute.xlu0 %1020
      %1022 = vrot.lane.b32.xlu0 %v1005, 127
      %v1023 = vpop.permute.xlu0 %1022
      %1024 = vrot.lane.b32.xlu0 %v1006, 127
      %v1025 = vpop.permute.xlu0 %1024
      %1026 = vrot.lane.b32.xlu0 %v1007, 127
      %v1027 = vpop.permute.xlu0 %1026
      %1028 = vrot.lane.b32.xlu0 %v1008, 127
      %v1029 = vpop.permute.xlu0 %1028
      %1030 = vrot.lane.b32.xlu0 %v1009, 127
      %v1031 = vpop.permute.xlu0 %1030
      %1032 = vrot.lane.b32.xlu0 %v1010, 127
      %v1033 = vpop.permute.xlu0 %1032
      %1034 = vrot.lane.b32.xlu0 %v1011, 127
      %v1035 = vpop.permute.xlu0 %1034
      %v1044 = vadd.f32 %v1004, %v1021
      %v1045 = vadd.f32 %v1005, %v1023
      %v1046 = vadd.f32 %v1006, %v1025
      %v1047 = vadd.f32 %v1007, %v1027
      %v1048 = vadd.f32 %v1008, %v1029
      %v1049 = vadd.f32 %v1009, %v1031
      %v1050 = vadd.f32 %v1010, %v1033
      %v1051 = vadd.f32 %v1011, %v1035
      %1052 = vrot.lane.b32.xlu0 %v1004, 126
      %v1053 = vpop.permute.xlu0 %1052
      %1054 = vrot.lane.b32.xlu0 %v1005, 126
      %v1055 = vpop.permute.xlu0 %1054
      %1056 = vrot.lane.b32.xlu0 %v1006, 126
      %v1057 = vpop.permute.xlu0 %1056
      %1058 = vrot.lane.b32.xlu0 %v1007, 126
      %v1059 = vpop.permute.xlu0 %1058
      %1060 = vrot.lane.b32.xlu0 %v1008, 126
      %v1061 = vpop.permute.xlu0 %1060
      %1062 = vrot.lane.b32.xlu0 %v1009, 126
      %v1063 = vpop.permute.xlu0 %1062
      %1064 = vrot.lane.b32.xlu0 %v1010, 126
      %v1065 = vpop.permute.xlu0 %1064
      %1066 = vrot.lane.b32.xlu0 %v1011, 126
      %v1067 = vpop.permute.xlu0 %1066
      %v1076 = vadd.f32 %v1044, %v1053
      %v1077 = vadd.f32 %v1045, %v1055
      %v1078 = vadd.f32 %v1046, %v1057
      %v1079 = vadd.f32 %v1047, %v1059
      %v1080 = vadd.f32 %v1048, %v1061
      %v1081 = vadd.f32 %v1049, %v1063
      %v1082 = vadd.f32 %v1050, %v1065
      %v1083 = vadd.f32 %v1051, %v1067
      %v1084 = vmul.f32 %v1003, %v1003
      %v1086 = vrot.slane %v1084, 1
      %v1088 = vadd.f32 %v1084, %v1086
      %v1089 = vrot.slane %v1084, 2
      %v1091 = vadd.f32 %v1088, %v1089
      %1093 = vset.pattern.permute.xlu0 0
      %1094 = vperm.xlu0 %1093, %v994
      %v1095 = vpop.permute.xlu0 %1094
      %1098 = vset.pattern.permute.xlu0 0
      %1099 = vperm.xlu0 %1098, %v995
      %v1100 = vpop.permute.xlu0 %1099
      %1103 = vset.pattern.permute.xlu0 0
      %1104 = vperm.xlu0 %1103, %v996
      %v1105 = vpop.permute.xlu0 %1104
      %1108 = vset.pattern.permute.xlu0 0
      %1109 = vperm.xlu0 %1108, %v997
      %v1110 = vpop.permute.xlu0 %1109
      %1113 = vset.pattern.permute.xlu0 0
      %1114 = vperm.xlu0 %1113, %v998
      %v1115 = vpop.permute.xlu0 %1114
      %1118 = vset.pattern.permute.xlu0 0
      %1119 = vperm.xlu0 %1118, %v999
      %v1120 = vpop.permute.xlu0 %1119
      %1123 = vset.pattern.permute.xlu0 0
      %1124 = vperm.xlu0 %1123, %v1000
      %v1125 = vpop.permute.xlu0 %1124
      %1128 = vset.pattern.permute.xlu0 0
      %1129 = vperm.xlu0 %1128, %v1001
      %v1130 = vpop.permute.xlu0 %1129
      %v1132 = vlaneseq
      %v1133 = vshrl.u32 %v1132, 7
      %v1134 = vsub.s32 0, %v1133
      %v1135 = vrot.slane %v1003, %v1134
      %v1136 = vmul.f32 %v1095, %v1135
      %v1137 = vmul.f32 %v1100, %v1135
      %v1138 = vmul.f32 %v1105, %v1135
      %v1139 = vmul.f32 %v1110, %v1135
      %v1140 = vmul.f32 %v1115, %v1135
      %v1141 = vmul.f32 %v1120, %v1135
      %v1142 = vmul.f32 %v1125, %v1135
      %v1143 = vmul.f32 %v1130, %v1135
      %1144 = vset.pattern.permute.xlu0 1
      %1145 = vperm.xlu0 %1144, %v994
      %v1146 = vpop.permute.xlu0 %1145
      %1148 = vset.pattern.permute.xlu0 1
      %1149 = vperm.xlu0 %1148, %v995
      %v1150 = vpop.permute.xlu0 %1149
      %1152 = vset.pattern.permute.xlu0 1
      %1153 = vperm.xlu0 %1152, %v996
      %v1154 = vpop.permute.xlu0 %1153
      %1156 = vset.pattern.permute.xlu0 1
      %1157 = vperm.xlu0 %1156, %v997
      %v1158 = vpop.permute.xlu0 %1157
      %1160 = vset.pattern.permute.xlu0 1
      %1161 = vperm.xlu0 %1160, %v998
      %v1162 = vpop.permute.xlu0 %1161
      %1164 = vset.pattern.permute.xlu0 1
      %1165 = vperm.xlu0 %1164, %v999
      %v1166 = vpop.permute.xlu0 %1165
      %1168 = vset.pattern.permute.xlu0 1
      %1169 = vperm.xlu0 %1168, %v1000
      %v1170 = vpop.permute.xlu0 %1169
      %1172 = vset.pattern.permute.xlu0 1
      %1173 = vperm.xlu0 %1172, %v1001
      %v1174 = vpop.permute.xlu0 %1173
      %v1176 = vlaneseq
      %v1177 = vshrl.u32 %v1176, 7
      %v1178 = vsub.s32 1, %v1177
      %v1179 = vrot.slane %v1003, %v1178
      %v1180 = vmul.f32 %v1146, %v1179
      %v1181 = vmul.f32 %v1150, %v1179
      %v1182 = vmul.f32 %v1154, %v1179
      %v1183 = vmul.f32 %v1158, %v1179
      %v1184 = vmul.f32 %v1162, %v1179
      %v1185 = vmul.f32 %v1166, %v1179
      %v1186 = vmul.f32 %v1170, %v1179
      %v1187 = vmul.f32 %v1174, %v1179
      %v1188 = vadd.f32 %v1136, %v1180
      %v1189 = vadd.f32 %v1137, %v1181
      %v1190 = vadd.f32 %v1138, %v1182
      %v1191 = vadd.f32 %v1139, %v1183
      %v1192 = vadd.f32 %v1140, %v1184
      %v1193 = vadd.f32 %v1141, %v1185
      %v1194 = vadd.f32 %v1142, %v1186
      %v1195 = vadd.f32 %v1143, %v1187
      %1196 = vset.pattern.permute.xlu0 2
      %1197 = vperm.xlu0 %1196, %v994
      %v1198 = vpop.permute.xlu0 %1197
      %1200 = vset.pattern.permute.xlu0 2
      %1201 = vperm.xlu0 %1200, %v995
      %v1202 = vpop.permute.xlu0 %1201
      %1204 = vset.pattern.permute.xlu0 2
      %1205 = vperm.xlu0 %1204, %v996
      %v1206 = vpop.permute.xlu0 %1205
      %1208 = vset.pattern.permute.xlu0 2
      %1209 = vperm.xlu0 %1208, %v997
      %v1210 = vpop.permute.xlu0 %1209
      %1212 = vset.pattern.permute.xlu0 2
      %1213 = vperm.xlu0 %1212, %v998
      %v1214 = vpop.permute.xlu0 %1213
      %1216 = vset.pattern.permute.xlu0 2
      %1217 = vperm.xlu0 %1216, %v999
      %v1218 = vpop.permute.xlu0 %1217
      %1220 = vset.pattern.permute.xlu0 2
      %1221 = vperm.xlu0 %1220, %v1000
      %v1222 = vpop.permute.xlu0 %1221
      %1224 = vset.pattern.permute.xlu0 2
      %1225 = vperm.xlu0 %1224, %v1001
      %v1226 = vpop.permute.xlu0 %1225
      %v1228 = vlaneseq
      %v1229 = vshrl.u32 %v1228, 7
      %v1230 = vsub.s32 2, %v1229
      %v1231 = vrot.slane %v1003, %v1230
      %v1232 = vmul.f32 %v1198, %v1231
      %v1233 = vmul.f32 %v1202, %v1231
      %v1234 = vmul.f32 %v1206, %v1231
      %v1235 = vmul.f32 %v1210, %v1231
      %v1236 = vmul.f32 %v1214, %v1231
      %v1237 = vmul.f32 %v1218, %v1231
      %v1238 = vmul.f32 %v1222, %v1231
      %v1239 = vmul.f32 %v1226, %v1231
      %v1240 = vadd.f32 %v1188, %v1232
      %v1241 = vadd.f32 %v1189, %v1233
      %v1242 = vadd.f32 %v1190, %v1234
      %v1243 = vadd.f32 %v1191, %v1235
      %v1244 = vadd.f32 %v1192, %v1236
      %v1245 = vadd.f32 %v1193, %v1237
      %v1246 = vadd.f32 %v1194, %v1238
      %v1247 = vadd.f32 %v1195, %v1239
      %v1248 = vmul.f32 %v1240, 2.0
      %v1249 = vmul.f32 %v1241, 2.0
      %v1250 = vmul.f32 %v1242, 2.0
      %v1251 = vmul.f32 %v1243, 2.0
      %v1252 = vmul.f32 %v1244, 2.0
      %v1253 = vmul.f32 %v1245, 2.0
      %v1254 = vmul.f32 %v1246, 2.0
      %v1255 = vmul.f32 %v1247, 2.0
      %1257 = vset.pattern.permute.xlu0 0
      %1258 = vperm.xlu0 %1257, %v1076
      %v1259 = vpop.permute.xlu0 %1258
      %1262 = vset.pattern.permute.xlu0 0
      %1263 = vperm.xlu0 %1262, %v1077
      %v1264 = vpop.permute.xlu0 %1263
      %1267 = vset.pattern.permute.xlu0 0
      %1268 = vperm.xlu0 %1267, %v1078
      %v1269 = vpop.permute.xlu0 %1268
      %1272 = vset.pattern.permute.xlu0 0
      %1273 = vperm.xlu0 %1272, %v1079
      %v1274 = vpop.permute.xlu0 %1273
      %1277 = vset.pattern.permute.xlu0 0
      %1278 = vperm.xlu0 %1277, %v1080
      %v1279 = vpop.permute.xlu0 %1278
      %1282 = vset.pattern.permute.xlu0 0
      %1283 = vperm.xlu0 %1282, %v1081
      %v1284 = vpop.permute.xlu0 %1283
      %1287 = vset.pattern.permute.xlu0 0
      %1288 = vperm.xlu0 %1287, %v1082
      %v1289 = vpop.permute.xlu0 %1288
      %1292 = vset.pattern.permute.xlu0 0
      %1293 = vperm.xlu0 %1292, %v1083
      %v1294 = vpop.permute.xlu0 %1293
      %v1296 = vsub.f32 %v1248, %v1259
      %v1297 = vsub.f32 %v1249, %v1264
      %v1298 = vsub.f32 %v1250, %v1269
      %v1299 = vsub.f32 %v1251, %v1274
      %v1300 = vsub.f32 %v1252, %v1279
      %v1301 = vsub.f32 %v1253, %v1284
      %v1302 = vsub.f32 %v1254, %v1289
      %v1303 = vsub.f32 %v1255, %v1294
      %v1304 = vlaneseq
      %v1305 = vshrl.u32 %v1304, 7
      %v1306 = vsub.s32 0, %v1305
      %v1307 = vrot.slane %v1091, %v1306
      %v1308 = vsub.f32 %v1296, %v1307
      %v1309 = vsub.f32 %v1297, %v1307
      %v1310 = vsub.f32 %v1298, %v1307
      %v1311 = vsub.f32 %v1299, %v1307
      %v1312 = vsub.f32 %v1300, %v1307
      %v1313 = vsub.f32 %v1301, %v1307
      %v1314 = vsub.f32 %v1302, %v1307
      %v1315 = vsub.f32 %v1303, %v1307
      %v1316 = vmul.f32 %v1308, 25.0
      %v1317 = vmul.f32 %v1309, 25.0
      %v1318 = vmul.f32 %v1310, 25.0
      %v1319 = vmul.f32 %v1311, 25.0
      %v1320 = vmul.f32 %v1312, 25.0
      %v1321 = vmul.f32 %v1313, 25.0
      %v1322 = vmul.f32 %v1314, 25.0
      %v1323 = vmul.f32 %v1315, 25.0
      %v1324 = vmul.f32 %v1316, 1.442695
      %v1325 = vpow.pop %v1324
      %v1326 = vmul.f32 %v1317, 1.442695
      %v1327 = vpow.pop %v1326
      %v1328 = vmul.f32 %v1318, 1.442695
      %v1329 = vpow.pop %v1328
      %v1330 = vmul.f32 %v1319, 1.442695
      %v1331 = vpow.pop %v1330
      %v1332 = vmul.f32 %v1320, 1.442695
      %v1333 = vpow.pop %v1332
      %v1334 = vmul.f32 %v1321, 1.442695
      %v1335 = vpow.pop %v1334
      %v1336 = vmul.f32 %v1322, 1.442695
      %v1337 = vpow.pop %v1336
      %v1338 = vmul.f32 %v1323, 1.442695
      %v1339 = vpow.pop %v1338
      %s1340 = scalar_lea.vmem %s530, 20
      %v1341 = vld [vmem:[%s1340] sm:$0xf]
      %v1342 = vld [vmem:[%s1340 + $0x4] sm:$0xf]
      %v1343 = vld [vmem:[%s1340 + $0x8] sm:$0xf]
      %v1344 = vld [vmem:[%s1340 + $0xc] sm:$0xf]
      %v1345 = vld [vmem:[%s1340 + $0x10] sm:$0x1]
      %v1346 = vpack.c.bf16 %v1327, %v1325
      %v1347 = vpack.c.bf16 %v1331, %v1329
      %v1348 = vpack.c.bf16 %v1335, %v1333
      %v1349 = vpack.c.bf16 %v1339, %v1337
      %v1355 = vunpack.c.l.b16 %v1341
      %v1356 = vunpack.c.l.b16 %v1342
      %v1357 = vunpack.c.l.b16 %v1343
      %v1358 = vunpack.c.l.b16 %v1344
      %v1359 = vunpack.c.l.b16 %v1345
      %v1360 = vpack.c.b16 %v1356, %v1355
      %v1361 = vpack.c.b16 %v1358, %v1357
      %v1362 = vpack.c.b16 %v1359, %v1359
      %1366 = vmatprep.subr.bf16.mxu0 0
      %1367 = vmatpush1.bf16.xpose.msra.mxu0 0
      %1368 = vmatprep.subr.bf16.mxu0 0
      %1369 = vmatpush1.bf16.xpose.msra.mxu0 0
      %1370 = vmatprep.subr.bf16.mxu0 0
      %1371 = vmatpush1.bf16.xpose.msra.mxu0 0
      %1372 = vmatprep.subr.bf16.mxu0 0
      %1373 = vmatpush1.bf16.xpose.msra.mxu0 0
      %1374 = vmatprep.subr.bf16.mxu0 0
      %1375 = vmatpush1.bf16.xpose.msra.mxu0 %v1349
      %1376 = vmatprep.subr.bf16.mxu0 0
      %1377 = vmatpush1.bf16.xpose.msra.mxu0 %v1348
      %1378 = vmatprep.subr.bf16.mxu0 0
      %1379 = vmatpush1.bf16.xpose.msra.mxu0 %v1347
      %1380 = vmatprep.subr.bf16.mxu0 0
      %1381 = vmatpush1.bf16.xpose.msra.mxu0 %v1346
      %1382 = vmatprep.subr.bf16.mxu0 0
      %1383 = vmatpush2.bf16.xpose.msra.mxu0 0
      %1384 = vmatprep.subr.bf16.mxu0 0
      %1385 = vmatpush2.bf16.xpose.msra.mxu0 0
      %1386 = vmatprep.subr.bf16.mxu0 0
      %1387 = vmatpush2.bf16.xpose.msra.mxu0 0
      %1388 = vmatprep.subr.bf16.mxu0 0
      %1389 = vmatpush2.bf16.xpose.msra.mxu0 0
      %1390 = vmatprep.subr.bf16.mxu0 0
      %1391 = vmatpush2.bf16.xpose.msra.mxu0 0
      %1392 = vmatprep.subr.bf16.mxu0 0
      %1393 = vmatpush2.bf16.xpose.msra.mxu0 0
      %1394 = vmatprep.subr.bf16.mxu0 0
      %1395 = vmatpush2.bf16.xpose.msra.mxu0 0
      %1396 = vmatprep.subr.bf16.mxu0 0
      %1397 = vmatpush2.bf16.xpose.msra.mxu0 0
      %1398 = vmatprep.mubr.bf16.mxu0 0
      %1399 = vmatmul.mubr.bf16.gmra.mxu0 %v1360
      %v1400 = vpop.f32.mrf.mxu0
      %v1401 = vadd.f32 0.0, %v1400
      %v1402 = vpop.f32.mrf.mxu0
      %v1403 = vpop.f32.mrf.mxu0
      %v1404 = vadd.f32 0.0, %v1403
      %v1405 = vpop.f32.mrf.mxu0
      %1406 = vmatprep.mubr.bf16.mxu0 0
      %1407 = vmatmul.mubr.bf16.gmra.mxu0 %v1361
      %v1408 = vpop.f32.mrf.mxu0
      %v1409 = vadd.f32 0.0, %v1408
      %v1410 = vpop.f32.mrf.mxu0
      %v1411 = vpop.f32.mrf.mxu0
      %v1412 = vadd.f32 0.0, %v1411
      %v1413 = vpop.f32.mrf.mxu0
      %1414 = vmatprep.mubr.bf16.mxu0 0
      %1415 = vmatmul.mubr.bf16.gmra.mxu0 %v1362
      %v1416 = vpop.f32.mrf.mxu0
      %v1417 = vadd.f32 0.0, %v1416
      %v1418 = vpop.f32.mrf.mxu0
      %v1419 = vpop.f32.mrf.mxu0
      %v1420 = vpop.f32.mrf.mxu0
      %1421 = vdwg.mxu0
      %v1422 = vmax.f32 %v1417, 1e-30
      %v1423 = vrcp.pop %v1422
      %v1424 = vlaneseq
      %v1425 = vshrl.u32 %v1424, 7
      %v1426 = vsub.s32 0, %v1425
      %v1427 = vrot.slane %v1423, %v1426
      %v1428 = vmul.f32 %v1401, %v1427
      %v1429 = vmul.f32 %v1404, %v1427
      %v1430 = vmul.f32 %v1409, %v1427
      %v1431 = vmul.f32 %v1412, %v1427
      %v1432 = vpack.c.bf16 %v1429, %v1428
      %v1433 = vpack.c.bf16 %v1431, %v1430
      %v1436 = vunpack.c.l.b16 %v1432
      %v1437 = vunpack.c.h.b16 %v1432
      %v1438 = vunpack.c.l.b16 %v1433
      %v1439 = vunpack.c.h.b16 %v1433
      %v1440 = vpack.c.b16 %v1436, %v1436
      %v1441 = vpack.c.b16 %v1437, %v1437
      %v1442 = vpack.c.b16 %v1438, %v1438
      %v1443 = vpack.c.b16 %v1439, %v1439
      %1444 = vrot.lane.b32.xlu0 %v1440, 64
      %v1445 = vpop.permute.xlu0 %1444
      %1446 = vrot.lane.b32.xlu0 %v1441, 64
      %v1447 = vpop.permute.xlu0 %1446
      %1448 = vrot.lane.b32.xlu0 %v1442, 64
      %v1449 = vpop.permute.xlu0 %1448
      %1450 = vrot.lane.b32.xlu0 %v1443, 64
      %v1451 = vpop.permute.xlu0 %1450
      %vm1456 = vcmask 1043968
      %1457 = vst.msk [vmem:[#allocation2] sm:$0xf] %vm1456, %v1445
      %1458 = vst.msk [vmem:[#allocation2 + $0x4] sm:$0xf] %vm1456, %v1447
      %1459 = vst.msk [vmem:[#allocation2 + $0x8] sm:$0xf] %vm1456, %v1449
      %1460 = vst.msk [vmem:[#allocation2 + $0xc] sm:$0xf] %vm1456, %v1451
      %v1461 = vld [vmem:[%s518] sm:$0x7]
      %v1462 = vld [vmem:[%s4] sm:$0xff]
      %v1463 = vld [vmem:[%s4 + $0x8] sm:$0xff]
      %v1464 = vld [vmem:[%s4 + $0x10] sm:$0xff]
      %v1465 = vld [vmem:[%s4 + $0x18] sm:$0xff]
      %v1466 = vld [vmem:[%s4 + $0x20] sm:$0xff]
      %v1467 = vld [vmem:[%s4 + $0x28] sm:$0xff]
      %v1468 = vld [vmem:[%s4 + $0x30] sm:$0xff]
      %v1469 = vld [vmem:[%s4 + $0x38] sm:$0xff]
      %1471 = vset.pattern.permute.xlu0 0
      %1472 = vperm.xlu0 %1471, %v1462
      %v1473 = vpop.permute.xlu0 %1472
      %1476 = vset.pattern.permute.xlu0 0
      %1477 = vperm.xlu0 %1476, %v1463
      %v1478 = vpop.permute.xlu0 %1477
      %1481 = vset.pattern.permute.xlu0 0
      %1482 = vperm.xlu0 %1481, %v1464
      %v1483 = vpop.permute.xlu0 %1482
      %1486 = vset.pattern.permute.xlu0 0
      %1487 = vperm.xlu0 %1486, %v1465
      %v1488 = vpop.permute.xlu0 %1487
      %1491 = vset.pattern.permute.xlu0 0
      %1492 = vperm.xlu0 %1491, %v1466
      %v1493 = vpop.permute.xlu0 %1492
      %1496 = vset.pattern.permute.xlu0 0
      %1497 = vperm.xlu0 %1496, %v1467
      %v1498 = vpop.permute.xlu0 %1497
      %1501 = vset.pattern.permute.xlu0 0
      %1502 = vperm.xlu0 %1501, %v1468
      %v1503 = vpop.permute.xlu0 %1502
      %1506 = vset.pattern.permute.xlu0 0
      %1507 = vperm.xlu0 %1506, %v1469
      %v1508 = vpop.permute.xlu0 %1507
      %v1510 = vlaneseq
      %v1511 = vshrl.u32 %v1510, 7
      %v1512 = vsub.s32 0, %v1511
      %v1513 = vrot.slane %v1461, %v1512
      %v1514 = vmul.f32 %v1473, %v1513
      %v1515 = vmul.f32 %v1478, %v1513
      %v1516 = vmul.f32 %v1483, %v1513
      %v1517 = vmul.f32 %v1488, %v1513
      %v1518 = vmul.f32 %v1493, %v1513
      %v1519 = vmul.f32 %v1498, %v1513
      %v1520 = vmul.f32 %v1503, %v1513
      %v1521 = vmul.f32 %v1508, %v1513
      %1522 = vset.pattern.permute.xlu0 1
      %1523 = vperm.xlu0 %1522, %v1462
      %v1524 = vpop.permute.xlu0 %1523
      %1526 = vset.pattern.permute.xlu0 1
      %1527 = vperm.xlu0 %1526, %v1463
      %v1528 = vpop.permute.xlu0 %1527
      %1530 = vset.pattern.permute.xlu0 1
      %1531 = vperm.xlu0 %1530, %v1464
      %v1532 = vpop.permute.xlu0 %1531
      %1534 = vset.pattern.permute.xlu0 1
      %1535 = vperm.xlu0 %1534, %v1465
      %v1536 = vpop.permute.xlu0 %1535
      %1538 = vset.pattern.permute.xlu0 1
      %1539 = vperm.xlu0 %1538, %v1466
      %v1540 = vpop.permute.xlu0 %1539
      %1542 = vset.pattern.permute.xlu0 1
      %1543 = vperm.xlu0 %1542, %v1467
      %v1544 = vpop.permute.xlu0 %1543
      %1546 = vset.pattern.permute.xlu0 1
      %1547 = vperm.xlu0 %1546, %v1468
      %v1548 = vpop.permute.xlu0 %1547
      %1550 = vset.pattern.permute.xlu0 1
      %1551 = vperm.xlu0 %1550, %v1469
      %v1552 = vpop.permute.xlu0 %1551
      %v1554 = vlaneseq
      %v1555 = vshrl.u32 %v1554, 7
      %v1556 = vsub.s32 1, %v1555
      %v1557 = vrot.slane %v1461, %v1556
      %v1558 = vmul.f32 %v1524, %v1557
      %v1559 = vmul.f32 %v1528, %v1557
      %v1560 = vmul.f32 %v1532, %v1557
      %v1561 = vmul.f32 %v1536, %v1557
      %v1562 = vmul.f32 %v1540, %v1557
      %v1563 = vmul.f32 %v1544, %v1557
      %v1564 = vmul.f32 %v1548, %v1557
      %v1565 = vmul.f32 %v1552, %v1557
      %v1566 = vadd.f32 %v1514, %v1558
      %v1567 = vadd.f32 %v1515, %v1559
      %v1568 = vadd.f32 %v1516, %v1560
      %v1569 = vadd.f32 %v1517, %v1561
      %v1570 = vadd.f32 %v1518, %v1562
      %v1571 = vadd.f32 %v1519, %v1563
      %v1572 = vadd.f32 %v1520, %v1564
      %v1573 = vadd.f32 %v1521, %v1565
      %1574 = vset.pattern.permute.xlu0 2
      %1575 = vperm.xlu0 %1574, %v1462
      %v1576 = vpop.permute.xlu0 %1575
      %1578 = vset.pattern.permute.xlu0 2
      %1579 = vperm.xlu0 %1578, %v1463
      %v1580 = vpop.permute.xlu0 %1579
      %1582 = vset.pattern.permute.xlu0 2
      %1583 = vperm.xlu0 %1582, %v1464
      %v1584 = vpop.permute.xlu0 %1583
      %1586 = vset.pattern.permute.xlu0 2
      %1587 = vperm.xlu0 %1586, %v1465
      %v1588 = vpop.permute.xlu0 %1587
      %1590 = vset.pattern.permute.xlu0 2
      %1591 = vperm.xlu0 %1590, %v1466
      %v1592 = vpop.permute.xlu0 %1591
      %1594 = vset.pattern.permute.xlu0 2
      %1595 = vperm.xlu0 %1594, %v1467
      %v1596 = vpop.permute.xlu0 %1595
      %1598 = vset.pattern.permute.xlu0 2
      %1599 = vperm.xlu0 %1598, %v1468
      %v1600 = vpop.permute.xlu0 %1599
      %1602 = vset.pattern.permute.xlu0 2
      %1603 = vperm.xlu0 %1602, %v1469
      %v1604 = vpop.permute.xlu0 %1603
      %v1606 = vlaneseq
      %v1607 = vshrl.u32 %v1606, 7
      %v1608 = vsub.s32 2, %v1607
      %v1609 = vrot.slane %v1461, %v1608
      %v1610 = vmul.f32 %v1576, %v1609
      %v1611 = vmul.f32 %v1580, %v1609
      %v1612 = vmul.f32 %v1584, %v1609
      %v1613 = vmul.f32 %v1588, %v1609
      %v1614 = vmul.f32 %v1592, %v1609
      %v1615 = vmul.f32 %v1596, %v1609
      %v1616 = vmul.f32 %v1600, %v1609
      %v1617 = vmul.f32 %v1604, %v1609
      %v1618 = vadd.f32 %v1566, %v1610
      %v1619 = vadd.f32 %v1567, %v1611
      %v1620 = vadd.f32 %v1568, %v1612
      %v1621 = vadd.f32 %v1569, %v1613
      %v1622 = vadd.f32 %v1570, %v1614
      %v1623 = vadd.f32 %v1571, %v1615
      %v1624 = vadd.f32 %v1572, %v1616
      %v1625 = vadd.f32 %v1573, %v1617
      %v1626 = vld [vmem:[%s5] sm:$0xff]
      %v1627 = vld [vmem:[%s5 + $0x8] sm:$0xff]
      %v1628 = vld [vmem:[%s5 + $0x10] sm:$0xff]
      %v1629 = vld [vmem:[%s5 + $0x18] sm:$0xff]
      %v1630 = vld [vmem:[%s5 + $0x20] sm:$0xff]
      %v1631 = vld [vmem:[%s5 + $0x28] sm:$0xff]
      %v1632 = vld [vmem:[%s5 + $0x30] sm:$0xff]
      %v1633 = vld [vmem:[%s5 + $0x38] sm:$0xff]
      %1635 = vset.pattern.permute.xlu0 0
      %1636 = vperm.xlu0 %1635, %v1626
      %v1637 = vpop.permute.xlu0 %1636
      %1640 = vset.pattern.permute.xlu0 0
      %1641 = vperm.xlu0 %1640, %v1627
      %v1642 = vpop.permute.xlu0 %1641
      %1645 = vset.pattern.permute.xlu0 0
      %1646 = vperm.xlu0 %1645, %v1628
      %v1647 = vpop.permute.xlu0 %1646
      %1650 = vset.pattern.permute.xlu0 0
      %1651 = vperm.xlu0 %1650, %v1629
      %v1652 = vpop.permute.xlu0 %1651
      %1655 = vset.pattern.permute.xlu0 0
      %1656 = vperm.xlu0 %1655, %v1630
      %v1657 = vpop.permute.xlu0 %1656
      %1660 = vset.pattern.permute.xlu0 0
      %1661 = vperm.xlu0 %1660, %v1631
      %v1662 = vpop.permute.xlu0 %1661
      %1665 = vset.pattern.permute.xlu0 0
      %1666 = vperm.xlu0 %1665, %v1632
      %v1667 = vpop.permute.xlu0 %1666
      %1670 = vset.pattern.permute.xlu0 0
      %1671 = vperm.xlu0 %1670, %v1633
      %v1672 = vpop.permute.xlu0 %1671
      %v1674 = vadd.f32 %v1618, %v1637
      %v1675 = vadd.f32 %v1619, %v1642
      %v1676 = vadd.f32 %v1620, %v1647
      %v1677 = vadd.f32 %v1621, %v1652
      %v1678 = vadd.f32 %v1622, %v1657
      %v1679 = vadd.f32 %v1623, %v1662
      %v1680 = vadd.f32 %v1624, %v1667
      %v1681 = vadd.f32 %v1625, %v1672
      %v1682 = vld [vmem:[%s6] sm:$0xf]
      %v1683 = vld [vmem:[%s6 + $0x4] sm:$0xf]
      %v1684 = vld [vmem:[%s6 + $0x8] sm:$0xf]
      %v1685 = vld [vmem:[%s6 + $0xc] sm:$0xf]
      %v1686 = vld [vmem:[%s6 + $0x10] sm:$0xf]
      %v1687 = vld [vmem:[%s6 + $0x14] sm:$0xf]
      %v1688 = vld [vmem:[%s6 + $0x18] sm:$0xf]
      %v1689 = vld [vmem:[%s6 + $0x1c] sm:$0xf]
      %v1690 = vld [vmem:[%s6 + $0x20] sm:$0xf]
      %v1691 = vld [vmem:[%s6 + $0x24] sm:$0xf]
      %v1692 = vld [vmem:[%s6 + $0x28] sm:$0xf]
      %v1693 = vld [vmem:[%s6 + $0x2c] sm:$0xf]
      %v1694 = vld [vmem:[%s6 + $0x30] sm:$0xf]
      %v1695 = vld [vmem:[%s6 + $0x34] sm:$0xf]
      %v1696 = vld [vmem:[%s6 + $0x38] sm:$0xf]
      %v1697 = vld [vmem:[%s6 + $0x3c] sm:$0xf]
      %v1698 = vld [vmem:[%s6 + $0x40] sm:$0xf]
      %v1699 = vld [vmem:[%s6 + $0x44] sm:$0xf]
      %v1700 = vld [vmem:[%s6 + $0x48] sm:$0xf]
      %v1701 = vld [vmem:[%s6 + $0x4c] sm:$0xf]
      %v1702 = vld [vmem:[%s6 + $0x50] sm:$0xf]
      %v1703 = vld [vmem:[%s6 + $0x54] sm:$0xf]
      %v1704 = vld [vmem:[%s6 + $0x58] sm:$0xf]
      %v1705 = vld [vmem:[%s6 + $0x5c] sm:$0xf]
      %v1706 = vld [vmem:[%s6 + $0x60] sm:$0xf]
      %v1707 = vld [vmem:[%s6 + $0x64] sm:$0xf]
      %v1708 = vld [vmem:[%s6 + $0x68] sm:$0xf]
      %v1709 = vld [vmem:[%s6 + $0x6c] sm:$0xf]
      %v1710 = vld [vmem:[%s6 + $0x70] sm:$0xf]
      %v1711 = vld [vmem:[%s6 + $0x74] sm:$0xf]
      %v1712 = vld [vmem:[%s6 + $0x78] sm:$0xf]
      %v1713 = vld [vmem:[%s6 + $0x7c] sm:$0xf]
      %v1714 = vld [vmem:[%s6 + $0x80] sm:$0xf]
      %v1715 = vld [vmem:[%s6 + $0x84] sm:$0xf]
      %v1716 = vld [vmem:[%s6 + $0x88] sm:$0xf]
      %v1717 = vld [vmem:[%s6 + $0x8c] sm:$0xf]
      %v1718 = vld [vmem:[%s6 + $0x90] sm:$0xf]
      %v1719 = vld [vmem:[%s6 + $0x94] sm:$0xf]
      %v1720 = vld [vmem:[%s6 + $0x98] sm:$0xf]
      %v1721 = vld [vmem:[%s6 + $0x9c] sm:$0xf]
      %v1722 = vld [vmem:[#allocation2] sm:$0xf]
      %v1723 = vld [vmem:[#allocation2 + $0x4] sm:$0xf]
      %v1724 = vld [vmem:[#allocation2 + $0x8] sm:$0xf]
      %v1725 = vld [vmem:[#allocation2 + $0xc] sm:$0xf]
      %v1766 = vunpack.c.l.b16 %v1682
      %v1767 = vunpack.c.l.b16 %v1683
      %v1768 = vunpack.c.l.b16 %v1684
      %v1769 = vunpack.c.l.b16 %v1685
      %v1770 = vunpack.c.l.b16 %v1686
      %v1771 = vunpack.c.l.b16 %v1687
      %v1772 = vunpack.c.l.b16 %v1688
      %v1773 = vunpack.c.l.b16 %v1689
      %v1774 = vunpack.c.l.b16 %v1690
      %v1775 = vunpack.c.l.b16 %v1691
      %v1776 = vunpack.c.l.b16 %v1692
      %v1777 = vunpack.c.l.b16 %v1693
      %v1778 = vunpack.c.l.b16 %v1694
      %v1779 = vunpack.c.l.b16 %v1695
      %v1780 = vunpack.c.l.b16 %v1696
      %v1781 = vunpack.c.l.b16 %v1697
      %v1782 = vunpack.c.l.b16 %v1698
      %v1783 = vunpack.c.l.b16 %v1699
      %v1784 = vunpack.c.l.b16 %v1700
      %v1785 = vunpack.c.l.b16 %v1701
      %v1786 = vunpack.c.l.b16 %v1702
      %v1787 = vunpack.c.l.b16 %v1703
      %v1788 = vunpack.c.l.b16 %v1704
      %v1789 = vunpack.c.l.b16 %v1705
      %v1790 = vunpack.c.l.b16 %v1706
      %v1791 = vunpack.c.l.b16 %v1707
      %v1792 = vunpack.c.l.b16 %v1708
      %v1793 = vunpack.c.l.b16 %v1709
      %v1794 = vunpack.c.l.b16 %v1710
      %v1795 = vunpack.c.l.b16 %v1711
      %v1796 = vunpack.c.l.b16 %v1712
      %v1797 = vunpack.c.l.b16 %v1713
      %v1798 = vunpack.c.l.b16 %v1714
      %v1799 = vunpack.c.l.b16 %v1715
      %v1800 = vunpack.c.l.b16 %v1716
      %v1801 = vunpack.c.l.b16 %v1717
      %v1802 = vunpack.c.l.b16 %v1718
      %v1803 = vunpack.c.l.b16 %v1719
      %v1804 = vunpack.c.l.b16 %v1720
      %v1805 = vunpack.c.l.b16 %v1721
      %v1806 = vpack.c.b16 %v1767, %v1766
      %v1807 = vpack.c.b16 %v1769, %v1768
      %v1808 = vpack.c.b16 %v1771, %v1770
      %v1809 = vpack.c.b16 %v1773, %v1772
      %v1810 = vpack.c.b16 %v1775, %v1774
      %v1811 = vpack.c.b16 %v1777, %v1776
      %v1812 = vpack.c.b16 %v1779, %v1778
      %v1813 = vpack.c.b16 %v1781, %v1780
      %v1814 = vpack.c.b16 %v1783, %v1782
      %v1815 = vpack.c.b16 %v1785, %v1784
      %v1816 = vpack.c.b16 %v1787, %v1786
      %v1817 = vpack.c.b16 %v1789, %v1788
      %v1818 = vpack.c.b16 %v1791, %v1790
      %v1819 = vpack.c.b16 %v1793, %v1792
      %v1820 = vpack.c.b16 %v1795, %v1794
      %v1821 = vpack.c.b16 %v1797, %v1796
      %v1822 = vpack.c.b16 %v1799, %v1798
      %v1823 = vpack.c.b16 %v1801, %v1800
      %v1824 = vpack.c.b16 %v1803, %v1802
      %v1825 = vpack.c.b16 %v1805, %v1804
      %v1830 = vunpack.c.l.b16 %v1722
      %v1831 = vunpack.c.l.b16 %v1723
      %v1832 = vunpack.c.l.b16 %v1724
      %v1833 = vunpack.c.l.b16 %v1725
      %v1834 = vpack.c.b16 %v1831, %v1830
      %v1835 = vpack.c.b16 %v1833, %v1832
      %vm1838 = vcmask 261120
      %v1840 = vsel %vm1838, %v1806, 0
      %v1843 = vsel %vm1838, %v1807, 0
      %v1846 = vsel %vm1838, %v1808, 0
      %v1849 = vsel %vm1838, %v1809, 0
      %v1852 = vsel %vm1838, %v1810, 0
      %v1855 = vsel %vm1838, %v1811, 0
      %v1858 = vsel %vm1838, %v1812, 0
      %v1861 = vsel %vm1838, %v1813, 0
      %v1864 = vsel %vm1838, %v1814, 0
      %v1867 = vsel %vm1838, %v1815, 0
      %v1870 = vsel %vm1838, %v1816, 0
      %v1873 = vsel %vm1838, %v1817, 0
      %v1876 = vsel %vm1838, %v1818, 0
      %v1879 = vsel %vm1838, %v1819, 0
      %v1882 = vsel %vm1838, %v1820, 0
      %v1885 = vsel %vm1838, %v1821, 0
      %v1888 = vsel %vm1838, %v1822, 0
      %v1891 = vsel %vm1838, %v1823, 0
      %v1894 = vsel %vm1838, %v1824, 0
      %v1897 = vsel %vm1838, %v1825, 0
      %1899 = vmatprep.subr.bf16.mxu0 0
      %1900 = vmatpush1.bf16.msra.mxu0 0
      %1901 = vmatprep.subr.bf16.mxu0 0
      %1902 = vmatpush1.bf16.msra.mxu0 0
      %1903 = vmatprep.subr.bf16.mxu0 0
      %1904 = vmatpush1.bf16.msra.mxu0 0
      %1905 = vmatprep.subr.bf16.mxu0 0
      %1906 = vmatpush1.bf16.msra.mxu0 0
      %1907 = vmatprep.subr.bf16.mxu0 0
      %1908 = vmatpush1.bf16.msra.mxu0 0
      %1909 = vmatprep.subr.bf16.mxu0 0
      %1910 = vmatpush1.bf16.msra.mxu0 0
      %1911 = vmatprep.subr.bf16.mxu0 0
      %1912 = vmatpush1.bf16.msra.mxu0 %v1835
      %1913 = vmatprep.subr.bf16.mxu0 0
      %1914 = vmatpush1.bf16.msra.mxu0 %v1834
      %1915 = vmatprep.subr.bf16.mxu0 0
      %1916 = vmatpush2.bf16.msra.mxu0 0
      %1917 = vmatprep.subr.bf16.mxu0 0
      %1918 = vmatpush2.bf16.msra.mxu0 0
      %1919 = vmatprep.subr.bf16.mxu0 0
      %1920 = vmatpush2.bf16.msra.mxu0 0
      %1921 = vmatprep.subr.bf16.mxu0 0
      %1922 = vmatpush2.bf16.msra.mxu0 0
      %1923 = vmatprep.subr.bf16.mxu0 0
      %1924 = vmatpush2.bf16.msra.mxu0 0
      %1925 = vmatprep.subr.bf16.mxu0 0
      %1926 = vmatpush2.bf16.msra.mxu0 0
      %1927 = vmatprep.subr.bf16.mxu0 0
      %1928 = vmatpush2.bf16.msra.mxu0 0
      %1929 = vmatprep.subr.bf16.mxu0 0
      %1930 = vmatpush2.bf16.msra.mxu0 0
      %1931 = vmatprep.mubr.bf16.mxu0 0
      %1932 = vmatmul.mubr.bf16.gmra.mxu0 %v1840
      %v1933 = vpop.f32.mrf.mxu0
      %v1934 = vadd.f32 0.0, %v1933
      %v1935 = vpop.f32.mrf.mxu0
      %v1936 = vpop.f32.mrf.mxu0
      %v1937 = vadd.f32 0.0, %v1936
      %v1938 = vpop.f32.mrf.mxu0
      %1939 = vmatprep.mubr.bf16.mxu0 0
      %1940 = vmatmul.mubr.bf16.gmra.mxu0 %v1843
      %v1941 = vpop.f32.mrf.mxu0
      %v1942 = vadd.f32 0.0, %v1941
      %v1943 = vpop.f32.mrf.mxu0
      %v1944 = vpop.f32.mrf.mxu0
      %v1945 = vadd.f32 0.0, %v1944
      %v1946 = vpop.f32.mrf.mxu0
      %1947 = vmatprep.mubr.bf16.mxu0 0
      %1948 = vmatmul.mubr.bf16.gmra.mxu0 %v1846
      %v1949 = vpop.f32.mrf.mxu0
      %v1950 = vadd.f32 0.0, %v1949
      %v1951 = vpop.f32.mrf.mxu0
      %v1952 = vpop.f32.mrf.mxu0
      %v1953 = vadd.f32 0.0, %v1952
      %v1954 = vpop.f32.mrf.mxu0
      %1955 = vmatprep.mubr.bf16.mxu0 0
      %1956 = vmatmul.mubr.bf16.gmra.mxu0 %v1849
      %v1957 = vpop.f32.mrf.mxu0
      %v1958 = vadd.f32 0.0, %v1957
      %v1959 = vpop.f32.mrf.mxu0
      %v1960 = vpop.f32.mrf.mxu0
      %v1961 = vadd.f32 0.0, %v1960
      %v1962 = vpop.f32.mrf.mxu0
      %1963 = vmatprep.mubr.bf16.mxu0 0
      %1964 = vmatmul.mubr.bf16.gmra.mxu0 %v1852
      %v1965 = vpop.f32.mrf.mxu0
      %v1966 = vadd.f32 0.0, %v1965
      %v1967 = vpop.f32.mrf.mxu0
      %v1968 = vpop.f32.mrf.mxu0
      %v1969 = vadd.f32 0.0, %v1968
      %v1970 = vpop.f32.mrf.mxu0
      %1971 = vmatprep.mubr.bf16.mxu0 0
      %1972 = vmatmul.mubr.bf16.gmra.mxu0 %v1855
      %v1973 = vpop.f32.mrf.mxu0
      %v1974 = vadd.f32 0.0, %v1973
      %v1975 = vpop.f32.mrf.mxu0
      %v1976 = vpop.f32.mrf.mxu0
      %v1977 = vadd.f32 0.0, %v1976
      %v1978 = vpop.f32.mrf.mxu0
      %1979 = vmatprep.mubr.bf16.mxu0 0
      %1980 = vmatmul.mubr.bf16.gmra.mxu0 %v1858
      %v1981 = vpop.f32.mrf.mxu0
      %v1982 = vadd.f32 0.0, %v1981
      %v1983 = vpop.f32.mrf.mxu0
      %v1984 = vpop.f32.mrf.mxu0
      %v1985 = vadd.f32 0.0, %v1984
      %v1986 = vpop.f32.mrf.mxu0
      %1987 = vmatprep.mubr.bf16.mxu0 0
      %1988 = vmatmul.mubr.bf16.gmra.mxu0 %v1861
      %v1989 = vpop.f32.mrf.mxu0
      %v1990 = vadd.f32 0.0, %v1989
      %v1991 = vpop.f32.mrf.mxu0
      %v1992 = vpop.f32.mrf.mxu0
      %v1993 = vadd.f32 0.0, %v1992
      %v1994 = vpop.f32.mrf.mxu0
      %1995 = vmatprep.mubr.bf16.mxu0 0
      %1996 = vmatmul.mubr.bf16.gmra.mxu0 %v1864
      %v1997 = vpop.f32.mrf.mxu0
      %v1998 = vadd.f32 0.0, %v1997
      %v1999 = vpop.f32.mrf.mxu0
      %v2000 = vpop.f32.mrf.mxu0
      %v2001 = vadd.f32 0.0, %v2000
      %v2002 = vpop.f32.mrf.mxu0
      %2003 = vmatprep.mubr.bf16.mxu0 0
      %2004 = vmatmul.mubr.bf16.gmra.mxu0 %v1867
      %v2005 = vpop.f32.mrf.mxu0
      %v2006 = vadd.f32 0.0, %v2005
      %v2007 = vpop.f32.mrf.mxu0
      %v2008 = vpop.f32.mrf.mxu0
      %v2009 = vadd.f32 0.0, %v2008
      %v2010 = vpop.f32.mrf.mxu0
      %2011 = vmatprep.mubr.bf16.mxu0 0
      %2012 = vmatmul.mubr.bf16.gmra.mxu0 %v1870
      %v2013 = vpop.f32.mrf.mxu0
      %v2014 = vadd.f32 0.0, %v2013
      %v2015 = vpop.f32.mrf.mxu0
      %v2016 = vpop.f32.mrf.mxu0
      %v2017 = vadd.f32 0.0, %v2016
      %v2018 = vpop.f32.mrf.mxu0
      %2019 = vmatprep.mubr.bf16.mxu0 0
      %2020 = vmatmul.mubr.bf16.gmra.mxu0 %v1873
      %v2021 = vpop.f32.mrf.mxu0
      %v2022 = vadd.f32 0.0, %v2021
      %v2023 = vpop.f32.mrf.mxu0
      %v2024 = vpop.f32.mrf.mxu0
      %v2025 = vadd.f32 0.0, %v2024
      %v2026 = vpop.f32.mrf.mxu0
      %2027 = vmatprep.mubr.bf16.mxu0 0
      %2028 = vmatmul.mubr.bf16.gmra.mxu0 %v1876
      %v2029 = vpop.f32.mrf.mxu0
      %v2030 = vadd.f32 0.0, %v2029
      %v2031 = vpop.f32.mrf.mxu0
      %v2032 = vpop.f32.mrf.mxu0
      %v2033 = vadd.f32 0.0, %v2032
      %v2034 = vpop.f32.mrf.mxu0
      %2035 = vmatprep.mubr.bf16.mxu0 0
      %2036 = vmatmul.mubr.bf16.gmra.mxu0 %v1879
      %v2037 = vpop.f32.mrf.mxu0
      %v2038 = vadd.f32 0.0, %v2037
      %v2039 = vpop.f32.mrf.mxu0
      %v2040 = vpop.f32.mrf.mxu0
      %v2041 = vadd.f32 0.0, %v2040
      %v2042 = vpop.f32.mrf.mxu0
      %2043 = vmatprep.mubr.bf16.mxu0 0
      %2044 = vmatmul.mubr.bf16.gmra.mxu0 %v1882
      %v2045 = vpop.f32.mrf.mxu0
      %v2046 = vadd.f32 0.0, %v2045
      %v2047 = vpop.f32.mrf.mxu0
      %v2048 = vpop.f32.mrf.mxu0
      %v2049 = vadd.f32 0.0, %v2048
      %v2050 = vpop.f32.mrf.mxu0
      %2051 = vmatprep.mubr.bf16.mxu0 0
      %2052 = vmatmul.mubr.bf16.gmra.mxu0 %v1885
      %v2053 = vpop.f32.mrf.mxu0
      %v2054 = vadd.f32 0.0, %v2053
      %v2055 = vpop.f32.mrf.mxu0
      %v2056 = vpop.f32.mrf.mxu0
      %v2057 = vadd.f32 0.0, %v2056
      %v2058 = vpop.f32.mrf.mxu0
      %2059 = vmatprep.mubr.bf16.mxu0 0
      %2060 = vmatmul.mubr.bf16.gmra.mxu0 %v1888
      %v2061 = vpop.f32.mrf.mxu0
      %v2062 = vadd.f32 0.0, %v2061
      %v2063 = vpop.f32.mrf.mxu0
      %v2064 = vpop.f32.mrf.mxu0
      %v2065 = vadd.f32 0.0, %v2064
      %v2066 = vpop.f32.mrf.mxu0
      %2067 = vmatprep.mubr.bf16.mxu0 0
      %2068 = vmatmul.mubr.bf16.gmra.mxu0 %v1891
      %v2069 = vpop.f32.mrf.mxu0
      %v2070 = vadd.f32 0.0, %v2069
      %v2071 = vpop.f32.mrf.mxu0
      %v2072 = vpop.f32.mrf.mxu0
      %v2073 = vadd.f32 0.0, %v2072
      %v2074 = vpop.f32.mrf.mxu0
      %2075 = vmatprep.mubr.bf16.mxu0 0
      %2076 = vmatmul.mubr.bf16.gmra.mxu0 %v1894
      %v2077 = vpop.f32.mrf.mxu0
      %v2078 = vadd.f32 0.0, %v2077
      %v2079 = vpop.f32.mrf.mxu0
      %v2080 = vpop.f32.mrf.mxu0
      %v2081 = vadd.f32 0.0, %v2080
      %v2082 = vpop.f32.mrf.mxu0
      %2083 = vmatprep.mubr.bf16.mxu0 0
      %2084 = vmatmul.mubr.bf16.gmra.mxu0 %v1897
      %v2085 = vpop.f32.mrf.mxu0
      %v2086 = vadd.f32 0.0, %v2085
      %v2087 = vpop.f32.mrf.mxu0
      %v2088 = vpop.f32.mrf.mxu0
      %v2089 = vadd.f32 0.0, %v2088
      %v2090 = vpop.f32.mrf.mxu0
      %2091 = vdwg.mxu0
      %v2092 = vadd.f32 %v1674, %v1934
      %v2093 = vadd.f32 %v1675, %v1937
      %v2094 = vadd.f32 %v1676, %v1942
      %v2095 = vadd.f32 %v1677, %v1945
      %v2096 = vadd.f32 %v1678, %v1950
      %v2097 = vadd.f32 %v1679, %v1953
      %v2098 = vadd.f32 %v1680, %v1958
      %v2099 = vadd.f32 %v1681, %v1961
      %v2100 = vld [vmem:[%s7] sm:$0xff]
      %v2101 = vld [vmem:[%s7 + $0x8] sm:$0xff]
      %v2102 = vld [vmem:[%s7 + $0x10] sm:$0xff]
      %v2103 = vld [vmem:[%s7 + $0x18] sm:$0xff]
      %v2104 = vld [vmem:[%s7 + $0x20] sm:$0xff]
      %v2105 = vld [vmem:[%s7 + $0x28] sm:$0xff]
      %v2106 = vld [vmem:[%s7 + $0x30] sm:$0xff]
      %v2107 = vld [vmem:[%s7 + $0x38] sm:$0xff]
      %2109 = vset.pattern.permute.xlu0 0
      %2110 = vperm.xlu0 %2109, %v2100
      %v2111 = vpop.permute.xlu0 %2110
      %2114 = vset.pattern.permute.xlu0 0
      %2115 = vperm.xlu0 %2114, %v2101
      %v2116 = vpop.permute.xlu0 %2115
      %2119 = vset.pattern.permute.xlu0 0
      %2120 = vperm.xlu0 %2119, %v2102
      %v2121 = vpop.permute.xlu0 %2120
      %2124 = vset.pattern.permute.xlu0 0
      %2125 = vperm.xlu0 %2124, %v2103
      %v2126 = vpop.permute.xlu0 %2125
      %2129 = vset.pattern.permute.xlu0 0
      %2130 = vperm.xlu0 %2129, %v2104
      %v2131 = vpop.permute.xlu0 %2130
      %2134 = vset.pattern.permute.xlu0 0
      %2135 = vperm.xlu0 %2134, %v2105
      %v2136 = vpop.permute.xlu0 %2135
      %2139 = vset.pattern.permute.xlu0 0
      %2140 = vperm.xlu0 %2139, %v2106
      %v2141 = vpop.permute.xlu0 %2140
      %2144 = vset.pattern.permute.xlu0 0
      %2145 = vperm.xlu0 %2144, %v2107
      %v2146 = vpop.permute.xlu0 %2145
      %v2148 = vadd.f32 %v2092, %v2111
      %v2149 = vadd.f32 %v2093, %v2116
      %v2150 = vadd.f32 %v2094, %v2121
      %v2151 = vadd.f32 %v2095, %v2126
      %v2152 = vadd.f32 %v2096, %v2131
      %v2153 = vadd.f32 %v2097, %v2136
      %v2154 = vadd.f32 %v2098, %v2141
      %v2155 = vadd.f32 %v2099, %v2146
      %v2156 = vld [vmem:[%s8] sm:$0xf]
      %v2157 = vld [vmem:[%s8 + $0x4] sm:$0xf]
      %v2158 = vld [vmem:[%s8 + $0x8] sm:$0xf]
      %v2159 = vld [vmem:[%s8 + $0xc] sm:$0xf]
      %v2160 = vld [vmem:[%s8 + $0x10] sm:$0xf]
      %v2161 = vld [vmem:[%s8 + $0x14] sm:$0xf]
      %v2162 = vld [vmem:[%s8 + $0x18] sm:$0xf]
      %v2163 = vld [vmem:[%s8 + $0x1c] sm:$0xf]
      %v2164 = vmax.f32 %v2148, 0.0
      %v2165 = vmax.f32 %v2149, 0.0
      %v2166 = vmax.f32 %v2150, 0.0
      %v2167 = vmax.f32 %v2151, 0.0
      %v2168 = vmax.f32 %v2152, 0.0
      %v2169 = vmax.f32 %v2153, 0.0
      %v2170 = vmax.f32 %v2154, 0.0
      %v2171 = vmax.f32 %v2155, 0.0
      %v2172 = vpack.c.bf16 %v2165, %v2164
      %v2173 = vpack.c.bf16 %v2167, %v2166
      %v2174 = vpack.c.bf16 %v2169, %v2168
      %v2175 = vpack.c.bf16 %v2171, %v2170
      %v2176 = vld [vmem:[%s9] sm:$0xff]
      %v2177 = vld [vmem:[%s9 + $0x8] sm:$0xff]
      %v2178 = vld [vmem:[%s9 + $0x10] sm:$0xff]
      %v2179 = vld [vmem:[%s9 + $0x18] sm:$0xff]
      %v2180 = vld [vmem:[%s9 + $0x20] sm:$0xff]
      %v2181 = vld [vmem:[%s9 + $0x28] sm:$0xff]
      %v2182 = vld [vmem:[%s9 + $0x30] sm:$0xff]
      %v2183 = vld [vmem:[%s9 + $0x38] sm:$0xff]
      %2185 = vset.pattern.permute.xlu0 0
      %2186 = vperm.xlu0 %2185, %v2176
      %v2187 = vpop.permute.xlu0 %2186
      %2190 = vset.pattern.permute.xlu0 0
      %2191 = vperm.xlu0 %2190, %v2177
      %v2192 = vpop.permute.xlu0 %2191
      %2195 = vset.pattern.permute.xlu0 0
      %2196 = vperm.xlu0 %2195, %v2178
      %v2197 = vpop.permute.xlu0 %2196
      %2200 = vset.pattern.permute.xlu0 0
      %2201 = vperm.xlu0 %2200, %v2179
      %v2202 = vpop.permute.xlu0 %2201
      %2205 = vset.pattern.permute.xlu0 0
      %2206 = vperm.xlu0 %2205, %v2180
      %v2207 = vpop.permute.xlu0 %2206
      %2210 = vset.pattern.permute.xlu0 0
      %2211 = vperm.xlu0 %2210, %v2181
      %v2212 = vpop.permute.xlu0 %2211
      %2215 = vset.pattern.permute.xlu0 0
      %2216 = vperm.xlu0 %2215, %v2182
      %v2217 = vpop.permute.xlu0 %2216
      %2220 = vset.pattern.permute.xlu0 0
      %2221 = vperm.xlu0 %2220, %v2183
      %v2222 = vpop.permute.xlu0 %2221
      %v2232 = vunpack.c.l.b16 %v2156
      %v2233 = vunpack.c.l.b16 %v2157
      %v2234 = vunpack.c.l.b16 %v2158
      %v2235 = vunpack.c.l.b16 %v2159
      %v2236 = vunpack.c.l.b16 %v2160
      %v2237 = vunpack.c.l.b16 %v2161
      %v2238 = vunpack.c.l.b16 %v2162
      %v2239 = vunpack.c.l.b16 %v2163
      %v2240 = vpack.c.b16 %v2233, %v2232
      %v2241 = vpack.c.b16 %v2235, %v2234
      %v2242 = vpack.c.b16 %v2237, %v2236
      %v2243 = vpack.c.b16 %v2239, %v2238
      %vm2244 = vcmask 523264
      %v2246 = vsel %vm2244, %v2240, 0
      %v2249 = vsel %vm2244, %v2241, 0
      %v2252 = vsel %vm2244, %v2242, 0
      %v2255 = vsel %vm2244, %v2243, 0
      %2257 = vmatprep.subr.bf16.mxu0 0
      %2258 = vmatpush1.bf16.msra.mxu0 0
      %2259 = vmatprep.subr.bf16.mxu0 0
      %2260 = vmatpush1.bf16.msra.mxu0 0
      %2261 = vmatprep.subr.bf16.mxu0 0
      %2262 = vmatpush1.bf16.msra.mxu0 0
      %2263 = vmatprep.subr.bf16.mxu0 0
      %2264 = vmatpush1.bf16.msra.mxu0 0
      %2265 = vmatprep.subr.bf16.mxu0 0
      %2266 = vmatpush1.bf16.msra.mxu0 %v2175
      %2267 = vmatprep.subr.bf16.mxu0 0
      %2268 = vmatpush1.bf16.msra.mxu0 %v2174
      %2269 = vmatprep.subr.bf16.mxu0 0
      %2270 = vmatpush1.bf16.msra.mxu0 %v2173
      %2271 = vmatprep.subr.bf16.mxu0 0
      %2272 = vmatpush1.bf16.msra.mxu0 %v2172
      %2273 = vmatprep.subr.bf16.mxu0 0
      %2274 = vmatpush2.bf16.msra.mxu0 0
      %2275 = vmatprep.subr.bf16.mxu0 0
      %2276 = vmatpush2.bf16.msra.mxu0 0
      %2277 = vmatprep.subr.bf16.mxu0 0
      %2278 = vmatpush2.bf16.msra.mxu0 0
      %2279 = vmatprep.subr.bf16.mxu0 0
      %2280 = vmatpush2.bf16.msra.mxu0 0
      %2281 = vmatprep.subr.bf16.mxu0 0
      %2282 = vmatpush2.bf16.msra.mxu0 0
      %2283 = vmatprep.subr.bf16.mxu0 0
      %2284 = vmatpush2.bf16.msra.mxu0 0
      %2285 = vmatprep.subr.bf16.mxu0 0
      %2286 = vmatpush2.bf16.msra.mxu0 0
      %2287 = vmatprep.subr.bf16.mxu0 0
      %2288 = vmatpush2.bf16.msra.mxu0 0
      %2289 = vmatprep.mubr.bf16.mxu0 0
      %2290 = vmatmul.mubr.bf16.gmra.mxu0 %v2246
      %v2291 = vpop.f32.mrf.mxu0
      %v2292 = vadd.f32 %v2187, %v2291
      %v2293 = vpop.f32.mrf.mxu0
      %v2294 = vpop.f32.mrf.mxu0
      %v2295 = vadd.f32 %v2192, %v2294
      %v2296 = vpop.f32.mrf.mxu0
      %2297 = vmatprep.mubr.bf16.mxu0 0
      %2298 = vmatmul.mubr.bf16.gmra.mxu0 %v2249
      %v2299 = vpop.f32.mrf.mxu0
      %v2300 = vadd.f32 %v2197, %v2299
      %v2301 = vpop.f32.mrf.mxu0
      %v2302 = vpop.f32.mrf.mxu0
      %v2303 = vadd.f32 %v2202, %v2302
      %v2304 = vpop.f32.mrf.mxu0
      %2305 = vmatprep.mubr.bf16.mxu0 0
      %2306 = vmatmul.mubr.bf16.gmra.mxu0 %v2252
      %v2307 = vpop.f32.mrf.mxu0
      %v2308 = vadd.f32 %v2207, %v2307
      %v2309 = vpop.f32.mrf.mxu0
      %v2310 = vpop.f32.mrf.mxu0
      %v2311 = vadd.f32 %v2212, %v2310
      %v2312 = vpop.f32.mrf.mxu0
      %2313 = vmatprep.mubr.bf16.mxu0 0
      %2314 = vmatmul.mubr.bf16.gmra.mxu0 %v2255
      %v2315 = vpop.f32.mrf.mxu0
      %v2316 = vadd.f32 %v2217, %v2315
      %v2317 = vpop.f32.mrf.mxu0
      %v2318 = vpop.f32.mrf.mxu0
      %v2319 = vadd.f32 %v2222, %v2318
      %v2320 = vpop.f32.mrf.mxu0
      %2321 = vdwg.mxu0
      %v2322 = vld [vmem:[%s10] sm:$0xf]
      %v2323 = vld [vmem:[%s10 + $0x4] sm:$0xf]
      %v2324 = vld [vmem:[%s10 + $0x8] sm:$0xf]
      %v2325 = vld [vmem:[%s10 + $0xc] sm:$0xf]
      %v2326 = vld [vmem:[%s10 + $0x10] sm:$0xf]
      %v2327 = vld [vmem:[%s10 + $0x14] sm:$0xf]
      %v2328 = vld [vmem:[%s10 + $0x18] sm:$0xf]
      %v2329 = vld [vmem:[%s10 + $0x1c] sm:$0xf]
      %v2330 = vmax.f32 %v2292, 0.0
      %v2331 = vmax.f32 %v2295, 0.0
      %v2332 = vmax.f32 %v2300, 0.0
      %v2333 = vmax.f32 %v2303, 0.0
      %v2334 = vmax.f32 %v2308, 0.0
      %v2335 = vmax.f32 %v2311, 0.0
      %v2336 = vmax.f32 %v2316, 0.0
      %v2337 = vmax.f32 %v2319, 0.0
      %v2338 = vpack.c.bf16 %v2331, %v2330
      %v2339 = vpack.c.bf16 %v2333, %v2332
      %v2340 = vpack.c.bf16 %v2335, %v2334
      %v2341 = vpack.c.bf16 %v2337, %v2336
      %v2342 = vld [vmem:[%s11] sm:$0xff]
      %v2343 = vld [vmem:[%s11 + $0x8] sm:$0xff]
      %v2344 = vld [vmem:[%s11 + $0x10] sm:$0xff]
      %v2345 = vld [vmem:[%s11 + $0x18] sm:$0xff]
      %v2346 = vld [vmem:[%s11 + $0x20] sm:$0xff]
      %v2347 = vld [vmem:[%s11 + $0x28] sm:$0xff]
      %v2348 = vld [vmem:[%s11 + $0x30] sm:$0xff]
      %v2349 = vld [vmem:[%s11 + $0x38] sm:$0xff]
      %2351 = vset.pattern.permute.xlu0 0
      %2352 = vperm.xlu0 %2351, %v2342
      %v2353 = vpop.permute.xlu0 %2352
      %2356 = vset.pattern.permute.xlu0 0
      %2357 = vperm.xlu0 %2356, %v2343
      %v2358 = vpop.permute.xlu0 %2357
      %2361 = vset.pattern.permute.xlu0 0
      %2362 = vperm.xlu0 %2361, %v2344
      %v2363 = vpop.permute.xlu0 %2362
      %2366 = vset.pattern.permute.xlu0 0
      %2367 = vperm.xlu0 %2366, %v2345
      %v2368 = vpop.permute.xlu0 %2367
      %2371 = vset.pattern.permute.xlu0 0
      %2372 = vperm.xlu0 %2371, %v2346
      %v2373 = vpop.permute.xlu0 %2372
      %2376 = vset.pattern.permute.xlu0 0
      %2377 = vperm.xlu0 %2376, %v2347
      %v2378 = vpop.permute.xlu0 %2377
      %2381 = vset.pattern.permute.xlu0 0
      %2382 = vperm.xlu0 %2381, %v2348
      %v2383 = vpop.permute.xlu0 %2382
      %2386 = vset.pattern.permute.xlu0 0
      %2387 = vperm.xlu0 %2386, %v2349
      %v2388 = vpop.permute.xlu0 %2387
      %v2398 = vunpack.c.l.b16 %v2322
      %v2399 = vunpack.c.l.b16 %v2323
      %v2400 = vunpack.c.l.b16 %v2324
      %v2401 = vunpack.c.l.b16 %v2325
      %v2402 = vunpack.c.l.b16 %v2326
      %v2403 = vunpack.c.l.b16 %v2327
      %v2404 = vunpack.c.l.b16 %v2328
      %v2405 = vunpack.c.l.b16 %v2329
      %v2406 = vpack.c.b16 %v2399, %v2398
      %v2407 = vpack.c.b16 %v2401, %v2400
      %v2408 = vpack.c.b16 %v2403, %v2402
      %v2409 = vpack.c.b16 %v2405, %v2404
      %v2411 = vsel %vm2244, %v2406, 0
      %v2414 = vsel %vm2244, %v2407, 0
      %v2417 = vsel %vm2244, %v2408, 0
      %v2420 = vsel %vm2244, %v2409, 0
      %2422 = vmatprep.subr.bf16.mxu0 0
      %2423 = vmatpush1.bf16.msra.mxu0 0
      %2424 = vmatprep.subr.bf16.mxu0 0
      %2425 = vmatpush1.bf16.msra.mxu0 0
      %2426 = vmatprep.subr.bf16.mxu0 0
      %2427 = vmatpush1.bf16.msra.mxu0 0
      %2428 = vmatprep.subr.bf16.mxu0 0
      %2429 = vmatpush1.bf16.msra.mxu0 0
      %2430 = vmatprep.subr.bf16.mxu0 0
      %2431 = vmatpush1.bf16.msra.mxu0 %v2341
      %2432 = vmatprep.subr.bf16.mxu0 0
      %2433 = vmatpush1.bf16.msra.mxu0 %v2340
      %2434 = vmatprep.subr.bf16.mxu0 0
      %2435 = vmatpush1.bf16.msra.mxu0 %v2339
      %2436 = vmatprep.subr.bf16.mxu0 0
      %2437 = vmatpush1.bf16.msra.mxu0 %v2338
      %2438 = vmatprep.subr.bf16.mxu0 0
      %2439 = vmatpush2.bf16.msra.mxu0 0
      %2440 = vmatprep.subr.bf16.mxu0 0
      %2441 = vmatpush2.bf16.msra.mxu0 0
      %2442 = vmatprep.subr.bf16.mxu0 0
      %2443 = vmatpush2.bf16.msra.mxu0 0
      %2444 = vmatprep.subr.bf16.mxu0 0
      %2445 = vmatpush2.bf16.msra.mxu0 0
      %2446 = vmatprep.subr.bf16.mxu0 0
      %2447 = vmatpush2.bf16.msra.mxu0 0
      %2448 = vmatprep.subr.bf16.mxu0 0
      %2449 = vmatpush2.bf16.msra.mxu0 0
      %2450 = vmatprep.subr.bf16.mxu0 0
      %2451 = vmatpush2.bf16.msra.mxu0 0
      %2452 = vmatprep.subr.bf16.mxu0 0
      %2453 = vmatpush2.bf16.msra.mxu0 0
      %2454 = vmatprep.mubr.bf16.mxu0 0
      %2455 = vmatmul.mubr.bf16.gmra.mxu0 %v2411
      %v2456 = vpop.f32.mrf.mxu0
      %v2457 = vadd.f32 %v2353, %v2456
      %v2458 = vpop.f32.mrf.mxu0
      %v2459 = vpop.f32.mrf.mxu0
      %v2460 = vadd.f32 %v2358, %v2459
      %v2461 = vpop.f32.mrf.mxu0
      %2462 = vmatprep.mubr.bf16.mxu0 0
      %2463 = vmatmul.mubr.bf16.gmra.mxu0 %v2414
      %v2464 = vpop.f32.mrf.mxu0
      %v2465 = vadd.f32 %v2363, %v2464
      %v2466 = vpop.f32.mrf.mxu0
      %v2467 = vpop.f32.mrf.mxu0
      %v2468 = vadd.f32 %v2368, %v2467
      %v2469 = vpop.f32.mrf.mxu0
      %2470 = vmatprep.mubr.bf16.mxu0 0
      %2471 = vmatmul.mubr.bf16.gmra.mxu0 %v2417
      %v2472 = vpop.f32.mrf.mxu0
      %v2473 = vadd.f32 %v2373, %v2472
      %v2474 = vpop.f32.mrf.mxu0
      %v2475 = vpop.f32.mrf.mxu0
      %v2476 = vadd.f32 %v2378, %v2475
      %v2477 = vpop.f32.mrf.mxu0
      %2478 = vmatprep.mubr.bf16.mxu0 0
      %2479 = vmatmul.mubr.bf16.gmra.mxu0 %v2420
      %v2480 = vpop.f32.mrf.mxu0
      %v2481 = vadd.f32 %v2383, %v2480
      %v2482 = vpop.f32.mrf.mxu0
      %v2483 = vpop.f32.mrf.mxu0
      %v2484 = vadd.f32 %v2388, %v2483
      %v2485 = vpop.f32.mrf.mxu0
      %2486 = vdwg.mxu0
      %v2487 = vadd.f32 %v2148, %v2457
      %v2488 = vadd.f32 %v2149, %v2460
      %v2489 = vadd.f32 %v2150, %v2465
      %v2490 = vadd.f32 %v2151, %v2468
      %v2491 = vadd.f32 %v2152, %v2473
      %v2492 = vadd.f32 %v2153, %v2476
      %v2493 = vadd.f32 %v2154, %v2481
      %v2494 = vadd.f32 %v2155, %v2484
      %v2495 = vadd.f32 %v2487, %v1966
      %v2496 = vadd.f32 %v2488, %v1969
      %v2497 = vadd.f32 %v2489, %v1974
      %v2498 = vadd.f32 %v2490, %v1977
      %v2499 = vadd.f32 %v2491, %v1982
      %v2500 = vadd.f32 %v2492, %v1985
      %v2501 = vadd.f32 %v2493, %v1990
      %v2502 = vadd.f32 %v2494, %v1993
      %s2503 = scalar_lea.vmem %s7, 64
      %v2504 = vld [vmem:[%s2503] sm:$0xff]
      %v2505 = vld [vmem:[%s2503 + $0x8] sm:$0xff]
      %v2506 = vld [vmem:[%s2503 + $0x10] sm:$0xff]
      %v2507 = vld [vmem:[%s2503 + $0x18] sm:$0xff]
      %v2508 = vld [vmem:[%s2503 + $0x20] sm:$0xff]
      %v2509 = vld [vmem:[%s2503 + $0x28] sm:$0xff]
      %v2510 = vld [vmem:[%s2503 + $0x30] sm:$0xff]
      %v2511 = vld [vmem:[%s2503 + $0x38] sm:$0xff]
      %2513 = vset.pattern.permute.xlu0 0
      %2514 = vperm.xlu0 %2513, %v2504
      %v2515 = vpop.permute.xlu0 %2514
      %2518 = vset.pattern.permute.xlu0 0
      %2519 = vperm.xlu0 %2518, %v2505
      %v2520 = vpop.permute.xlu0 %2519
      %2523 = vset.pattern.permute.xlu0 0
      %2524 = vperm.xlu0 %2523, %v2506
      %v2525 = vpop.permute.xlu0 %2524
      %2528 = vset.pattern.permute.xlu0 0
      %2529 = vperm.xlu0 %2528, %v2507
      %v2530 = vpop.permute.xlu0 %2529
      %2533 = vset.pattern.permute.xlu0 0
      %2534 = vperm.xlu0 %2533, %v2508
      %v2535 = vpop.permute.xlu0 %2534
      %2538 = vset.pattern.permute.xlu0 0
      %2539 = vperm.xlu0 %2538, %v2509
      %v2540 = vpop.permute.xlu0 %2539
      %2543 = vset.pattern.permute.xlu0 0
      %2544 = vperm.xlu0 %2543, %v2510
      %v2545 = vpop.permute.xlu0 %2544
      %2548 = vset.pattern.permute.xlu0 0
      %2549 = vperm.xlu0 %2548, %v2511
      %v2550 = vpop.permute.xlu0 %2549
      %v2552 = vadd.f32 %v2495, %v2515
      %v2553 = vadd.f32 %v2496, %v2520
      %v2554 = vadd.f32 %v2497, %v2525
      %v2555 = vadd.f32 %v2498, %v2530
      %v2556 = vadd.f32 %v2499, %v2535
      %v2557 = vadd.f32 %v2500, %v2540
      %v2558 = vadd.f32 %v2501, %v2545
      %v2559 = vadd.f32 %v2502, %v2550
      %s2560 = scalar_lea.vmem %s8, 32
      %v2561 = vld [vmem:[%s2560] sm:$0xf]
      %v2562 = vld [vmem:[%s2560 + $0x4] sm:$0xf]
      %v2563 = vld [vmem:[%s2560 + $0x8] sm:$0xf]
      %v2564 = vld [vmem:[%s2560 + $0xc] sm:$0xf]
      %v2565 = vld [vmem:[%s2560 + $0x10] sm:$0xf]
      %v2566 = vld [vmem:[%s2560 + $0x14] sm:$0xf]
      %v2567 = vld [vmem:[%s2560 + $0x18] sm:$0xf]
      %v2568 = vld [vmem:[%s2560 + $0x1c] sm:$0xf]
      %v2569 = vmax.f32 %v2552, 0.0
      %v2570 = vmax.f32 %v2553, 0.0
      %v2571 = vmax.f32 %v2554, 0.0
      %v2572 = vmax.f32 %v2555, 0.0
      %v2573 = vmax.f32 %v2556, 0.0
      %v2574 = vmax.f32 %v2557, 0.0
      %v2575 = vmax.f32 %v2558, 0.0
      %v2576 = vmax.f32 %v2559, 0.0
      %v2577 = vpack.c.bf16 %v2570, %v2569
      %v2578 = vpack.c.bf16 %v2572, %v2571
      %v2579 = vpack.c.bf16 %v2574, %v2573
      %v2580 = vpack.c.bf16 %v2576, %v2575
      %s2581 = scalar_lea.vmem %s9, 64
      %v2582 = vld [vmem:[%s2581] sm:$0xff]
      %v2583 = vld [vmem:[%s2581 + $0x8] sm:$0xff]
      %v2584 = vld [vmem:[%s2581 + $0x10] sm:$0xff]
      %v2585 = vld [vmem:[%s2581 + $0x18] sm:$0xff]
      %v2586 = vld [vmem:[%s2581 + $0x20] sm:$0xff]
      %v2587 = vld [vmem:[%s2581 + $0x28] sm:$0xff]
      %v2588 = vld [vmem:[%s2581 + $0x30] sm:$0xff]
      %v2589 = vld [vmem:[%s2581 + $0x38] sm:$0xff]
      %2591 = vset.pattern.permute.xlu0 0
      %2592 = vperm.xlu0 %2591, %v2582
      %v2593 = vpop.permute.xlu0 %2592
      %2596 = vset.pattern.permute.xlu0 0
      %2597 = vperm.xlu0 %2596, %v2583
      %v2598 = vpop.permute.xlu0 %2597
      %2601 = vset.pattern.permute.xlu0 0
      %2602 = vperm.xlu0 %2601, %v2584
      %v2603 = vpop.permute.xlu0 %2602
      %2606 = vset.pattern.permute.xlu0 0
      %2607 = vperm.xlu0 %2606, %v2585
      %v2608 = vpop.permute.xlu0 %2607
      %2611 = vset.pattern.permute.xlu0 0
      %2612 = vperm.xlu0 %2611, %v2586
      %v2613 = vpop.permute.xlu0 %2612
      %2616 = vset.pattern.permute.xlu0 0
      %2617 = vperm.xlu0 %2616, %v2587
      %v2618 = vpop.permute.xlu0 %2617
      %2621 = vset.pattern.permute.xlu0 0
      %2622 = vperm.xlu0 %2621, %v2588
      %v2623 = vpop.permute.xlu0 %2622
      %2626 = vset.pattern.permute.xlu0 0
      %2627 = vperm.xlu0 %2626, %v2589
      %v2628 = vpop.permute.xlu0 %2627
      %v2638 = vunpack.c.l.b16 %v2561
      %v2639 = vunpack.c.l.b16 %v2562
      %v2640 = vunpack.c.l.b16 %v2563
      %v2641 = vunpack.c.l.b16 %v2564
      %v2642 = vunpack.c.l.b16 %v2565
      %v2643 = vunpack.c.l.b16 %v2566
      %v2644 = vunpack.c.l.b16 %v2567
      %v2645 = vunpack.c.l.b16 %v2568
      %v2646 = vpack.c.b16 %v2639, %v2638
      %v2647 = vpack.c.b16 %v2641, %v2640
      %v2648 = vpack.c.b16 %v2643, %v2642
      %v2649 = vpack.c.b16 %v2645, %v2644
      %v2651 = vsel %vm2244, %v2646, 0
      %v2654 = vsel %vm2244, %v2647, 0
      %v2657 = vsel %vm2244, %v2648, 0
      %v2660 = vsel %vm2244, %v2649, 0
      %2662 = vmatprep.subr.bf16.mxu0 0
      %2663 = vmatpush1.bf16.msra.mxu0 0
      %2664 = vmatprep.subr.bf16.mxu0 0
      %2665 = vmatpush1.bf16.msra.mxu0 0
      %2666 = vmatprep.subr.bf16.mxu0 0
      %2667 = vmatpush1.bf16.msra.mxu0 0
      %2668 = vmatprep.subr.bf16.mxu0 0
      %2669 = vmatpush1.bf16.msra.mxu0 0
      %2670 = vmatprep.subr.bf16.mxu0 0
      %2671 = vmatpush1.bf16.msra.mxu0 %v2580
      %2672 = vmatprep.subr.bf16.mxu0 0
      %2673 = vmatpush1.bf16.msra.mxu0 %v2579
      %2674 = vmatprep.subr.bf16.mxu0 0
      %2675 = vmatpush1.bf16.msra.mxu0 %v2578
      %2676 = vmatprep.subr.bf16.mxu0 0
      %2677 = vmatpush1.bf16.msra.mxu0 %v2577
      %2678 = vmatprep.subr.bf16.mxu0 0
      %2679 = vmatpush2.bf16.msra.mxu0 0
      %2680 = vmatprep.subr.bf16.mxu0 0
      %2681 = vmatpush2.bf16.msra.mxu0 0
      %2682 = vmatprep.subr.bf16.mxu0 0
      %2683 = vmatpush2.bf16.msra.mxu0 0
      %2684 = vmatprep.subr.bf16.mxu0 0
      %2685 = vmatpush2.bf16.msra.mxu0 0
      %2686 = vmatprep.subr.bf16.mxu0 0
      %2687 = vmatpush2.bf16.msra.mxu0 0
      %2688 = vmatprep.subr.bf16.mxu0 0
      %2689 = vmatpush2.bf16.msra.mxu0 0
      %2690 = vmatprep.subr.bf16.mxu0 0
      %2691 = vmatpush2.bf16.msra.mxu0 0
      %2692 = vmatprep.subr.bf16.mxu0 0
      %2693 = vmatpush2.bf16.msra.mxu0 0
      %2694 = vmatprep.mubr.bf16.mxu0 0
      %2695 = vmatmul.mubr.bf16.gmra.mxu0 %v2651
      %v2696 = vpop.f32.mrf.mxu0
      %v2697 = vadd.f32 %v2593, %v2696
      %v2698 = vpop.f32.mrf.mxu0
      %v2699 = vpop.f32.mrf.mxu0
      %v2700 = vadd.f32 %v2598, %v2699
      %v2701 = vpop.f32.mrf.mxu0
      %2702 = vmatprep.mubr.bf16.mxu0 0
      %2703 = vmatmul.mubr.bf16.gmra.mxu0 %v2654
      %v2704 = vpop.f32.mrf.mxu0
      %v2705 = vadd.f32 %v2603, %v2704
      %v2706 = vpop.f32.mrf.mxu0
      %v2707 = vpop.f32.mrf.mxu0
      %v2708 = vadd.f32 %v2608, %v2707
      %v2709 = vpop.f32.mrf.mxu0
      %2710 = vmatprep.mubr.bf16.mxu0 0
      %2711 = vmatmul.mubr.bf16.gmra.mxu0 %v2657
      %v2712 = vpop.f32.mrf.mxu0
      %v2713 = vadd.f32 %v2613, %v2712
      %v2714 = vpop.f32.mrf.mxu0
      %v2715 = vpop.f32.mrf.mxu0
      %v2716 = vadd.f32 %v2618, %v2715
      %v2717 = vpop.f32.mrf.mxu0
      %2718 = vmatprep.mubr.bf16.mxu0 0
      %2719 = vmatmul.mubr.bf16.gmra.mxu0 %v2660
      %v2720 = vpop.f32.mrf.mxu0
      %v2721 = vadd.f32 %v2623, %v2720
      %v2722 = vpop.f32.mrf.mxu0
      %v2723 = vpop.f32.mrf.mxu0
      %v2724 = vadd.f32 %v2628, %v2723
      %v2725 = vpop.f32.mrf.mxu0
      %2726 = vdwg.mxu0
      %s2727 = scalar_lea.vmem %s10, 32
      %v2728 = vld [vmem:[%s2727] sm:$0xf]
      %v2729 = vld [vmem:[%s2727 + $0x4] sm:$0xf]
      %v2730 = vld [vmem:[%s2727 + $0x8] sm:$0xf]
      %v2731 = vld [vmem:[%s2727 + $0xc] sm:$0xf]
      %v2732 = vld [vmem:[%s2727 + $0x10] sm:$0xf]
      %v2733 = vld [vmem:[%s2727 + $0x14] sm:$0xf]
      %v2734 = vld [vmem:[%s2727 + $0x18] sm:$0xf]
      %v2735 = vld [vmem:[%s2727 + $0x1c] sm:$0xf]
      %v2736 = vmax.f32 %v2697, 0.0
      %v2737 = vmax.f32 %v2700, 0.0
      %v2738 = vmax.f32 %v2705, 0.0
      %v2739 = vmax.f32 %v2708, 0.0
      %v2740 = vmax.f32 %v2713, 0.0
      %v2741 = vmax.f32 %v2716, 0.0
      %v2742 = vmax.f32 %v2721, 0.0
      %v2743 = vmax.f32 %v2724, 0.0
      %v2744 = vpack.c.bf16 %v2737, %v2736
      %v2745 = vpack.c.bf16 %v2739, %v2738
      %v2746 = vpack.c.bf16 %v2741, %v2740
      %v2747 = vpack.c.bf16 %v2743, %v2742
      %s2748 = scalar_lea.vmem %s11, 64
      %v2749 = vld [vmem:[%s2748] sm:$0xff]
      %v2750 = vld [vmem:[%s2748 + $0x8] sm:$0xff]
      %v2751 = vld [vmem:[%s2748 + $0x10] sm:$0xff]
      %v2752 = vld [vmem:[%s2748 + $0x18] sm:$0xff]
      %v2753 = vld [vmem:[%s2748 + $0x20] sm:$0xff]
      %v2754 = vld [vmem:[%s2748 + $0x28] sm:$0xff]
      %v2755 = vld [vmem:[%s2748 + $0x30] sm:$0xff]
      %v2756 = vld [vmem:[%s2748 + $0x38] sm:$0xff]
      %2758 = vset.pattern.permute.xlu0 0
      %2759 = vperm.xlu0 %2758, %v2749
      %v2760 = vpop.permute.xlu0 %2759
      %2763 = vset.pattern.permute.xlu0 0
      %2764 = vperm.xlu0 %2763, %v2750
      %v2765 = vpop.permute.xlu0 %2764
      %2768 = vset.pattern.permute.xlu0 0
      %2769 = vperm.xlu0 %2768, %v2751
      %v2770 = vpop.permute.xlu0 %2769
      %2773 = vset.pattern.permute.xlu0 0
      %2774 = vperm.xlu0 %2773, %v2752
      %v2775 = vpop.permute.xlu0 %2774
      %2778 = vset.pattern.permute.xlu0 0
      %2779 = vperm.xlu0 %2778, %v2753
      %v2780 = vpop.permute.xlu0 %2779
      %2783 = vset.pattern.permute.xlu0 0
      %2784 = vperm.xlu0 %2783, %v2754
      %v2785 = vpop.permute.xlu0 %2784
      %2788 = vset.pattern.permute.xlu0 0
      %2789 = vperm.xlu0 %2788, %v2755
      %v2790 = vpop.permute.xlu0 %2789
      %2793 = vset.pattern.permute.xlu0 0
      %2794 = vperm.xlu0 %2793, %v2756
      %v2795 = vpop.permute.xlu0 %2794
      %v2805 = vunpack.c.l.b16 %v2728
      %v2806 = vunpack.c.l.b16 %v2729
      %v2807 = vunpack.c.l.b16 %v2730
      %v2808 = vunpack.c.l.b16 %v2731
      %v2809 = vunpack.c.l.b16 %v2732
      %v2810 = vunpack.c.l.b16 %v2733
      %v2811 = vunpack.c.l.b16 %v2734
      %v2812 = vunpack.c.l.b16 %v2735
      %v2813 = vpack.c.b16 %v2806, %v2805
      %v2814 = vpack.c.b16 %v2808, %v2807
      %v2815 = vpack.c.b16 %v2810, %v2809
      %v2816 = vpack.c.b16 %v2812, %v2811
      %v2818 = vsel %vm2244, %v2813, 0
      %v2821 = vsel %vm2244, %v2814, 0
      %v2824 = vsel %vm2244, %v2815, 0
      %v2827 = vsel %vm2244, %v2816, 0
      %2829 = vmatprep.subr.bf16.mxu0 0
      %2830 = vmatpush1.bf16.msra.mxu0 0
      %2831 = vmatprep.subr.bf16.mxu0 0
      %2832 = vmatpush1.bf16.msra.mxu0 0
      %2833 = vmatprep.subr.bf16.mxu0 0
      %2834 = vmatpush1.bf16.msra.mxu0 0
      %2835 = vmatprep.subr.bf16.mxu0 0
      %2836 = vmatpush1.bf16.msra.mxu0 0
      %2837 = vmatprep.subr.bf16.mxu0 0
      %2838 = vmatpush1.bf16.msra.mxu0 %v2747
      %2839 = vmatprep.subr.bf16.mxu0 0
      %2840 = vmatpush1.bf16.msra.mxu0 %v2746
      %2841 = vmatprep.subr.bf16.mxu0 0
      %2842 = vmatpush1.bf16.msra.mxu0 %v2745
      %2843 = vmatprep.subr.bf16.mxu0 0
      %2844 = vmatpush1.bf16.msra.mxu0 %v2744
      %2845 = vmatprep.subr.bf16.mxu0 0
      %2846 = vmatpush2.bf16.msra.mxu0 0
      %2847 = vmatprep.subr.bf16.mxu0 0
      %2848 = vmatpush2.bf16.msra.mxu0 0
      %2849 = vmatprep.subr.bf16.mxu0 0
      %2850 = vmatpush2.bf16.msra.mxu0 0
      %2851 = vmatprep.subr.bf16.mxu0 0
      %2852 = vmatpush2.bf16.msra.mxu0 0
      %2853 = vmatprep.subr.bf16.mxu0 0
      %2854 = vmatpush2.bf16.msra.mxu0 0
      %2855 = vmatprep.subr.bf16.mxu0 0
      %2856 = vmatpush2.bf16.msra.mxu0 0
      %2857 = vmatprep.subr.bf16.mxu0 0
      %2858 = vmatpush2.bf16.msra.mxu0 0
      %2859 = vmatprep.subr.bf16.mxu0 0
      %2860 = vmatpush2.bf16.msra.mxu0 0
      %2861 = vmatprep.mubr.bf16.mxu0 0
      %2862 = vmatmul.mubr.bf16.gmra.mxu0 %v2818
      %v2863 = vpop.f32.mrf.mxu0
      %v2864 = vadd.f32 %v2760, %v2863
      %v2865 = vpop.f32.mrf.mxu0
      %v2866 = vpop.f32.mrf.mxu0
      %v2867 = vadd.f32 %v2765, %v2866
      %v2868 = vpop.f32.mrf.mxu0
      %2869 = vmatprep.mubr.bf16.mxu0 0
      %2870 = vmatmul.mubr.bf16.gmra.mxu0 %v2821
      %v2871 = vpop.f32.mrf.mxu0
      %v2872 = vadd.f32 %v2770, %v2871
      %v2873 = vpop.f32.mrf.mxu0
      %v2874 = vpop.f32.mrf.mxu0
      %v2875 = vadd.f32 %v2775, %v2874
      %v2876 = vpop.f32.mrf.mxu0
      %2877 = vmatprep.mubr.bf16.mxu0 0
      %2878 = vmatmul.mubr.bf16.gmra.mxu0 %v2824
      %v2879 = vpop.f32.mrf.mxu0
      %v2880 = vadd.f32 %v2780, %v2879
      %v2881 = vpop.f32.mrf.mxu0
      %v2882 = vpop.f32.mrf.mxu0
      %v2883 = vadd.f32 %v2785, %v2882
      %v2884 = vpop.f32.mrf.mxu0
      %2885 = vmatprep.mubr.bf16.mxu0 0
      %2886 = vmatmul.mubr.bf16.gmra.mxu0 %v2827
      %v2887 = vpop.f32.mrf.mxu0
      %v2888 = vadd.f32 %v2790, %v2887
      %v2889 = vpop.f32.mrf.mxu0
      %v2890 = vpop.f32.mrf.mxu0
      %v2891 = vadd.f32 %v2795, %v2890
      %v2892 = vpop.f32.mrf.mxu0
      %2893 = vdwg.mxu0
      %v2894 = vadd.f32 %v2552, %v2864
      %v2895 = vadd.f32 %v2553, %v2867
      %v2896 = vadd.f32 %v2554, %v2872
      %v2897 = vadd.f32 %v2555, %v2875
      %v2898 = vadd.f32 %v2556, %v2880
      %v2899 = vadd.f32 %v2557, %v2883
      %v2900 = vadd.f32 %v2558, %v2888
      %v2901 = vadd.f32 %v2559, %v2891
      %v2902 = vadd.f32 %v2894, %v1998
      %v2903 = vadd.f32 %v2895, %v2001
      %v2904 = vadd.f32 %v2896, %v2006
      %v2905 = vadd.f32 %v2897, %v2009
      %v2906 = vadd.f32 %v2898, %v2014
      %v2907 = vadd.f32 %v2899, %v2017
      %v2908 = vadd.f32 %v2900, %v2022
      %v2909 = vadd.f32 %v2901, %v2025
      %s2910 = scalar_lea.vmem %s7, 128
      %v2911 = vld [vmem:[%s2910] sm:$0xff]
      %v2912 = vld [vmem:[%s2910 + $0x8] sm:$0xff]
      %v2913 = vld [vmem:[%s2910 + $0x10] sm:$0xff]
      %v2914 = vld [vmem:[%s2910 + $0x18] sm:$0xff]
      %v2915 = vld [vmem:[%s2910 + $0x20] sm:$0xff]
      %v2916 = vld [vmem:[%s2910 + $0x28] sm:$0xff]
      %v2917 = vld [vmem:[%s2910 + $0x30] sm:$0xff]
      %v2918 = vld [vmem:[%s2910 + $0x38] sm:$0xff]
      %2920 = vset.pattern.permute.xlu0 0
      %2921 = vperm.xlu0 %2920, %v2911
      %v2922 = vpop.permute.xlu0 %2921
      %2925 = vset.pattern.permute.xlu0 0
      %2926 = vperm.xlu0 %2925, %v2912
      %v2927 = vpop.permute.xlu0 %2926
      %2930 = vset.pattern.permute.xlu0 0
      %2931 = vperm.xlu0 %2930, %v2913
      %v2932 = vpop.permute.xlu0 %2931
      %2935 = vset.pattern.permute.xlu0 0
      %2936 = vperm.xlu0 %2935, %v2914
      %v2937 = vpop.permute.xlu0 %2936
      %2940 = vset.pattern.permute.xlu0 0
      %2941 = vperm.xlu0 %2940, %v2915
      %v2942 = vpop.permute.xlu0 %2941
      %2945 = vset.pattern.permute.xlu0 0
      %2946 = vperm.xlu0 %2945, %v2916
      %v2947 = vpop.permute.xlu0 %2946
      %2950 = vset.pattern.permute.xlu0 0
      %2951 = vperm.xlu0 %2950, %v2917
      %v2952 = vpop.permute.xlu0 %2951
      %2955 = vset.pattern.permute.xlu0 0
      %2956 = vperm.xlu0 %2955, %v2918
      %v2957 = vpop.permute.xlu0 %2956
      %v2959 = vadd.f32 %v2902, %v2922
      %v2960 = vadd.f32 %v2903, %v2927
      %v2961 = vadd.f32 %v2904, %v2932
      %v2962 = vadd.f32 %v2905, %v2937
      %v2963 = vadd.f32 %v2906, %v2942
      %v2964 = vadd.f32 %v2907, %v2947
      %v2965 = vadd.f32 %v2908, %v2952
      %v2966 = vadd.f32 %v2909, %v2957
      %s2967 = scalar_lea.vmem %s8, 64
      %v2968 = vld [vmem:[%s2967] sm:$0xf]
      %v2969 = vld [vmem:[%s2967 + $0x4] sm:$0xf]
      %v2970 = vld [vmem:[%s2967 + $0x8] sm:$0xf]
      %v2971 = vld [vmem:[%s2967 + $0xc] sm:$0xf]
      %v2972 = vld [vmem:[%s2967 + $0x10] sm:$0xf]
      %v2973 = vld [vmem:[%s2967 + $0x14] sm:$0xf]
      %v2974 = vld [vmem:[%s2967 + $0x18] sm:$0xf]
      %v2975 = vld [vmem:[%s2967 + $0x1c] sm:$0xf]
      %v2976 = vmax.f32 %v2959, 0.0
      %v2977 = vmax.f32 %v2960, 0.0
      %v2978 = vmax.f32 %v2961, 0.0
      %v2979 = vmax.f32 %v2962, 0.0
      %v2980 = vmax.f32 %v2963, 0.0
      %v2981 = vmax.f32 %v2964, 0.0
      %v2982 = vmax.f32 %v2965, 0.0
      %v2983 = vmax.f32 %v2966, 0.0
      %v2984 = vpack.c.bf16 %v2977, %v2976
      %v2985 = vpack.c.bf16 %v2979, %v2978
      %v2986 = vpack.c.bf16 %v2981, %v2980
      %v2987 = vpack.c.bf16 %v2983, %v2982
      %s2988 = scalar_lea.vmem %s9, 128
      %v2989 = vld [vmem:[%s2988] sm:$0xff]
      %v2990 = vld [vmem:[%s2988 + $0x8] sm:$0xff]
      %v2991 = vld [vmem:[%s2988 + $0x10] sm:$0xff]
      %v2992 = vld [vmem:[%s2988 + $0x18] sm:$0xff]
      %v2993 = vld [vmem:[%s2988 + $0x20] sm:$0xff]
      %v2994 = vld [vmem:[%s2988 + $0x28] sm:$0xff]
      %v2995 = vld [vmem:[%s2988 + $0x30] sm:$0xff]
      %v2996 = vld [vmem:[%s2988 + $0x38] sm:$0xff]
      %2998 = vset.pattern.permute.xlu0 0
      %2999 = vperm.xlu0 %2998, %v2989
      %v3000 = vpop.permute.xlu0 %2999
      %3003 = vset.pattern.permute.xlu0 0
      %3004 = vperm.xlu0 %3003, %v2990
      %v3005 = vpop.permute.xlu0 %3004
      %3008 = vset.pattern.permute.xlu0 0
      %3009 = vperm.xlu0 %3008, %v2991
      %v3010 = vpop.permute.xlu0 %3009
      %3013 = vset.pattern.permute.xlu0 0
      %3014 = vperm.xlu0 %3013, %v2992
      %v3015 = vpop.permute.xlu0 %3014
      %3018 = vset.pattern.permute.xlu0 0
      %3019 = vperm.xlu0 %3018, %v2993
      %v3020 = vpop.permute.xlu0 %3019
      %3023 = vset.pattern.permute.xlu0 0
      %3024 = vperm.xlu0 %3023, %v2994
      %v3025 = vpop.permute.xlu0 %3024
      %3028 = vset.pattern.permute.xlu0 0
      %3029 = vperm.xlu0 %3028, %v2995
      %v3030 = vpop.permute.xlu0 %3029
      %3033 = vset.pattern.permute.xlu0 0
      %3034 = vperm.xlu0 %3033, %v2996
      %v3035 = vpop.permute.xlu0 %3034
      %v3045 = vunpack.c.l.b16 %v2968
      %v3046 = vunpack.c.l.b16 %v2969
      %v3047 = vunpack.c.l.b16 %v2970
      %v3048 = vunpack.c.l.b16 %v2971
      %v3049 = vunpack.c.l.b16 %v2972
      %v3050 = vunpack.c.l.b16 %v2973
      %v3051 = vunpack.c.l.b16 %v2974
      %v3052 = vunpack.c.l.b16 %v2975
      %v3053 = vpack.c.b16 %v3046, %v3045
      %v3054 = vpack.c.b16 %v3048, %v3047
      %v3055 = vpack.c.b16 %v3050, %v3049
      %v3056 = vpack.c.b16 %v3052, %v3051
      %v3058 = vsel %vm2244, %v3053, 0
      %v3061 = vsel %vm2244, %v3054, 0
      %v3064 = vsel %vm2244, %v3055, 0
      %v3067 = vsel %vm2244, %v3056, 0
      %3069 = vmatprep.subr.bf16.mxu0 0
      %3070 = vmatpush1.bf16.msra.mxu0 0
      %3071 = vmatprep.subr.bf16.mxu0 0
      %3072 = vmatpush1.bf16.msra.mxu0 0
      %3073 = vmatprep.subr.bf16.mxu0 0
      %3074 = vmatpush1.bf16.msra.mxu0 0
      %3075 = vmatprep.subr.bf16.mxu0 0
      %3076 = vmatpush1.bf16.msra.mxu0 0
      %3077 = vmatprep.subr.bf16.mxu0 0
      %3078 = vmatpush1.bf16.msra.mxu0 %v2987
      %3079 = vmatprep.subr.bf16.mxu0 0
      %3080 = vmatpush1.bf16.msra.mxu0 %v2986
      %3081 = vmatprep.subr.bf16.mxu0 0
      %3082 = vmatpush1.bf16.msra.mxu0 %v2985
      %3083 = vmatprep.subr.bf16.mxu0 0
      %3084 = vmatpush1.bf16.msra.mxu0 %v2984
      %3085 = vmatprep.subr.bf16.mxu0 0
      %3086 = vmatpush2.bf16.msra.mxu0 0
      %3087 = vmatprep.subr.bf16.mxu0 0
      %3088 = vmatpush2.bf16.msra.mxu0 0
      %3089 = vmatprep.subr.bf16.mxu0 0
      %3090 = vmatpush2.bf16.msra.mxu0 0
      %3091 = vmatprep.subr.bf16.mxu0 0
      %3092 = vmatpush2.bf16.msra.mxu0 0
      %3093 = vmatprep.subr.bf16.mxu0 0
      %3094 = vmatpush2.bf16.msra.mxu0 0
      %3095 = vmatprep.subr.bf16.mxu0 0
      %3096 = vmatpush2.bf16.msra.mxu0 0
      %3097 = vmatprep.subr.bf16.mxu0 0
      %3098 = vmatpush2.bf16.msra.mxu0 0
      %3099 = vmatprep.subr.bf16.mxu0 0
      %3100 = vmatpush2.bf16.msra.mxu0 0
      %3101 = vmatprep.mubr.bf16.mxu0 0
      %3102 = vmatmul.mubr.bf16.gmra.mxu0 %v3058
      %v3103 = vpop.f32.mrf.mxu0
      %v3104 = vadd.f32 %v3000, %v3103
      %v3105 = vpop.f32.mrf.mxu0
      %v3106 = vpop.f32.mrf.mxu0
      %v3107 = vadd.f32 %v3005, %v3106
      %v3108 = vpop.f32.mrf.mxu0
      %3109 = vmatprep.mubr.bf16.mxu0 0
      %3110 = vmatmul.mubr.bf16.gmra.mxu0 %v3061
      %v3111 = vpop.f32.mrf.mxu0
      %v3112 = vadd.f32 %v3010, %v3111
      %v3113 = vpop.f32.mrf.mxu0
      %v3114 = vpop.f32.mrf.mxu0
      %v3115 = vadd.f32 %v3015, %v3114
      %v3116 = vpop.f32.mrf.mxu0
      %3117 = vmatprep.mubr.bf16.mxu0 0
      %3118 = vmatmul.mubr.bf16.gmra.mxu0 %v3064
      %v3119 = vpop.f32.mrf.mxu0
      %v3120 = vadd.f32 %v3020, %v3119
      %v3121 = vpop.f32.mrf.mxu0
      %v3122 = vpop.f32.mrf.mxu0
      %v3123 = vadd.f32 %v3025, %v3122
      %v3124 = vpop.f32.mrf.mxu0
      %3125 = vmatprep.mubr.bf16.mxu0 0
      %3126 = vmatmul.mubr.bf16.gmra.mxu0 %v3067
      %v3127 = vpop.f32.mrf.mxu0
      %v3128 = vadd.f32 %v3030, %v3127
      %v3129 = vpop.f32.mrf.mxu0
      %v3130 = vpop.f32.mrf.mxu0
      %v3131 = vadd.f32 %v3035, %v3130
      %v3132 = vpop.f32.mrf.mxu0
      %3133 = vdwg.mxu0
      %s3134 = scalar_lea.vmem %s10, 64
      %v3135 = vld [vmem:[%s3134] sm:$0xf]
      %v3136 = vld [vmem:[%s3134 + $0x4] sm:$0xf]
      %v3137 = vld [vmem:[%s3134 + $0x8] sm:$0xf]
      %v3138 = vld [vmem:[%s3134 + $0xc] sm:$0xf]
      %v3139 = vld [vmem:[%s3134 + $0x10] sm:$0xf]
      %v3140 = vld [vmem:[%s3134 + $0x14] sm:$0xf]
      %v3141 = vld [vmem:[%s3134 + $0x18] sm:$0xf]
      %v3142 = vld [vmem:[%s3134 + $0x1c] sm:$0xf]
      %v3143 = vmax.f32 %v3104, 0.0
      %v3144 = vmax.f32 %v3107, 0.0
      %v3145 = vmax.f32 %v3112, 0.0
      %v3146 = vmax.f32 %v3115, 0.0
      %v3147 = vmax.f32 %v3120, 0.0
      %v3148 = vmax.f32 %v3123, 0.0
      %v3149 = vmax.f32 %v3128, 0.0
      %v3150 = vmax.f32 %v3131, 0.0
      %v3151 = vpack.c.bf16 %v3144, %v3143
      %v3152 = vpack.c.bf16 %v3146, %v3145
      %v3153 = vpack.c.bf16 %v3148, %v3147
      %v3154 = vpack.c.bf16 %v3150, %v3149
      %s3155 = scalar_lea.vmem %s11, 128
      %v3156 = vld [vmem:[%s3155] sm:$0xff]
      %v3157 = vld [vmem:[%s3155 + $0x8] sm:$0xff]
      %v3158 = vld [vmem:[%s3155 + $0x10] sm:$0xff]
      %v3159 = vld [vmem:[%s3155 + $0x18] sm:$0xff]
      %v3160 = vld [vmem:[%s3155 + $0x20] sm:$0xff]
      %v3161 = vld [vmem:[%s3155 + $0x28] sm:$0xff]
      %v3162 = vld [vmem:[%s3155 + $0x30] sm:$0xff]
      %v3163 = vld [vmem:[%s3155 + $0x38] sm:$0xff]
      %3165 = vset.pattern.permute.xlu0 0
      %3166 = vperm.xlu0 %3165, %v3156
      %v3167 = vpop.permute.xlu0 %3166
      %3170 = vset.pattern.permute.xlu0 0
      %3171 = vperm.xlu0 %3170, %v3157
      %v3172 = vpop.permute.xlu0 %3171
      %3175 = vset.pattern.permute.xlu0 0
      %3176 = vperm.xlu0 %3175, %v3158
      %v3177 = vpop.permute.xlu0 %3176
      %3180 = vset.pattern.permute.xlu0 0
      %3181 = vperm.xlu0 %3180, %v3159
      %v3182 = vpop.permute.xlu0 %3181
      %3185 = vset.pattern.permute.xlu0 0
      %3186 = vperm.xlu0 %3185, %v3160
      %v3187 = vpop.permute.xlu0 %3186
      %3190 = vset.pattern.permute.xlu0 0
      %3191 = vperm.xlu0 %3190, %v3161
      %v3192 = vpop.permute.xlu0 %3191
      %3195 = vset.pattern.permute.xlu0 0
      %3196 = vperm.xlu0 %3195, %v3162
      %v3197 = vpop.permute.xlu0 %3196
      %3200 = vset.pattern.permute.xlu0 0
      %3201 = vperm.xlu0 %3200, %v3163
      %v3202 = vpop.permute.xlu0 %3201
      %v3212 = vunpack.c.l.b16 %v3135
      %v3213 = vunpack.c.l.b16 %v3136
      %v3214 = vunpack.c.l.b16 %v3137
      %v3215 = vunpack.c.l.b16 %v3138
      %v3216 = vunpack.c.l.b16 %v3139
      %v3217 = vunpack.c.l.b16 %v3140
      %v3218 = vunpack.c.l.b16 %v3141
      %v3219 = vunpack.c.l.b16 %v3142
      %v3220 = vpack.c.b16 %v3213, %v3212
      %v3221 = vpack.c.b16 %v3215, %v3214
      %v3222 = vpack.c.b16 %v3217, %v3216
      %v3223 = vpack.c.b16 %v3219, %v3218
      %v3225 = vsel %vm2244, %v3220, 0
      %v3228 = vsel %vm2244, %v3221, 0
      %v3231 = vsel %vm2244, %v3222, 0
      %v3234 = vsel %vm2244, %v3223, 0
      %3236 = vmatprep.subr.bf16.mxu0 0
      %3237 = vmatpush1.bf16.msra.mxu0 0
      %3238 = vmatprep.subr.bf16.mxu0 0
      %3239 = vmatpush1.bf16.msra.mxu0 0
      %3240 = vmatprep.subr.bf16.mxu0 0
      %3241 = vmatpush1.bf16.msra.mxu0 0
      %3242 = vmatprep.subr.bf16.mxu0 0
      %3243 = vmatpush1.bf16.msra.mxu0 0
      %3244 = vmatprep.subr.bf16.mxu0 0
      %3245 = vmatpush1.bf16.msra.mxu0 %v3154
      %3246 = vmatprep.subr.bf16.mxu0 0
      %3247 = vmatpush1.bf16.msra.mxu0 %v3153
      %3248 = vmatprep.subr.bf16.mxu0 0
      %3249 = vmatpush1.bf16.msra.mxu0 %v3152
      %3250 = vmatprep.subr.bf16.mxu0 0
      %3251 = vmatpush1.bf16.msra.mxu0 %v3151
      %3252 = vmatprep.subr.bf16.mxu0 0
      %3253 = vmatpush2.bf16.msra.mxu0 0
      %3254 = vmatprep.subr.bf16.mxu0 0
      %3255 = vmatpush2.bf16.msra.mxu0 0
      %3256 = vmatprep.subr.bf16.mxu0 0
      %3257 = vmatpush2.bf16.msra.mxu0 0
      %3258 = vmatprep.subr.bf16.mxu0 0
      %3259 = vmatpush2.bf16.msra.mxu0 0
      %3260 = vmatprep.subr.bf16.mxu0 0
      %3261 = vmatpush2.bf16.msra.mxu0 0
      %3262 = vmatprep.subr.bf16.mxu0 0
      %3263 = vmatpush2.bf16.msra.mxu0 0
      %3264 = vmatprep.subr.bf16.mxu0 0
      %3265 = vmatpush2.bf16.msra.mxu0 0
      %3266 = vmatprep.subr.bf16.mxu0 0
      %3267 = vmatpush2.bf16.msra.mxu0 0
      %3268 = vmatprep.mubr.bf16.mxu0 0
      %3269 = vmatmul.mubr.bf16.gmra.mxu0 %v3225
      %v3270 = vpop.f32.mrf.mxu0
      %v3271 = vadd.f32 %v3167, %v3270
      %v3272 = vpop.f32.mrf.mxu0
      %v3273 = vpop.f32.mrf.mxu0
      %v3274 = vadd.f32 %v3172, %v3273
      %v3275 = vpop.f32.mrf.mxu0
      %3276 = vmatprep.mubr.bf16.mxu0 0
      %3277 = vmatmul.mubr.bf16.gmra.mxu0 %v3228
      %v3278 = vpop.f32.mrf.mxu0
      %v3279 = vadd.f32 %v3177, %v3278
      %v3280 = vpop.f32.mrf.mxu0
      %v3281 = vpop.f32.mrf.mxu0
      %v3282 = vadd.f32 %v3182, %v3281
      %v3283 = vpop.f32.mrf.mxu0
      %3284 = vmatprep.mubr.bf16.mxu0 0
      %3285 = vmatmul.mubr.bf16.gmra.mxu0 %v3231
      %v3286 = vpop.f32.mrf.mxu0
      %v3287 = vadd.f32 %v3187, %v3286
      %v3288 = vpop.f32.mrf.mxu0
      %v3289 = vpop.f32.mrf.mxu0
      %v3290 = vadd.f32 %v3192, %v3289
      %v3291 = vpop.f32.mrf.mxu0
      %3292 = vmatprep.mubr.bf16.mxu0 0
      %3293 = vmatmul.mubr.bf16.gmra.mxu0 %v3234
      %v3294 = vpop.f32.mrf.mxu0
      %v3295 = vadd.f32 %v3197, %v3294
      %v3296 = vpop.f32.mrf.mxu0
      %v3297 = vpop.f32.mrf.mxu0
      %v3298 = vadd.f32 %v3202, %v3297
      %v3299 = vpop.f32.mrf.mxu0
      %3300 = vdwg.mxu0
      %v3301 = vadd.f32 %v2959, %v3271
      %v3302 = vadd.f32 %v2960, %v3274
      %v3303 = vadd.f32 %v2961, %v3279
      %v3304 = vadd.f32 %v2962, %v3282
      %v3305 = vadd.f32 %v2963, %v3287
      %v3306 = vadd.f32 %v2964, %v3290
      %v3307 = vadd.f32 %v2965, %v3295
      %v3308 = vadd.f32 %v2966, %v3298
      %v3309 = vadd.f32 %v3301, %v2030
      %v3310 = vadd.f32 %v3302, %v2033
      %v3311 = vadd.f32 %v3303, %v2038
      %v3312 = vadd.f32 %v3304, %v2041
      %v3313 = vadd.f32 %v3305, %v2046
      %v3314 = vadd.f32 %v3306, %v2049
      %v3315 = vadd.f32 %v3307, %v2054
      %v3316 = vadd.f32 %v3308, %v2057
      %s3317 = scalar_lea.vmem %s7, 192
      %v3318 = vld [vmem:[%s3317] sm:$0xff]
      %v3319 = vld [vmem:[%s3317 + $0x8] sm:$0xff]
      %v3320 = vld [vmem:[%s3317 + $0x10] sm:$0xff]
      %v3321 = vld [vmem:[%s3317 + $0x18] sm:$0xff]
      %v3322 = vld [vmem:[%s3317 + $0x20] sm:$0xff]
      %v3323 = vld [vmem:[%s3317 + $0x28] sm:$0xff]
      %v3324 = vld [vmem:[%s3317 + $0x30] sm:$0xff]
      %v3325 = vld [vmem:[%s3317 + $0x38] sm:$0xff]
      %3327 = vset.pattern.permute.xlu0 0
      %3328 = vperm.xlu0 %3327, %v3318
      %v3329 = vpop.permute.xlu0 %3328
      %3332 = vset.pattern.permute.xlu0 0
      %3333 = vperm.xlu0 %3332, %v3319
      %v3334 = vpop.permute.xlu0 %3333
      %3337 = vset.pattern.permute.xlu0 0
      %3338 = vperm.xlu0 %3337, %v3320
      %v3339 = vpop.permute.xlu0 %3338
      %3342 = vset.pattern.permute.xlu0 0
      %3343 = vperm.xlu0 %3342, %v3321
      %v3344 = vpop.permute.xlu0 %3343
      %3347 = vset.pattern.permute.xlu0 0
      %3348 = vperm.xlu0 %3347, %v3322
      %v3349 = vpop.permute.xlu0 %3348
      %3352 = vset.pattern.permute.xlu0 0
      %3353 = vperm.xlu0 %3352, %v3323
      %v3354 = vpop.permute.xlu0 %3353
      %3357 = vset.pattern.permute.xlu0 0
      %3358 = vperm.xlu0 %3357, %v3324
      %v3359 = vpop.permute.xlu0 %3358
      %3362 = vset.pattern.permute.xlu0 0
      %3363 = vperm.xlu0 %3362, %v3325
      %v3364 = vpop.permute.xlu0 %3363
      %v3366 = vadd.f32 %v3309, %v3329
      %v3367 = vadd.f32 %v3310, %v3334
      %v3368 = vadd.f32 %v3311, %v3339
      %v3369 = vadd.f32 %v3312, %v3344
      %v3370 = vadd.f32 %v3313, %v3349
      %v3371 = vadd.f32 %v3314, %v3354
      %v3372 = vadd.f32 %v3315, %v3359
      %v3373 = vadd.f32 %v3316, %v3364
      %s3374 = scalar_lea.vmem %s8, 96
      %v3375 = vld [vmem:[%s3374] sm:$0xf]
      %v3376 = vld [vmem:[%s3374 + $0x4] sm:$0xf]
      %v3377 = vld [vmem:[%s3374 + $0x8] sm:$0xf]
      %v3378 = vld [vmem:[%s3374 + $0xc] sm:$0xf]
      %v3379 = vld [vmem:[%s3374 + $0x10] sm:$0xf]
      %v3380 = vld [vmem:[%s3374 + $0x14] sm:$0xf]
      %v3381 = vld [vmem:[%s3374 + $0x18] sm:$0xf]
      %v3382 = vld [vmem:[%s3374 + $0x1c] sm:$0xf]
      %v3383 = vmax.f32 %v3366, 0.0
      %v3384 = vmax.f32 %v3367, 0.0
      %v3385 = vmax.f32 %v3368, 0.0
      %v3386 = vmax.f32 %v3369, 0.0
      %v3387 = vmax.f32 %v3370, 0.0
      %v3388 = vmax.f32 %v3371, 0.0
      %v3389 = vmax.f32 %v3372, 0.0
      %v3390 = vmax.f32 %v3373, 0.0
      %v3391 = vpack.c.bf16 %v3384, %v3383
      %v3392 = vpack.c.bf16 %v3386, %v3385
      %v3393 = vpack.c.bf16 %v3388, %v3387
      %v3394 = vpack.c.bf16 %v3390, %v3389
      %s3395 = scalar_lea.vmem %s9, 192
      %v3396 = vld [vmem:[%s3395] sm:$0xff]
      %v3397 = vld [vmem:[%s3395 + $0x8] sm:$0xff]
      %v3398 = vld [vmem:[%s3395 + $0x10] sm:$0xff]
      %v3399 = vld [vmem:[%s3395 + $0x18] sm:$0xff]
      %v3400 = vld [vmem:[%s3395 + $0x20] sm:$0xff]
      %v3401 = vld [vmem:[%s3395 + $0x28] sm:$0xff]
      %v3402 = vld [vmem:[%s3395 + $0x30] sm:$0xff]
      %v3403 = vld [vmem:[%s3395 + $0x38] sm:$0xff]
      %3405 = vset.pattern.permute.xlu0 0
      %3406 = vperm.xlu0 %3405, %v3396
      %v3407 = vpop.permute.xlu0 %3406
      %3410 = vset.pattern.permute.xlu0 0
      %3411 = vperm.xlu0 %3410, %v3397
      %v3412 = vpop.permute.xlu0 %3411
      %3415 = vset.pattern.permute.xlu0 0
      %3416 = vperm.xlu0 %3415, %v3398
      %v3417 = vpop.permute.xlu0 %3416
      %3420 = vset.pattern.permute.xlu0 0
      %3421 = vperm.xlu0 %3420, %v3399
      %v3422 = vpop.permute.xlu0 %3421
      %3425 = vset.pattern.permute.xlu0 0
      %3426 = vperm.xlu0 %3425, %v3400
      %v3427 = vpop.permute.xlu0 %3426
      %3430 = vset.pattern.permute.xlu0 0
      %3431 = vperm.xlu0 %3430, %v3401
      %v3432 = vpop.permute.xlu0 %3431
      %3435 = vset.pattern.permute.xlu0 0
      %3436 = vperm.xlu0 %3435, %v3402
      %v3437 = vpop.permute.xlu0 %3436
      %3440 = vset.pattern.permute.xlu0 0
      %3441 = vperm.xlu0 %3440, %v3403
      %v3442 = vpop.permute.xlu0 %3441
      %v3452 = vunpack.c.l.b16 %v3375
      %v3453 = vunpack.c.l.b16 %v3376
      %v3454 = vunpack.c.l.b16 %v3377
      %v3455 = vunpack.c.l.b16 %v3378
      %v3456 = vunpack.c.l.b16 %v3379
      %v3457 = vunpack.c.l.b16 %v3380
      %v3458 = vunpack.c.l.b16 %v3381
      %v3459 = vunpack.c.l.b16 %v3382
      %v3460 = vpack.c.b16 %v3453, %v3452
      %v3461 = vpack.c.b16 %v3455, %v3454
      %v3462 = vpack.c.b16 %v3457, %v3456
      %v3463 = vpack.c.b16 %v3459, %v3458
      %v3465 = vsel %vm2244, %v3460, 0
      %v3468 = vsel %vm2244, %v3461, 0
      %v3471 = vsel %vm2244, %v3462, 0
      %v3474 = vsel %vm2244, %v3463, 0
      %3476 = vmatprep.subr.bf16.mxu0 0
      %3477 = vmatpush1.bf16.msra.mxu0 0
      %3478 = vmatprep.subr.bf16.mxu0 0
      %3479 = vmatpush1.bf16.msra.mxu0 0
      %3480 = vmatprep.subr.bf16.mxu0 0
      %3481 = vmatpush1.bf16.msra.mxu0 0
      %3482 = vmatprep.subr.bf16.mxu0 0
      %3483 = vmatpush1.bf16.msra.mxu0 0
      %3484 = vmatprep.subr.bf16.mxu0 0
      %3485 = vmatpush1.bf16.msra.mxu0 %v3394
      %3486 = vmatprep.subr.bf16.mxu0 0
      %3487 = vmatpush1.bf16.msra.mxu0 %v3393
      %3488 = vmatprep.subr.bf16.mxu0 0
      %3489 = vmatpush1.bf16.msra.mxu0 %v3392
      %3490 = vmatprep.subr.bf16.mxu0 0
      %3491 = vmatpush1.bf16.msra.mxu0 %v3391
      %3492 = vmatprep.subr.bf16.mxu0 0
      %3493 = vmatpush2.bf16.msra.mxu0 0
      %3494 = vmatprep.subr.bf16.mxu0 0
      %3495 = vmatpush2.bf16.msra.mxu0 0
      %3496 = vmatprep.subr.bf16.mxu0 0
      %3497 = vmatpush2.bf16.msra.mxu0 0
      %3498 = vmatprep.subr.bf16.mxu0 0
      %3499 = vmatpush2.bf16.msra.mxu0 0
      %3500 = vmatprep.subr.bf16.mxu0 0
      %3501 = vmatpush2.bf16.msra.mxu0 0
      %3502 = vmatprep.subr.bf16.mxu0 0
      %3503 = vmatpush2.bf16.msra.mxu0 0
      %3504 = vmatprep.subr.bf16.mxu0 0
      %3505 = vmatpush2.bf16.msra.mxu0 0
      %3506 = vmatprep.subr.bf16.mxu0 0
      %3507 = vmatpush2.bf16.msra.mxu0 0
      %3508 = vmatprep.mubr.bf16.mxu0 0
      %3509 = vmatmul.mubr.bf16.gmra.mxu0 %v3465
      %v3510 = vpop.f32.mrf.mxu0
      %v3511 = vadd.f32 %v3407, %v3510
      %v3512 = vpop.f32.mrf.mxu0
      %v3513 = vpop.f32.mrf.mxu0
      %v3514 = vadd.f32 %v3412, %v3513
      %v3515 = vpop.f32.mrf.mxu0
      %3516 = vmatprep.mubr.bf16.mxu0 0
      %3517 = vmatmul.mubr.bf16.gmra.mxu0 %v3468
      %v3518 = vpop.f32.mrf.mxu0
      %v3519 = vadd.f32 %v3417, %v3518
      %v3520 = vpop.f32.mrf.mxu0
      %v3521 = vpop.f32.mrf.mxu0
      %v3522 = vadd.f32 %v3422, %v3521
      %v3523 = vpop.f32.mrf.mxu0
      %3524 = vmatprep.mubr.bf16.mxu0 0
      %3525 = vmatmul.mubr.bf16.gmra.mxu0 %v3471
      %v3526 = vpop.f32.mrf.mxu0
      %v3527 = vadd.f32 %v3427, %v3526
      %v3528 = vpop.f32.mrf.mxu0
      %v3529 = vpop.f32.mrf.mxu0
      %v3530 = vadd.f32 %v3432, %v3529
      %v3531 = vpop.f32.mrf.mxu0
      %3532 = vmatprep.mubr.bf16.mxu0 0
      %3533 = vmatmul.mubr.bf16.gmra.mxu0 %v3474
      %v3534 = vpop.f32.mrf.mxu0
      %v3535 = vadd.f32 %v3437, %v3534
      %v3536 = vpop.f32.mrf.mxu0
      %v3537 = vpop.f32.mrf.mxu0
      %v3538 = vadd.f32 %v3442, %v3537
      %v3539 = vpop.f32.mrf.mxu0
      %3540 = vdwg.mxu0
      %s3541 = scalar_lea.vmem %s10, 96
      %v3542 = vld [vmem:[%s3541] sm:$0xf]
      %v3543 = vld [vmem:[%s3541 + $0x4] sm:$0xf]
      %v3544 = vld [vmem:[%s3541 + $0x8] sm:$0xf]
      %v3545 = vld [vmem:[%s3541 + $0xc] sm:$0xf]
      %v3546 = vld [vmem:[%s3541 + $0x10] sm:$0xf]
      %v3547 = vld [vmem:[%s3541 + $0x14] sm:$0xf]
      %v3548 = vld [vmem:[%s3541 + $0x18] sm:$0xf]
      %v3549 = vld [vmem:[%s3541 + $0x1c] sm:$0xf]
      %v3550 = vmax.f32 %v3511, 0.0
      %v3551 = vmax.f32 %v3514, 0.0
      %v3552 = vmax.f32 %v3519, 0.0
      %v3553 = vmax.f32 %v3522, 0.0
      %v3554 = vmax.f32 %v3527, 0.0
      %v3555 = vmax.f32 %v3530, 0.0
      %v3556 = vmax.f32 %v3535, 0.0
      %v3557 = vmax.f32 %v3538, 0.0
      %v3558 = vpack.c.bf16 %v3551, %v3550
      %v3559 = vpack.c.bf16 %v3553, %v3552
      %v3560 = vpack.c.bf16 %v3555, %v3554
      %v3561 = vpack.c.bf16 %v3557, %v3556
      %s3562 = scalar_lea.vmem %s11, 192
      %v3563 = vld [vmem:[%s3562] sm:$0xff]
      %v3564 = vld [vmem:[%s3562 + $0x8] sm:$0xff]
      %v3565 = vld [vmem:[%s3562 + $0x10] sm:$0xff]
      %v3566 = vld [vmem:[%s3562 + $0x18] sm:$0xff]
      %v3567 = vld [vmem:[%s3562 + $0x20] sm:$0xff]
      %v3568 = vld [vmem:[%s3562 + $0x28] sm:$0xff]
      %v3569 = vld [vmem:[%s3562 + $0x30] sm:$0xff]
      %v3570 = vld [vmem:[%s3562 + $0x38] sm:$0xff]
      %3572 = vset.pattern.permute.xlu0 0
      %3573 = vperm.xlu0 %3572, %v3563
      %v3574 = vpop.permute.xlu0 %3573
      %3577 = vset.pattern.permute.xlu0 0
      %3578 = vperm.xlu0 %3577, %v3564
      %v3579 = vpop.permute.xlu0 %3578
      %3582 = vset.pattern.permute.xlu0 0
      %3583 = vperm.xlu0 %3582, %v3565
      %v3584 = vpop.permute.xlu0 %3583
      %3587 = vset.pattern.permute.xlu0 0
      %3588 = vperm.xlu0 %3587, %v3566
      %v3589 = vpop.permute.xlu0 %3588
      %3592 = vset.pattern.permute.xlu0 0
      %3593 = vperm.xlu0 %3592, %v3567
      %v3594 = vpop.permute.xlu0 %3593
      %3597 = vset.pattern.permute.xlu0 0
      %3598 = vperm.xlu0 %3597, %v3568
      %v3599 = vpop.permute.xlu0 %3598
      %3602 = vset.pattern.permute.xlu0 0
      %3603 = vperm.xlu0 %3602, %v3569
      %v3604 = vpop.permute.xlu0 %3603
      %3607 = vset.pattern.permute.xlu0 0
      %3608 = vperm.xlu0 %3607, %v3570
      %v3609 = vpop.permute.xlu0 %3608
      %v3619 = vunpack.c.l.b16 %v3542
      %v3620 = vunpack.c.l.b16 %v3543
      %v3621 = vunpack.c.l.b16 %v3544
      %v3622 = vunpack.c.l.b16 %v3545
      %v3623 = vunpack.c.l.b16 %v3546
      %v3624 = vunpack.c.l.b16 %v3547
      %v3625 = vunpack.c.l.b16 %v3548
      %v3626 = vunpack.c.l.b16 %v3549
      %v3627 = vpack.c.b16 %v3620, %v3619
      %v3628 = vpack.c.b16 %v3622, %v3621
      %v3629 = vpack.c.b16 %v3624, %v3623
      %v3630 = vpack.c.b16 %v3626, %v3625
      %v3632 = vsel %vm2244, %v3627, 0
      %v3635 = vsel %vm2244, %v3628, 0
      %v3638 = vsel %vm2244, %v3629, 0
      %v3641 = vsel %vm2244, %v3630, 0
      %3643 = vmatprep.subr.bf16.mxu0 0
      %3644 = vmatpush1.bf16.msra.mxu0 0
      %3645 = vmatprep.subr.bf16.mxu0 0
      %3646 = vmatpush1.bf16.msra.mxu0 0
      %3647 = vmatprep.subr.bf16.mxu0 0
      %3648 = vmatpush1.bf16.msra.mxu0 0
      %3649 = vmatprep.subr.bf16.mxu0 0
      %3650 = vmatpush1.bf16.msra.mxu0 0
      %3651 = vmatprep.subr.bf16.mxu0 0
      %3652 = vmatpush1.bf16.msra.mxu0 %v3561
      %3653 = vmatprep.subr.bf16.mxu0 0
      %3654 = vmatpush1.bf16.msra.mxu0 %v3560
      %3655 = vmatprep.subr.bf16.mxu0 0
      %3656 = vmatpush1.bf16.msra.mxu0 %v3559
      %3657 = vmatprep.subr.bf16.mxu0 0
      %3658 = vmatpush1.bf16.msra.mxu0 %v3558
      %3659 = vmatprep.subr.bf16.mxu0 0
      %3660 = vmatpush2.bf16.msra.mxu0 0
      %3661 = vmatprep.subr.bf16.mxu0 0
      %3662 = vmatpush2.bf16.msra.mxu0 0
      %3663 = vmatprep.subr.bf16.mxu0 0
      %3664 = vmatpush2.bf16.msra.mxu0 0
      %3665 = vmatprep.subr.bf16.mxu0 0
      %3666 = vmatpush2.bf16.msra.mxu0 0
      %3667 = vmatprep.subr.bf16.mxu0 0
      %3668 = vmatpush2.bf16.msra.mxu0 0
      %3669 = vmatprep.subr.bf16.mxu0 0
      %3670 = vmatpush2.bf16.msra.mxu0 0
      %3671 = vmatprep.subr.bf16.mxu0 0
      %3672 = vmatpush2.bf16.msra.mxu0 0
      %3673 = vmatprep.subr.bf16.mxu0 0
      %3674 = vmatpush2.bf16.msra.mxu0 0
      %3675 = vmatprep.mubr.bf16.mxu0 0
      %3676 = vmatmul.mubr.bf16.gmra.mxu0 %v3632
      %v3677 = vpop.f32.mrf.mxu0
      %v3678 = vadd.f32 %v3574, %v3677
      %v3679 = vpop.f32.mrf.mxu0
      %v3680 = vpop.f32.mrf.mxu0
      %v3681 = vadd.f32 %v3579, %v3680
      %v3682 = vpop.f32.mrf.mxu0
      %3683 = vmatprep.mubr.bf16.mxu0 0
      %3684 = vmatmul.mubr.bf16.gmra.mxu0 %v3635
      %v3685 = vpop.f32.mrf.mxu0
      %v3686 = vadd.f32 %v3584, %v3685
      %v3687 = vpop.f32.mrf.mxu0
      %v3688 = vpop.f32.mrf.mxu0
      %v3689 = vadd.f32 %v3589, %v3688
      %v3690 = vpop.f32.mrf.mxu0
      %3691 = vmatprep.mubr.bf16.mxu0 0
      %3692 = vmatmul.mubr.bf16.gmra.mxu0 %v3638
      %v3693 = vpop.f32.mrf.mxu0
      %v3694 = vadd.f32 %v3594, %v3693
      %v3695 = vpop.f32.mrf.mxu0
      %v3696 = vpop.f32.mrf.mxu0
      %v3697 = vadd.f32 %v3599, %v3696
      %v3698 = vpop.f32.mrf.mxu0
      %3699 = vmatprep.mubr.bf16.mxu0 0
      %3700 = vmatmul.mubr.bf16.gmra.mxu0 %v3641
      %v3701 = vpop.f32.mrf.mxu0
      %v3702 = vadd.f32 %v3604, %v3701
      %v3703 = vpop.f32.mrf.mxu0
      %v3704 = vpop.f32.mrf.mxu0
      %v3705 = vadd.f32 %v3609, %v3704
      %v3706 = vpop.f32.mrf.mxu0
      %3707 = vdwg.mxu0
      %v3708 = vadd.f32 %v3366, %v3678
      %v3709 = vadd.f32 %v3367, %v3681
      %v3710 = vadd.f32 %v3368, %v3686
      %v3711 = vadd.f32 %v3369, %v3689
      %v3712 = vadd.f32 %v3370, %v3694
      %v3713 = vadd.f32 %v3371, %v3697
      %v3714 = vadd.f32 %v3372, %v3702
      %v3715 = vadd.f32 %v3373, %v3705
      %v3716 = vadd.f32 %v3708, %v2062
      %v3717 = vadd.f32 %v3709, %v2065
      %v3718 = vadd.f32 %v3710, %v2070
      %v3719 = vadd.f32 %v3711, %v2073
      %v3720 = vadd.f32 %v3712, %v2078
      %v3721 = vadd.f32 %v3713, %v2081
      %v3722 = vadd.f32 %v3714, %v2086
      %v3723 = vadd.f32 %v3715, %v2089
      %s3724 = scalar_lea.vmem %s7, 256
      %v3725 = vld [vmem:[%s3724] sm:$0xff]
      %v3726 = vld [vmem:[%s3724 + $0x8] sm:$0xff]
      %v3727 = vld [vmem:[%s3724 + $0x10] sm:$0xff]
      %v3728 = vld [vmem:[%s3724 + $0x18] sm:$0xff]
      %v3729 = vld [vmem:[%s3724 + $0x20] sm:$0xff]
      %v3730 = vld [vmem:[%s3724 + $0x28] sm:$0xff]
      %v3731 = vld [vmem:[%s3724 + $0x30] sm:$0xff]
      %v3732 = vld [vmem:[%s3724 + $0x38] sm:$0xff]
      %3734 = vset.pattern.permute.xlu0 0
      %3735 = vperm.xlu0 %3734, %v3725
      %v3736 = vpop.permute.xlu0 %3735
      %3739 = vset.pattern.permute.xlu0 0
      %3740 = vperm.xlu0 %3739, %v3726
      %v3741 = vpop.permute.xlu0 %3740
      %3744 = vset.pattern.permute.xlu0 0
      %3745 = vperm.xlu0 %3744, %v3727
      %v3746 = vpop.permute.xlu0 %3745
      %3749 = vset.pattern.permute.xlu0 0
      %3750 = vperm.xlu0 %3749, %v3728
      %v3751 = vpop.permute.xlu0 %3750
      %3754 = vset.pattern.permute.xlu0 0
      %3755 = vperm.xlu0 %3754, %v3729
      %v3756 = vpop.permute.xlu0 %3755
      %3759 = vset.pattern.permute.xlu0 0
      %3760 = vperm.xlu0 %3759, %v3730
      %v3761 = vpop.permute.xlu0 %3760
      %3764 = vset.pattern.permute.xlu0 0
      %3765 = vperm.xlu0 %3764, %v3731
      %v3766 = vpop.permute.xlu0 %3765
      %3769 = vset.pattern.permute.xlu0 0
      %3770 = vperm.xlu0 %3769, %v3732
      %v3771 = vpop.permute.xlu0 %3770
      %v3773 = vadd.f32 %v3716, %v3736
      %v3774 = vadd.f32 %v3717, %v3741
      %v3775 = vadd.f32 %v3718, %v3746
      %v3776 = vadd.f32 %v3719, %v3751
      %v3777 = vadd.f32 %v3720, %v3756
      %v3778 = vadd.f32 %v3721, %v3761
      %v3779 = vadd.f32 %v3722, %v3766
      %v3780 = vadd.f32 %v3723, %v3771
      %s3781 = scalar_lea.vmem %s8, 128
      %v3782 = vld [vmem:[%s3781] sm:$0xf]
      %v3783 = vld [vmem:[%s3781 + $0x4] sm:$0xf]
      %v3784 = vld [vmem:[%s3781 + $0x8] sm:$0xf]
      %v3785 = vld [vmem:[%s3781 + $0xc] sm:$0xf]
      %v3786 = vld [vmem:[%s3781 + $0x10] sm:$0xf]
      %v3787 = vld [vmem:[%s3781 + $0x14] sm:$0xf]
      %v3788 = vld [vmem:[%s3781 + $0x18] sm:$0xf]
      %v3789 = vld [vmem:[%s3781 + $0x1c] sm:$0xf]
      %v3790 = vmax.f32 %v3773, 0.0
      %v3791 = vmax.f32 %v3774, 0.0
      %v3792 = vmax.f32 %v3775, 0.0
      %v3793 = vmax.f32 %v3776, 0.0
      %v3794 = vmax.f32 %v3777, 0.0
      %v3795 = vmax.f32 %v3778, 0.0
      %v3796 = vmax.f32 %v3779, 0.0
      %v3797 = vmax.f32 %v3780, 0.0
      %v3798 = vpack.c.bf16 %v3791, %v3790
      %v3799 = vpack.c.bf16 %v3793, %v3792
      %v3800 = vpack.c.bf16 %v3795, %v3794
      %v3801 = vpack.c.bf16 %v3797, %v3796
      %s3802 = scalar_lea.vmem %s9, 256
      %v3803 = vld [vmem:[%s3802] sm:$0xff]
      %v3804 = vld [vmem:[%s3802 + $0x8] sm:$0xff]
      %v3805 = vld [vmem:[%s3802 + $0x10] sm:$0xff]
      %v3806 = vld [vmem:[%s3802 + $0x18] sm:$0xff]
      %v3807 = vld [vmem:[%s3802 + $0x20] sm:$0xff]
      %v3808 = vld [vmem:[%s3802 + $0x28] sm:$0xff]
      %v3809 = vld [vmem:[%s3802 + $0x30] sm:$0xff]
      %v3810 = vld [vmem:[%s3802 + $0x38] sm:$0xff]
      %3812 = vset.pattern.permute.xlu0 0
      %3813 = vperm.xlu0 %3812, %v3803
      %v3814 = vpop.permute.xlu0 %3813
      %3817 = vset.pattern.permute.xlu0 0
      %3818 = vperm.xlu0 %3817, %v3804
      %v3819 = vpop.permute.xlu0 %3818
      %3822 = vset.pattern.permute.xlu0 0
      %3823 = vperm.xlu0 %3822, %v3805
      %v3824 = vpop.permute.xlu0 %3823
      %3827 = vset.pattern.permute.xlu0 0
      %3828 = vperm.xlu0 %3827, %v3806
      %v3829 = vpop.permute.xlu0 %3828
      %3832 = vset.pattern.permute.xlu0 0
      %3833 = vperm.xlu0 %3832, %v3807
      %v3834 = vpop.permute.xlu0 %3833
      %3837 = vset.pattern.permute.xlu0 0
      %3838 = vperm.xlu0 %3837, %v3808
      %v3839 = vpop.permute.xlu0 %3838
      %3842 = vset.pattern.permute.xlu0 0
      %3843 = vperm.xlu0 %3842, %v3809
      %v3844 = vpop.permute.xlu0 %3843
      %3847 = vset.pattern.permute.xlu0 0
      %3848 = vperm.xlu0 %3847, %v3810
      %v3849 = vpop.permute.xlu0 %3848
      %v3859 = vunpack.c.l.b16 %v3782
      %v3860 = vunpack.c.l.b16 %v3783
      %v3861 = vunpack.c.l.b16 %v3784
      %v3862 = vunpack.c.l.b16 %v3785
      %v3863 = vunpack.c.l.b16 %v3786
      %v3864 = vunpack.c.l.b16 %v3787
      %v3865 = vunpack.c.l.b16 %v3788
      %v3866 = vunpack.c.l.b16 %v3789
      %v3867 = vpack.c.b16 %v3860, %v3859
      %v3868 = vpack.c.b16 %v3862, %v3861
      %v3869 = vpack.c.b16 %v3864, %v3863
      %v3870 = vpack.c.b16 %v3866, %v3865
      %v3872 = vsel %vm2244, %v3867, 0
      %v3875 = vsel %vm2244, %v3868, 0
      %v3878 = vsel %vm2244, %v3869, 0
      %v3881 = vsel %vm2244, %v3870, 0
      %3883 = vmatprep.subr.bf16.mxu0 0
      %3884 = vmatpush1.bf16.msra.mxu0 0
      %3885 = vmatprep.subr.bf16.mxu0 0
      %3886 = vmatpush1.bf16.msra.mxu0 0
      %3887 = vmatprep.subr.bf16.mxu0 0
      %3888 = vmatpush1.bf16.msra.mxu0 0
      %3889 = vmatprep.subr.bf16.mxu0 0
      %3890 = vmatpush1.bf16.msra.mxu0 0
      %3891 = vmatprep.subr.bf16.mxu0 0
      %3892 = vmatpush1.bf16.msra.mxu0 %v3801
      %3893 = vmatprep.subr.bf16.mxu0 0
      %3894 = vmatpush1.bf16.msra.mxu0 %v3800
      %3895 = vmatprep.subr.bf16.mxu0 0
      %3896 = vmatpush1.bf16.msra.mxu0 %v3799
      %3897 = vmatprep.subr.bf16.mxu0 0
      %3898 = vmatpush1.bf16.msra.mxu0 %v3798
      %3899 = vmatprep.subr.bf16.mxu0 0
      %3900 = vmatpush2.bf16.msra.mxu0 0
      %3901 = vmatprep.subr.bf16.mxu0 0
      %3902 = vmatpush2.bf16.msra.mxu0 0
      %3903 = vmatprep.subr.bf16.mxu0 0
      %3904 = vmatpush2.bf16.msra.mxu0 0
      %3905 = vmatprep.subr.bf16.mxu0 0
      %3906 = vmatpush2.bf16.msra.mxu0 0
      %3907 = vmatprep.subr.bf16.mxu0 0
      %3908 = vmatpush2.bf16.msra.mxu0 0
      %3909 = vmatprep.subr.bf16.mxu0 0
      %3910 = vmatpush2.bf16.msra.mxu0 0
      %3911 = vmatprep.subr.bf16.mxu0 0
      %3912 = vmatpush2.bf16.msra.mxu0 0
      %3913 = vmatprep.subr.bf16.mxu0 0
      %3914 = vmatpush2.bf16.msra.mxu0 0
      %3915 = vmatprep.mubr.bf16.mxu0 0
      %3916 = vmatmul.mubr.bf16.gmra.mxu0 %v3872
      %v3917 = vpop.f32.mrf.mxu0
      %v3918 = vadd.f32 %v3814, %v3917
      %v3919 = vpop.f32.mrf.mxu0
      %v3920 = vpop.f32.mrf.mxu0
      %v3921 = vadd.f32 %v3819, %v3920
      %v3922 = vpop.f32.mrf.mxu0
      %3923 = vmatprep.mubr.bf16.mxu0 0
      %3924 = vmatmul.mubr.bf16.gmra.mxu0 %v3875
      %v3925 = vpop.f32.mrf.mxu0
      %v3926 = vadd.f32 %v3824, %v3925
      %v3927 = vpop.f32.mrf.mxu0
      %v3928 = vpop.f32.mrf.mxu0
      %v3929 = vadd.f32 %v3829, %v3928
      %v3930 = vpop.f32.mrf.mxu0
      %3931 = vmatprep.mubr.bf16.mxu0 0
      %3932 = vmatmul.mubr.bf16.gmra.mxu0 %v3878
      %v3933 = vpop.f32.mrf.mxu0
      %v3934 = vadd.f32 %v3834, %v3933
      %v3935 = vpop.f32.mrf.mxu0
      %v3936 = vpop.f32.mrf.mxu0
      %v3937 = vadd.f32 %v3839, %v3936
      %v3938 = vpop.f32.mrf.mxu0
      %3939 = vmatprep.mubr.bf16.mxu0 0
      %3940 = vmatmul.mubr.bf16.gmra.mxu0 %v3881
      %v3941 = vpop.f32.mrf.mxu0
      %v3942 = vadd.f32 %v3844, %v3941
      %v3943 = vpop.f32.mrf.mxu0
      %v3944 = vpop.f32.mrf.mxu0
      %v3945 = vadd.f32 %v3849, %v3944
      %v3946 = vpop.f32.mrf.mxu0
      %3947 = vdwg.mxu0
      %s3948 = scalar_lea.vmem %s10, 128
      %v3949 = vld [vmem:[%s3948] sm:$0xf]
      %v3950 = vld [vmem:[%s3948 + $0x4] sm:$0xf]
      %v3951 = vld [vmem:[%s3948 + $0x8] sm:$0xf]
      %v3952 = vld [vmem:[%s3948 + $0xc] sm:$0xf]
      %v3953 = vld [vmem:[%s3948 + $0x10] sm:$0xf]
      %v3954 = vld [vmem:[%s3948 + $0x14] sm:$0xf]
      %v3955 = vld [vmem:[%s3948 + $0x18] sm:$0xf]
      %v3956 = vld [vmem:[%s3948 + $0x1c] sm:$0xf]
      %v3957 = vmax.f32 %v3918, 0.0
      %v3958 = vmax.f32 %v3921, 0.0
      %v3959 = vmax.f32 %v3926, 0.0
      %v3960 = vmax.f32 %v3929, 0.0
      %v3961 = vmax.f32 %v3934, 0.0
      %v3962 = vmax.f32 %v3937, 0.0
      %v3963 = vmax.f32 %v3942, 0.0
      %v3964 = vmax.f32 %v3945, 0.0
      %v3965 = vpack.c.bf16 %v3958, %v3957
      %v3966 = vpack.c.bf16 %v3960, %v3959
      %v3967 = vpack.c.bf16 %v3962, %v3961
      %v3968 = vpack.c.bf16 %v3964, %v3963
      %s3969 = scalar_lea.vmem %s11, 256
      %v3970 = vld [vmem:[%s3969] sm:$0xff]
      %v3971 = vld [vmem:[%s3969 + $0x8] sm:$0xff]
      %v3972 = vld [vmem:[%s3969 + $0x10] sm:$0xff]
      %v3973 = vld [vmem:[%s3969 + $0x18] sm:$0xff]
      %v3974 = vld [vmem:[%s3969 + $0x20] sm:$0xff]
      %v3975 = vld [vmem:[%s3969 + $0x28] sm:$0xff]
      %v3976 = vld [vmem:[%s3969 + $0x30] sm:$0xff]
      %v3977 = vld [vmem:[%s3969 + $0x38] sm:$0xff]
      %3979 = vset.pattern.permute.xlu0 0
      %3980 = vperm.xlu0 %3979, %v3970
      %v3981 = vpop.permute.xlu0 %3980
      %3984 = vset.pattern.permute.xlu0 0
      %3985 = vperm.xlu0 %3984, %v3971
      %v3986 = vpop.permute.xlu0 %3985
      %3989 = vset.pattern.permute.xlu0 0
      %3990 = vperm.xlu0 %3989, %v3972
      %v3991 = vpop.permute.xlu0 %3990
      %3994 = vset.pattern.permute.xlu0 0
      %3995 = vperm.xlu0 %3994, %v3973
      %v3996 = vpop.permute.xlu0 %3995
      %3999 = vset.pattern.permute.xlu0 0
      %4000 = vperm.xlu0 %3999, %v3974
      %v4001 = vpop.permute.xlu0 %4000
      %4004 = vset.pattern.permute.xlu0 0
      %4005 = vperm.xlu0 %4004, %v3975
      %v4006 = vpop.permute.xlu0 %4005
      %4009 = vset.pattern.permute.xlu0 0
      %4010 = vperm.xlu0 %4009, %v3976
      %v4011 = vpop.permute.xlu0 %4010
      %4014 = vset.pattern.permute.xlu0 0
      %4015 = vperm.xlu0 %4014, %v3977
      %v4016 = vpop.permute.xlu0 %4015
      %v4026 = vunpack.c.l.b16 %v3949
      %v4027 = vunpack.c.l.b16 %v3950
      %v4028 = vunpack.c.l.b16 %v3951
      %v4029 = vunpack.c.l.b16 %v3952
      %v4030 = vunpack.c.l.b16 %v3953
      %v4031 = vunpack.c.l.b16 %v3954
      %v4032 = vunpack.c.l.b16 %v3955
      %v4033 = vunpack.c.l.b16 %v3956
      %v4034 = vpack.c.b16 %v4027, %v4026
      %v4035 = vpack.c.b16 %v4029, %v4028
      %v4036 = vpack.c.b16 %v4031, %v4030
      %v4037 = vpack.c.b16 %v4033, %v4032
      %v4039 = vsel %vm2244, %v4034, 0
      %v4042 = vsel %vm2244, %v4035, 0
      %v4045 = vsel %vm2244, %v4036, 0
      %v4048 = vsel %vm2244, %v4037, 0
      %4050 = vmatprep.subr.bf16.mxu0 0
      %4051 = vmatpush1.bf16.msra.mxu0 0
      %4052 = vmatprep.subr.bf16.mxu0 0
      %4053 = vmatpush1.bf16.msra.mxu0 0
      %4054 = vmatprep.subr.bf16.mxu0 0
      %4055 = vmatpush1.bf16.msra.mxu0 0
      %4056 = vmatprep.subr.bf16.mxu0 0
      %4057 = vmatpush1.bf16.msra.mxu0 0
      %4058 = vmatprep.subr.bf16.mxu0 0
      %4059 = vmatpush1.bf16.msra.mxu0 %v3968
      %4060 = vmatprep.subr.bf16.mxu0 0
      %4061 = vmatpush1.bf16.msra.mxu0 %v3967
      %4062 = vmatprep.subr.bf16.mxu0 0
      %4063 = vmatpush1.bf16.msra.mxu0 %v3966
      %4064 = vmatprep.subr.bf16.mxu0 0
      %4065 = vmatpush1.bf16.msra.mxu0 %v3965
      %4066 = vmatprep.subr.bf16.mxu0 0
      %4067 = vmatpush2.bf16.msra.mxu0 0
      %4068 = vmatprep.subr.bf16.mxu0 0
      %4069 = vmatpush2.bf16.msra.mxu0 0
      %4070 = vmatprep.subr.bf16.mxu0 0
      %4071 = vmatpush2.bf16.msra.mxu0 0
      %4072 = vmatprep.subr.bf16.mxu0 0
      %4073 = vmatpush2.bf16.msra.mxu0 0
      %4074 = vmatprep.subr.bf16.mxu0 0
      %4075 = vmatpush2.bf16.msra.mxu0 0
      %4076 = vmatprep.subr.bf16.mxu0 0
      %4077 = vmatpush2.bf16.msra.mxu0 0
      %4078 = vmatprep.subr.bf16.mxu0 0
      %4079 = vmatpush2.bf16.msra.mxu0 0
      %4080 = vmatprep.subr.bf16.mxu0 0
      %4081 = vmatpush2.bf16.msra.mxu0 0
      %4082 = vmatprep.mubr.bf16.mxu0 0
      %4083 = vmatmul.mubr.bf16.gmra.mxu0 %v4039
      %v4084 = vpop.f32.mrf.mxu0
      %v4085 = vadd.f32 %v3981, %v4084
      %v4086 = vpop.f32.mrf.mxu0
      %v4087 = vpop.f32.mrf.mxu0
      %v4088 = vadd.f32 %v3986, %v4087
      %v4089 = vpop.f32.mrf.mxu0
      %4090 = vmatprep.mubr.bf16.mxu0 0
      %4091 = vmatmul.mubr.bf16.gmra.mxu0 %v4042
      %v4092 = vpop.f32.mrf.mxu0
      %v4093 = vadd.f32 %v3991, %v4092
      %v4094 = vpop.f32.mrf.mxu0
      %v4095 = vpop.f32.mrf.mxu0
      %v4096 = vadd.f32 %v3996, %v4095
      %v4097 = vpop.f32.mrf.mxu0
      %4098 = vmatprep.mubr.bf16.mxu0 0
      %4099 = vmatmul.mubr.bf16.gmra.mxu0 %v4045
      %v4100 = vpop.f32.mrf.mxu0
      %v4101 = vadd.f32 %v4001, %v4100
      %v4102 = vpop.f32.mrf.mxu0
      %v4103 = vpop.f32.mrf.mxu0
      %v4104 = vadd.f32 %v4006, %v4103
      %v4105 = vpop.f32.mrf.mxu0
      %4106 = vmatprep.mubr.bf16.mxu0 0
      %4107 = vmatmul.mubr.bf16.gmra.mxu0 %v4048
      %v4108 = vpop.f32.mrf.mxu0
      %v4109 = vadd.f32 %v4011, %v4108
      %v4110 = vpop.f32.mrf.mxu0
      %v4111 = vpop.f32.mrf.mxu0
      %v4112 = vadd.f32 %v4016, %v4111
      %v4113 = vpop.f32.mrf.mxu0
      %4114 = vdwg.mxu0
      %v4115 = vadd.f32 %v3773, %v4085
      %v4116 = vadd.f32 %v3774, %v4088
      %v4117 = vadd.f32 %v3775, %v4093
      %v4118 = vadd.f32 %v3776, %v4096
      %v4119 = vadd.f32 %v3777, %v4101
      %v4120 = vadd.f32 %v3778, %v4104
      %v4121 = vadd.f32 %v3779, %v4109
      %v4122 = vadd.f32 %v3780, %v4112
      %v4123 = vmax.f32 %v4115, 0.0
      %v4124 = vmax.f32 %v4116, 0.0
      %v4125 = vmax.f32 %v4117, 0.0
      %v4126 = vmax.f32 %v4118, 0.0
      %v4127 = vmax.f32 %v4119, 0.0
      %v4128 = vmax.f32 %v4120, 0.0
      %v4129 = vmax.f32 %v4121, 0.0
      %v4130 = vmax.f32 %v4122, 0.0
      %v4131 = vld [vmem:[%s12] sm:$0xff]
      %v4132 = vld [vmem:[%s12 + $0x8] sm:$0xff]
      %v4133 = vld [vmem:[%s12 + $0x10] sm:$0xff]
      %v4134 = vld [vmem:[%s12 + $0x18] sm:$0xff]
      %v4135 = vld [vmem:[%s12 + $0x20] sm:$0xff]
      %v4136 = vld [vmem:[%s12 + $0x28] sm:$0xff]
      %v4137 = vld [vmem:[%s12 + $0x30] sm:$0xff]
      %v4138 = vld [vmem:[%s12 + $0x38] sm:$0xff]
      %4140 = vset.pattern.permute.xlu0 0
      %4141 = vperm.xlu0 %4140, %v4131
      %v4142 = vpop.permute.xlu0 %4141
      %4145 = vset.pattern.permute.xlu0 0
      %4146 = vperm.xlu0 %4145, %v4132
      %v4147 = vpop.permute.xlu0 %4146
      %4150 = vset.pattern.permute.xlu0 0
      %4151 = vperm.xlu0 %4150, %v4133
      %v4152 = vpop.permute.xlu0 %4151
      %4155 = vset.pattern.permute.xlu0 0
      %4156 = vperm.xlu0 %4155, %v4134
      %v4157 = vpop.permute.xlu0 %4156
      %4160 = vset.pattern.permute.xlu0 0
      %4161 = vperm.xlu0 %4160, %v4135
      %v4162 = vpop.permute.xlu0 %4161
      %4165 = vset.pattern.permute.xlu0 0
      %4166 = vperm.xlu0 %4165, %v4136
      %v4167 = vpop.permute.xlu0 %4166
      %4170 = vset.pattern.permute.xlu0 0
      %4171 = vperm.xlu0 %4170, %v4137
      %v4172 = vpop.permute.xlu0 %4171
      %4175 = vset.pattern.permute.xlu0 0
      %4176 = vperm.xlu0 %4175, %v4138
      %v4177 = vpop.permute.xlu0 %4176
      %v4179 = vmul.f32 %v4123, %v4142
      %v4180 = vmul.f32 %v4124, %v4147
      %v4181 = vmul.f32 %v4125, %v4152
      %v4182 = vmul.f32 %v4126, %v4157
      %v4183 = vmul.f32 %v4127, %v4162
      %v4184 = vmul.f32 %v4128, %v4167
      %v4185 = vmul.f32 %v4129, %v4172
      %v4186 = vmul.f32 %v4130, %v4177
      %v4187 = vadd.f32 %v4179, %v4180
      %v4188 = vadd.f32 %v4187, %v4181
      %v4189 = vadd.f32 %v4188, %v4182
      %v4190 = vadd.f32 %v4189, %v4183
      %v4191 = vadd.f32 %v4190, %v4184
      %v4192 = vadd.f32 %v4191, %v4185
      %v4193 = vadd.f32 %v4192, %v4186
      %v4194 = vrot.slane %v4193, 4
      %v4195 = vadd.f32 %v4193, %v4194
      %v4196 = vrot.slane %v4195, 2
      %v4197 = vadd.f32 %v4195, %v4196
      %v4198 = vrot.slane %v4197, 1
      %v4199 = vadd.f32 %v4197, %v4198
      %v4200 = vld [vmem:[#allocation3] sm:$0x1]
      %4202 = vset.pattern.permute.xlu0 0
      %4203 = vperm.xlu0 %4202, %v4200
      %v4204 = vpop.permute.xlu0 %4203
      %v4206 = vlaneseq
      %v4207 = vshrl.u32 %v4206, 7
      %v4208 = vsub.s32 0, %v4207
      %v4209 = vrot.slane %v4204, %v4208
      %v4210 = vadd.f32 %v4199, %v4209
      %4211 = vst [vmem:[%s534] sm:$0x1] %v4210
      %p4212 = scmp.lt.s32.totalorder %s27, 1
      %s4213 = scalar_select %p4212, %s27, 1
      %s4214 = scalar_lea.vmem %s14, %s4213
      // Predicated region
      $region77: #{local_point_decoder.1} parent=75 // pred_check
        %p4215 = pneg %p359
      $region78: #{local_point_decoder.1} parent=75 // pred_check_branch
        %4217 = sbr.rel (%p4215) target = $region80
      $region79: #{local_point_decoder.1} parent=75 // pred_region
        _
      $region80: #{local_point_decoder.1} parent=75 // pred_fallthru
        _
    $region76: #{local_point_decoder.1} parent=5 // pred_fallthru
      _
    %p4218 = scmp.le.s32.totalorder 2, %s22
    // Predicated region
    $region81: #{local_point_decoder.1} parent=5 // pred_check
      %p4219 = pneg %p4218
    $region82: #{local_point_decoder.1} parent=5 // pred_check_branch
      %4221 = sbr.rel (%p4219) target = $region84
    $region83: #{local_point_decoder.1} parent=5 // pred_region
      %s4222 = ssub.s32 %s22, 2
      // Predicated region
      $region85: #{local_point_decoder.1} parent=83 // pred_check
        %p4223 = pneg %p365
      $region86: #{local_point_decoder.1} parent=83 // pred_check_branch
        %4225 = sbr.rel (%p4223) target = $region88
      $region87: #{local_point_decoder.1} parent=83 // pred_region
        %p4226 = scmp.lt.s32.totalorder %s28, 1
        %s4227 = scalar_select %p4226, %s28, 1
        %s4228 = scalar_lea.vmem %s14, %s4227
      $region88: #{local_point_decoder.1} parent=83 // pred_fallthru
        _
    $region84: #{local_point_decoder.1} parent=5 // pred_fallthru
      _
  $region6: #{local_point_decoder.1} parent=0 // loop_footer
    %s26 = sadd.s32 1, %s22
  $region7: #{local_point_decoder.1} parent=0 // loop_footer_branch
    %21 = sbr.rel target = $region3
  $region8: #{local_point_decoder.1} parent=0 // loop_exit
    _

</llo_original>
